<compile_context>
chip_gen: v7x
topology: tpu7x:2x2x1
jax: 0.10.0
libtpu: 0.0.40
codegen_flags: <defaults>
</compile_context>

<pallas_src>
import jax
import jax.numpy as jnp
from jax.experimental import pallas as pl
from jax.experimental.pallas import tpu as pltpu


IN_SIZE = 768          # lin_2 hard-codes 256 = 768 // 3, so in_size must be 768
OUT_SIZE = 768
POOL_K = 3
POOLED = IN_SIZE // POOL_K   # 256


def _nr_kernel(sup_ref, stmt_ref, w_ref, re_sup_ref, re_stmt_ref, c_ref):
    # w_ref: (IN, 2*OUT) = [ W1^T | P @ W2^T ]   (avg-pool folded into lin_2)

    # Support path only needs W1^T (left, lane-aligned half of the fused weight).
    re_sup_ref[...] = jnp.dot(
        sup_ref[...], w_ref[:, :OUT_SIZE],
        preferred_element_type=jnp.float32).astype(re_sup_ref.dtype)

    # Statement path: one MXU pass against the full fused weight, split result.
    stmt_out = jnp.dot(stmt_ref[...], w_ref[...],
                       preferred_element_type=jnp.float32)      # (tm, 2*OUT)
    re_stmt_ref[...] = stmt_out[:, :OUT_SIZE].astype(re_stmt_ref.dtype)
    c_ref[...] = stmt_out[:, OUT_SIZE:].astype(c_ref.dtype)


def numerical_reason_layer(support, statement, w1, w2, *,
                           tm=512, compute_dtype=jnp.bfloat16):
    """support, statement: (B, S, 768); w1: (768, 768); w2: (768, 256)."""
    B, S, IN = support.shape
    assert IN == IN_SIZE and statement.shape == support.shape
    OUT = w1.shape[0]
    assert w1.shape == (OUT, IN) and w2.shape == (OUT, POOLED)
    assert tm % 8 == 0
    out_dtype = support.dtype
    rows = B * S

    # Fold avg_pool1d(kernel=3, stride=3) into lin_2:  c = stmt @ (P @ W2^T).
    # P[i, i//3] = 1/3 is the constant pooling matrix.
    pool_mat = ((jnp.arange(IN)[:, None] // POOL_K)
                == jnp.arange(POOLED)[None, :]).astype(jnp.float32) / POOL_K
    w2_folded = pool_mat @ w2.T.astype(jnp.float32)                  # (IN, OUT)
    w_cat = jnp.concatenate(
        [w1.T.astype(jnp.float32), w2_folded], axis=1).astype(compute_dtype)

    sup2d = support.reshape(rows, IN).astype(compute_dtype)
    stmt2d = statement.reshape(rows, IN).astype(compute_dtype)

    # Big row tile for throughput; shrink for tiny inputs, pad ragged tails.
    tm_eff = min(tm, ((rows + 7) // 8) * 8)
    rows_p = pl.cdiv(rows, tm_eff) * tm_eff
    if rows_p != rows:
        pad = ((0, rows_p - rows), (0, 0))
        sup2d = jnp.pad(sup2d, pad)
        stmt2d = jnp.pad(stmt2d, pad)

    grid = (rows_p // tm_eff,)
    out_shapes = (
        jax.ShapeDtypeStruct((rows_p, OUT), out_dtype),
        jax.ShapeDtypeStruct((rows_p, OUT), out_dtype),
        jax.ShapeDtypeStruct((rows_p, OUT), out_dtype),
    )
    re_sup, re_stmt, c = pl.pallas_call(
        _nr_kernel,
        out_shape=out_shapes,
        grid_spec=pltpu.PrefetchScalarGridSpec(
            num_scalar_prefetch=0,
            grid=grid,
            in_specs=[
                pl.BlockSpec((tm_eff, IN), lambda i: (i, 0)),      # support rows
                pl.BlockSpec((tm_eff, IN), lambda i: (i, 0)),      # statement rows
                pl.BlockSpec((IN, 2 * OUT), lambda i: (0, 0)),     # fused weight (resident)
            ],
            out_specs=[
                pl.BlockSpec((tm_eff, OUT), lambda i: (i, 0)),
                pl.BlockSpec((tm_eff, OUT), lambda i: (i, 0)),
                pl.BlockSpec((tm_eff, OUT), lambda i: (i, 0)),
            ],
        ),
        compiler_params=pltpu.CompilerParams(
            dimension_semantics=("parallel",),
            vmem_limit_bytes=48 * 1024 * 1024,
        ),
    )(sup2d, stmt2d, w_cat)

    if rows_p != rows:
        re_sup, re_stmt, c = (x[:rows] for x in (re_sup, re_stmt, c))
    return (re_sup.reshape(B, S, OUT),
            re_stmt.reshape(B, S, OUT),
            c.reshape(B, S, OUT))


if __name__ == "__main__":
    key = jax.random.PRNGKey(0)
    k_sup, k_stmt, k_w1, k_w2 = jax.random.split(key, 4)

    B, S = 2, 8
    support = jax.random.normal(k_sup, (B, S, IN_SIZE), dtype=jnp.float32)
    statement = jax.random.normal(k_stmt, (B, S, IN_SIZE), dtype=jnp.float32)

    # Deterministic parameter init (PyTorch Linear weight shape: (out, in))
    w1 = jax.random.normal(k_w1, (OUT_SIZE, IN_SIZE), jnp.float32) / jnp.sqrt(IN_SIZE)
    w2 = jax.random.normal(k_w2, (OUT_SIZE, POOLED), jnp.float32) / jnp.sqrt(POOLED)

    re_sup, re_stmt, c = numerical_reason_layer(support, statement, w1, w2)
    jax.block_until_ready((re_sup, re_stmt, c))

    # Pure-JAX f32 reference for a sanity check.
    ref_sup = support @ w1.T
    ref_stmt = statement @ w1.T
    pooled_ref = statement.reshape(B, S, POOLED, POOL_K).mean(-1)
    ref_c = pooled_ref @ w2.T

    # bf16 inputs with f32 accumulation over K=768 -> ~1e-3-level abs error.
    assert jnp.allclose(re_sup, ref_sup, rtol=2e-2, atol=2e-2)
    assert jnp.allclose(re_stmt, ref_stmt, rtol=2e-2, atol=2e-2)
    assert jnp.allclose(c, ref_c, rtol=2e-2, atol=2e-2)

    print("KERNEL_OK")
</pallas_src>

<mosaic_0001>
module attributes {stable_mosaic.version = 11 : i64} {
  func.func @_nr_kernel(%arg0: i32, %arg1: memref<16x768xbf16, #tpu.memory_space<vmem>>, %arg2: memref<16x768xbf16, #tpu.memory_space<vmem>>, %arg3: memref<768x1536xbf16, #tpu.memory_space<vmem>>, %arg4: memref<16x768xf32, #tpu.memory_space<vmem>>, %arg5: memref<16x768xf32, #tpu.memory_space<vmem>>, %arg6: memref<16x768xf32, #tpu.memory_space<vmem>>) attributes {dimension_semantics = [#tpu.dimension_semantics<parallel>], iteration_bounds = array<i64: 1>, scalar_prefetch = 0 : i64, scratch_operands = 0 : i64, tpu.core_type = #tpu.core_type<tc>, window_params = [{transform_indices = @transform_0, window_bounds = array<i64: 16, 768>}, {transform_indices = @transform_1, window_bounds = array<i64: 16, 768>}, {pipeline_mode = #tpu.pipeline_mode<synchronous>, transform_indices = @transform_2, window_bounds = array<i64: 768, 1536>}, {transform_indices = @transform_3, window_bounds = array<i64: 16, 768>}, {transform_indices = @transform_4, window_bounds = array<i64: 16, 768>}, {transform_indices = @transform_5, window_bounds = array<i64: 16, 768>}]} {
    %c0 = arith.constant 0 : index
    %c0_0 = arith.constant 0 : index
    %0 = vector.load %arg1[%c0, %c0_0] : memref<16x768xbf16, #tpu.memory_space<vmem>>, vector<16x768xbf16>
    %c0_1 = arith.constant 0 : index
    %c0_2 = arith.constant 0 : index
    %1 = vector.load %arg3[%c0_1, %c0_2] : memref<768x1536xbf16, #tpu.memory_space<vmem>>, vector<768x768xbf16>
    %cst = arith.constant dense<0.000000e+00> : vector<16x768xf32>
    %2 = tpu.matmul %0, %1, %cst {dimension_numbers = #tpu.dot_dimension_numbers<[1], [0], [0], [1], [0, 0, 1, 1], [], []>} : vector<16x768xbf16>, vector<768x768xbf16>, vector<16x768xf32> -> vector<16x768xf32>
    %c0_3 = arith.constant 0 : index
    %c0_4 = arith.constant 0 : index
    %3 = vector.load %arg4[%c0_3, %c0_4] : memref<16x768xf32, #tpu.memory_space<vmem>>, vector<16x768xf32>
    tpu.vector_store %arg4[%c0_3, %c0_4], %2 {strides = array<i32>} : memref<16x768xf32, #tpu.memory_space<vmem>>, vector<16x768xf32>,
    %c0_5 = arith.constant 0 : index
    %c0_6 = arith.constant 0 : index
    %4 = vector.load %arg2[%c0_5, %c0_6] : memref<16x768xbf16, #tpu.memory_space<vmem>>, vector<16x768xbf16>
    %c0_7 = arith.constant 0 : index
    %c0_8 = arith.constant 0 : index
    %5 = vector.load %arg3[%c0_7, %c0_8] : memref<768x1536xbf16, #tpu.memory_space<vmem>>, vector<768x1536xbf16>
    %cst_9 = arith.constant dense<0.000000e+00> : vector<16x1536xf32>
    %6 = tpu.matmul %4, %5, %cst_9 {dimension_numbers = #tpu.dot_dimension_numbers<[1], [0], [0], [1], [0, 0, 1, 1], [], []>} : vector<16x768xbf16>, vector<768x1536xbf16>, vector<16x1536xf32> -> vector<16x1536xf32>
    %7 = vector.extract_strided_slice %6 {offsets = [0, 0], sizes = [16, 768], strides = [1, 1]} : vector<16x1536xf32> to vector<16x768xf32>
    %c0_10 = arith.constant 0 : index
    %c0_11 = arith.constant 0 : index
    %8 = vector.load %arg5[%c0_10, %c0_11] : memref<16x768xf32, #tpu.memory_space<vmem>>, vector<16x768xf32>
    tpu.vector_store %arg5[%c0_10, %c0_11], %7 {strides = array<i32>} : memref<16x768xf32, #tpu.memory_space<vmem>>, vector<16x768xf32>,
    %9 = vector.extract_strided_slice %6 {offsets = [0, 768], sizes = [16, 768], strides = [1, 1]} : vector<16x1536xf32> to vector<16x768xf32>
    %c0_12 = arith.constant 0 : index
    %c0_13 = arith.constant 0 : index
    %10 = vector.load %arg6[%c0_12, %c0_13] : memref<16x768xf32, #tpu.memory_space<vmem>>, vector<16x768xf32>
    tpu.vector_store %arg6[%c0_12, %c0_13], %9 {strides = array<i32>} : memref<16x768xf32, #tpu.memory_space<vmem>>, vector<16x768xf32>,
    return
  }
  func.func @transform_0(%arg0: i32) -> (i32, i32) {
    %c0_i32 = arith.constant 0 : i32
    %c0_i32_0 = arith.constant 0 : i32
    return %arg0, %c0_i32 : i32, i32
  }
  func.func @transform_1(%arg0: i32) -> (i32, i32) {
    %c0_i32 = arith.constant 0 : i32
    %c0_i32_0 = arith.constant 0 : i32
    return %arg0, %c0_i32 : i32, i32
  }
  func.func @transform_2(%arg0: i32) -> (i32, i32) {
    %c0_i32 = arith.constant 0 : i32
    %c0_i32_0 = arith.constant 0 : i32
    %c0_i32_1 = arith.constant 0 : i32
    return %c0_i32, %c0_i32_0 : i32, i32
  }
  func.func @transform_3(%arg0: i32) -> (i32, i32) {
    %c0_i32 = arith.constant 0 : i32
    %c0_i32_0 = arith.constant 0 : i32
    return %arg0, %c0_i32 : i32, i32
  }
  func.func @transform_4(%arg0: i32) -> (i32, i32) {
    %c0_i32 = arith.constant 0 : i32
    %c0_i32_0 = arith.constant 0 : i32
    return %arg0, %c0_i32 : i32, i32
  }
  func.func @transform_5(%arg0: i32) -> (i32, i32) {
    %c0_i32 = arith.constant 0 : i32
    %c0_i32_0 = arith.constant 0 : i32
    return %arg0, %c0_i32 : i32, i32
  }
}

</mosaic_0001>

<llo_original>
// kernel: tpu_custom_call.1
$region0: #{tpu_custom_call.1}
  #allocation0 [shape = 'u32[]', space=smem, size = 0x4, offset = 0x4, fixed_abs, tag = 'smem constant byte address 0x4 - core index']
  #allocation1 [shape = 'u32[144,128]{1,0:T(1,128)}', space=vmem, size = 0x12000, scoped, tag = 'internal scratch']
  %s0 = inlined_call_operand.hbm [shape: bf16[16,768], index: 0, kind: input, shape index: {}]
  %s1 = inlined_call_operand.hbm [shape: bf16[16,768], index: 1, kind: input, shape index: {}]
  %s2 = inlined_call_operand.hbm [shape: bf16[768,1536], index: 2, kind: input, shape index: {}]
  %s3 = inlined_call_operand.hbm [shape: f32[16,768], index: 3, kind: output, shape index: {0}]
  %s4 = inlined_call_operand.hbm [shape: f32[16,768], index: 4, kind: output, shape index: {1}]
  %s5 = inlined_call_operand.hbm [shape: f32[16,768], index: 5, kind: output, shape index: {2}]
  %6 = xla_tuple %s3, %s4, %s5
  %s7 = sld [smem:[#allocation0]]
  $region50: #{tpu_custom_call.1} parent=0
    _
  %s9 = ssub.s32 1, %s7
  %s10 = scalar_select 0, %s9, %s7
  $region1: #{tpu_custom_call.1} parent=0
    #allocation2 [shape = 'u8[24576]{0}', space=vmem, size = 0x6000, scoped, tag = 'input window, operand 0, single buffered']
    #allocation3 [shape = 's32[1]{0}', space=sflag, size = 0x4, scoped, tag = 'scoped memory for tpu_custom_call.1']
    #allocation4 [shape = 's32[1]{0}', space=sflag, size = 0x4, scoped, tag = 'scoped memory for tpu_custom_call.1']
    #allocation5 [shape = 'u8[24576]{0}', space=vmem, size = 0x6000, scoped, tag = 'input window, operand 1, single buffered']
    #allocation6 [shape = 's32[1]{0}', space=sflag, size = 0x4, scoped, tag = 'scoped memory for tpu_custom_call.1']
    #allocation7 [shape = 'u8[2359296]{0}', space=vmem, size = 0x240000, scoped, tag = 'input window, operand 2, single buffered']
    #allocation8 [shape = 'u8[49152]{0}', space=vmem, size = 0xc000, scoped, tag = 'output window, operand 0, single buffered']
    #allocation9 [shape = 'u8[49152]{0}', space=vmem, size = 0xc000, scoped, tag = 'output window, operand 1, single buffered']
    #allocation10 [shape = 's32[1]{0}', space=sflag, size = 0x4, scoped, tag = 'scoped memory for tpu_custom_call.1']
    #allocation11 [shape = 'u8[49152]{0}', space=vmem, size = 0xc000, scoped, tag = 'output window, operand 2, single buffered']
    %11 = vsyncpa [#allocation3], 0
    %12 = vsyncpa [#allocation6], 0
    %13 = vsyncpa [#allocation4], 0
    %14 = vsyncpa [#allocation10], 0
    // Predicated region
    $region2: #{tpu_custom_call.1} parent=1 // pred_check
      _
    $region3: #{tpu_custom_call.1} parent=1 // pred_check_branch
      %16 = sbr.rel (0) target = $region5
    $region4: #{tpu_custom_call.1} parent=1 // pred_region
      %s18 = ssub.s32 768, 768
      %19 = vsyncadd [#allocation3], %s18
      %s20 = sshll.u32 [#allocation2], 4
      %s21 = int_to_ptr.vmem [resolvable:$true] %s20
      %26 = dma.hbm_to_vmem [thread:$0]  %s0, 768, %s21, [#allocation3], 384, 384, 24
    $region5: #{tpu_custom_call.1} parent=1 // pred_fallthru
      _
    // Predicated region
    $region6: #{tpu_custom_call.1} parent=1 // pred_check
      _
    $region7: #{tpu_custom_call.1} parent=1 // pred_check_branch
      %28 = sbr.rel (0) target = $region9
    $region8: #{tpu_custom_call.1} parent=1 // pred_region
      %s30 = ssub.s32 768, 768
      %31 = vsyncadd [#allocation6], %s30
      %s32 = sshll.u32 [#allocation5], 4
      %s33 = int_to_ptr.vmem [resolvable:$true] %s32
      %38 = dma.hbm_to_vmem [thread:$0]  %s1, 768, %s33, [#allocation6], 384, 384, 24
    $region9: #{tpu_custom_call.1} parent=1 // pred_fallthru
      _
    // Predicated region
    $region10: #{tpu_custom_call.1} parent=1 // pred_check
      _
    $region11: #{tpu_custom_call.1} parent=1 // pred_check_branch
      %40 = sbr.rel (0) target = $region13
    $region12: #{tpu_custom_call.1} parent=1 // pred_region
      %s42 = ssub.s32 73728, 73728
      %43 = vsyncadd [#allocation6], %s42
      %s44 = sshll.u32 [#allocation7], 4
      %s45 = int_to_ptr.vmem [resolvable:$true] %s44
      %50 = dma.hbm_to_vmem [thread:$0]  %s2, 73728, %s45, [#allocation6], 768, 768, 48
    $region13: #{tpu_custom_call.1} parent=1 // pred_fallthru
      _
    // Predicated region
    $region14: #{tpu_custom_call.1} parent=1 // pred_check
      _
    $region15: #{tpu_custom_call.1} parent=1 // pred_check_branch
      %52 = sbr.rel (0) target = $region17
    $region16: #{tpu_custom_call.1} parent=1 // pred_region
      %53 = dma.done [#allocation3], 768
    $region17: #{tpu_custom_call.1} parent=1 // pred_fallthru
      _
    // Predicated region
    $region18: #{tpu_custom_call.1} parent=1 // pred_check
      _
    $region19: #{tpu_custom_call.1} parent=1 // pred_check_branch
      %55 = sbr.rel (0) target = $region21
    $region20: #{tpu_custom_call.1} parent=1 // pred_region
      %56 = dma.done [#allocation6], 768
    $region21: #{tpu_custom_call.1} parent=1 // pred_fallthru
      _
    // Predicated region
    $region22: #{tpu_custom_call.1} parent=1 // pred_check
      _
    $region23: #{tpu_custom_call.1} parent=1 // pred_check_branch
      %58 = sbr.rel (0) target = $region25
    $region24: #{tpu_custom_call.1} parent=1 // pred_region
      %59 = dma.done [#allocation6], 73728
    $region25: #{tpu_custom_call.1} parent=1 // pred_fallthru
      _
    %v60 = vld [vmem:[#allocation2] sm:$0xff]
    %v61 = vld [vmem:[#allocation2 + $0x8] sm:$0xff]
    %v62 = vld [vmem:[#allocation2 + $0x10] sm:$0xff]
    %v63 = vld [vmem:[#allocation2 + $0x18] sm:$0xff]
    %v64 = vld [vmem:[#allocation2 + $0x20] sm:$0xff]
    %v65 = vld [vmem:[#allocation2 + $0x28] sm:$0xff]
    %v66 = vld [vmem:[#allocation7] sm:$0xff]
    %v67 = vld [vmem:[#allocation7 + $0x8] sm:$0xff]
    %v68 = vld [vmem:[#allocation7 + $0x10] sm:$0xff]
    %v69 = vld [vmem:[#allocation7 + $0x30] sm:$0xff]
    %v70 = vld [vmem:[#allocation7 + $0x38] sm:$0xff]
    %v71 = vld [vmem:[#allocation7 + $0x40] sm:$0xff]
    %v72 = vld [vmem:[#allocation7 + $0x60] sm:$0xff]
    %v73 = vld [vmem:[#allocation7 + $0x68] sm:$0xff]
    %v74 = vld [vmem:[#allocation7 + $0x70] sm:$0xff]
    %v75 = vld [vmem:[#allocation7 + $0x90] sm:$0xff]
    %v76 = vld [vmem:[#allocation7 + $0x98] sm:$0xff]
    %v77 = vld [vmem:[#allocation7 + $0xa0] sm:$0xff]
    %v78 = vld [vmem:[#allocation7 + $0xc0] sm:$0xff]
    %v79 = vld [vmem:[#allocation7 + $0xc8] sm:$0xff]
    %v80 = vld [vmem:[#allocation7 + $0xd0] sm:$0xff]
    %v81 = vld [vmem:[#allocation7 + $0xf0] sm:$0xff]
    %v82 = vld [vmem:[#allocation7 + $0xf8] sm:$0xff]
    %v83 = vld [vmem:[#allocation7 + $0x100] sm:$0xff]
    %v84 = vld [vmem:[#allocation7 + $0x120] sm:$0xff]
    %v85 = vld [vmem:[#allocation7 + $0x128] sm:$0xff]
    %v86 = vld [vmem:[#allocation7 + $0x130] sm:$0xff]
    %v87 = vld [vmem:[#allocation7 + $0x150] sm:$0xff]
    %v88 = vld [vmem:[#allocation7 + $0x158] sm:$0xff]
    %v89 = vld [vmem:[#allocation7 + $0x160] sm:$0xff]
    %v90 = vld [vmem:[#allocation7 + $0x180] sm:$0xff]
    %v91 = vld [vmem:[#allocation7 + $0x188] sm:$0xff]
    %v92 = vld [vmem:[#allocation7 + $0x190] sm:$0xff]
    %v93 = vld [vmem:[#allocation7 + $0x1b0] sm:$0xff]
    %v94 = vld [vmem:[#allocation7 + $0x1b8] sm:$0xff]
    %v95 = vld [vmem:[#allocation7 + $0x1c0] sm:$0xff]
    %v96 = vld [vmem:[#allocation7 + $0x1e0] sm:$0xff]
    %v97 = vld [vmem:[#allocation7 + $0x1e8] sm:$0xff]
    %v98 = vld [vmem:[#allocation7 + $0x1f0] sm:$0xff]
    %v99 = vld [vmem:[#allocation7 + $0x210] sm:$0xff]
    %v100 = vld [vmem:[#allocation7 + $0x218] sm:$0xff]
    %v101 = vld [vmem:[#allocation7 + $0x220] sm:$0xff]
    %v102 = vld [vmem:[#allocation7 + $0x240] sm:$0xff]
    %v103 = vld [vmem:[#allocation7 + $0x248] sm:$0xff]
    %v104 = vld [vmem:[#allocation7 + $0x250] sm:$0xff]
    %v105 = vld [vmem:[#allocation7 + $0x270] sm:$0xff]
    %v106 = vld [vmem:[#allocation7 + $0x278] sm:$0xff]
    %v107 = vld [vmem:[#allocation7 + $0x280] sm:$0xff]
    %v108 = vld [vmem:[#allocation7 + $0x2a0] sm:$0xff]
    %v109 = vld [vmem:[#allocation7 + $0x2a8] sm:$0xff]
    %v110 = vld [vmem:[#allocation7 + $0x2b0] sm:$0xff]
    %v111 = vld [vmem:[#allocation7 + $0x2d0] sm:$0xff]
    %v112 = vld [vmem:[#allocation7 + $0x2d8] sm:$0xff]
    %v113 = vld [vmem:[#allocation7 + $0x2e0] sm:$0xff]
    %v114 = vld [vmem:[#allocation7 + $0x300] sm:$0xff]
    %v115 = vld [vmem:[#allocation7 + $0x308] sm:$0xff]
    %v116 = vld [vmem:[#allocation7 + $0x310] sm:$0xff]
    %v117 = vld [vmem:[#allocation7 + $0x330] sm:$0xff]
    %v118 = vld [vmem:[#allocation7 + $0x338] sm:$0xff]
    %v119 = vld [vmem:[#allocation7 + $0x340] sm:$0xff]
    %v120 = vld [vmem:[#allocation7 + $0x360] sm:$0xff]
    %v121 = vld [vmem:[#allocation7 + $0x368] sm:$0xff]
    %v122 = vld [vmem:[#allocation7 + $0x370] sm:$0xff]
    %v123 = vld [vmem:[#allocation7 + $0x390] sm:$0xff]
    %v124 = vld [vmem:[#allocation7 + $0x398] sm:$0xff]
    %v125 = vld [vmem:[#allocation7 + $0x3a0] sm:$0xff]
    %v126 = vld [vmem:[#allocation7 + $0x3c0] sm:$0xff]
    %v127 = vld [vmem:[#allocation7 + $0x3c8] sm:$0xff]
    %v128 = vld [vmem:[#allocation7 + $0x3d0] sm:$0xff]
    %v129 = vld [vmem:[#allocation7 + $0x3f0] sm:$0xff]
    %v130 = vld [vmem:[#allocation7 + $0x3f8] sm:$0xff]
    %v131 = vld [vmem:[#allocation7 + $0x400] sm:$0xff]
    %v132 = vld [vmem:[#allocation7 + $0x420] sm:$0xff]
    %v133 = vld [vmem:[#allocation7 + $0x428] sm:$0xff]
    %v134 = vld [vmem:[#allocation7 + $0x430] sm:$0xff]
    %v135 = vld [vmem:[#allocation7 + $0x450] sm:$0xff]
    %v136 = vld [vmem:[#allocation7 + $0x458] sm:$0xff]
    %v137 = vld [vmem:[#allocation7 + $0x460] sm:$0xff]
    %v138 = vld [vmem:[#allocation7 + $0x480] sm:$0xff]
    %v139 = vld [vmem:[#allocation7 + $0x488] sm:$0xff]
    %v140 = vld [vmem:[#allocation7 + $0x490] sm:$0xff]
    %v141 = vld [vmem:[#allocation7 + $0x4b0] sm:$0xff]
    %v142 = vld [vmem:[#allocation7 + $0x4b8] sm:$0xff]
    %v143 = vld [vmem:[#allocation7 + $0x4c0] sm:$0xff]
    %v144 = vld [vmem:[#allocation7 + $0x4e0] sm:$0xff]
    %v145 = vld [vmem:[#allocation7 + $0x4e8] sm:$0xff]
    %v146 = vld [vmem:[#allocation7 + $0x4f0] sm:$0xff]
    %v147 = vld [vmem:[#allocation7 + $0x510] sm:$0xff]
    %v148 = vld [vmem:[#allocation7 + $0x518] sm:$0xff]
    %v149 = vld [vmem:[#allocation7 + $0x520] sm:$0xff]
    %v150 = vld [vmem:[#allocation7 + $0x540] sm:$0xff]
    %v151 = vld [vmem:[#allocation7 + $0x548] sm:$0xff]
    %v152 = vld [vmem:[#allocation7 + $0x550] sm:$0xff]
    %v153 = vld [vmem:[#allocation7 + $0x570] sm:$0xff]
    %v154 = vld [vmem:[#allocation7 + $0x578] sm:$0xff]
    %v155 = vld [vmem:[#allocation7 + $0x580] sm:$0xff]
    %v156 = vld [vmem:[#allocation7 + $0x5a0] sm:$0xff]
    %v157 = vld [vmem:[#allocation7 + $0x5a8] sm:$0xff]
    %v158 = vld [vmem:[#allocation7 + $0x5b0] sm:$0xff]
    %v159 = vld [vmem:[#allocation7 + $0x5d0] sm:$0xff]
    %v160 = vld [vmem:[#allocation7 + $0x5d8] sm:$0xff]
    %v161 = vld [vmem:[#allocation7 + $0x5e0] sm:$0xff]
    %v162 = vld [vmem:[#allocation7 + $0x600] sm:$0xff]
    %v163 = vld [vmem:[#allocation7 + $0x608] sm:$0xff]
    %v164 = vld [vmem:[#allocation7 + $0x610] sm:$0xff]
    %v165 = vld [vmem:[#allocation7 + $0x630] sm:$0xff]
    %v166 = vld [vmem:[#allocation7 + $0x638] sm:$0xff]
    %v167 = vld [vmem:[#allocation7 + $0x640] sm:$0xff]
    %v168 = vld [vmem:[#allocation7 + $0x660] sm:$0xff]
    %v169 = vld [vmem:[#allocation7 + $0x668] sm:$0xff]
    %v170 = vld [vmem:[#allocation7 + $0x670] sm:$0xff]
    %v171 = vld [vmem:[#allocation7 + $0x690] sm:$0xff]
    %v172 = vld [vmem:[#allocation7 + $0x698] sm:$0xff]
    %v173 = vld [vmem:[#allocation7 + $0x6a0] sm:$0xff]
    %v174 = vld [vmem:[#allocation7 + $0x6c0] sm:$0xff]
    %v175 = vld [vmem:[#allocation7 + $0x6c8] sm:$0xff]
    %v176 = vld [vmem:[#allocation7 + $0x6d0] sm:$0xff]
    %v177 = vld [vmem:[#allocation7 + $0x6f0] sm:$0xff]
    %v178 = vld [vmem:[#allocation7 + $0x6f8] sm:$0xff]
    %v179 = vld [vmem:[#allocation7 + $0x700] sm:$0xff]
    %v180 = vld [vmem:[#allocation7 + $0x720] sm:$0xff]
    %v181 = vld [vmem:[#allocation7 + $0x728] sm:$0xff]
    %v182 = vld [vmem:[#allocation7 + $0x730] sm:$0xff]
    %v183 = vld [vmem:[#allocation7 + $0x750] sm:$0xff]
    %v184 = vld [vmem:[#allocation7 + $0x758] sm:$0xff]
    %v185 = vld [vmem:[#allocation7 + $0x760] sm:$0xff]
    %v186 = vld [vmem:[#allocation7 + $0x780] sm:$0xff]
    %v187 = vld [vmem:[#allocation7 + $0x788] sm:$0xff]
    %v188 = vld [vmem:[#allocation7 + $0x790] sm:$0xff]
    %v189 = vld [vmem:[#allocation7 + $0x7b0] sm:$0xff]
    %v190 = vld [vmem:[#allocation7 + $0x7b8] sm:$0xff]
    %v191 = vld [vmem:[#allocation7 + $0x7c0] sm:$0xff]
    %v192 = vld [vmem:[#allocation7 + $0x7e0] sm:$0xff]
    %v193 = vld [vmem:[#allocation7 + $0x7e8] sm:$0xff]
    %v194 = vld [vmem:[#allocation7 + $0x7f0] sm:$0xff]
    %v195 = vld [vmem:[#allocation7 + $0x810] sm:$0xff]
    %v196 = vld [vmem:[#allocation7 + $0x818] sm:$0xff]
    %v197 = vld [vmem:[#allocation7 + $0x820] sm:$0xff]
    %v198 = vld [vmem:[#allocation7 + $0x840] sm:$0xff]
    %v199 = vld [vmem:[#allocation7 + $0x848] sm:$0xff]
    %v200 = vld [vmem:[#allocation7 + $0x850] sm:$0xff]
    %v201 = vld [vmem:[#allocation7 + $0x870] sm:$0xff]
    %v202 = vld [vmem:[#allocation7 + $0x878] sm:$0xff]
    %v203 = vld [vmem:[#allocation7 + $0x880] sm:$0xff]
    %v204 = vld [vmem:[#allocation7 + $0x8a0] sm:$0xff]
    %v205 = vld [vmem:[#allocation7 + $0x8a8] sm:$0xff]
    %v206 = vld [vmem:[#allocation7 + $0x8b0] sm:$0xff]
    %v207 = vld [vmem:[#allocation7 + $0x8d0] sm:$0xff]
    %v208 = vld [vmem:[#allocation7 + $0x8d8] sm:$0xff]
    %v209 = vld [vmem:[#allocation7 + $0x8e0] sm:$0xff]
    %v210 = vld [vmem:[#allocation7 + $0x900] sm:$0xff]
    %v211 = vld [vmem:[#allocation7 + $0x908] sm:$0xff]
    %v212 = vld [vmem:[#allocation7 + $0x910] sm:$0xff]
    %v213 = vld [vmem:[#allocation7 + $0x930] sm:$0xff]
    %v214 = vld [vmem:[#allocation7 + $0x938] sm:$0xff]
    %v215 = vld [vmem:[#allocation7 + $0x940] sm:$0xff]
    %v216 = vld [vmem:[#allocation7 + $0x960] sm:$0xff]
    %v217 = vld [vmem:[#allocation7 + $0x968] sm:$0xff]
    %v218 = vld [vmem:[#allocation7 + $0x970] sm:$0xff]
    %v219 = vld [vmem:[#allocation7 + $0x990] sm:$0xff]
    %v220 = vld [vmem:[#allocation7 + $0x998] sm:$0xff]
    %v221 = vld [vmem:[#allocation7 + $0x9a0] sm:$0xff]
    %v222 = vld [vmem:[#allocation7 + $0x9c0] sm:$0xff]
    %v223 = vld [vmem:[#allocation7 + $0x9c8] sm:$0xff]
    %v224 = vld [vmem:[#allocation7 + $0x9d0] sm:$0xff]
    %v225 = vld [vmem:[#allocation7 + $0x9f0] sm:$0xff]
    %v226 = vld [vmem:[#allocation7 + $0x9f8] sm:$0xff]
    %v227 = vld [vmem:[#allocation7 + $0xa00] sm:$0xff]
    %v228 = vld [vmem:[#allocation7 + $0xa20] sm:$0xff]
    %v229 = vld [vmem:[#allocation7 + $0xa28] sm:$0xff]
    %v230 = vld [vmem:[#allocation7 + $0xa30] sm:$0xff]
    %v231 = vld [vmem:[#allocation7 + $0xa50] sm:$0xff]
    %v232 = vld [vmem:[#allocation7 + $0xa58] sm:$0xff]
    %v233 = vld [vmem:[#allocation7 + $0xa60] sm:$0xff]
    %v234 = vld [vmem:[#allocation7 + $0xa80] sm:$0xff]
    %v235 = vld [vmem:[#allocation7 + $0xa88] sm:$0xff]
    %v236 = vld [vmem:[#allocation7 + $0xa90] sm:$0xff]
    %v237 = vld [vmem:[#allocation7 + $0xab0] sm:$0xff]
    %v238 = vld [vmem:[#allocation7 + $0xab8] sm:$0xff]
    %v239 = vld [vmem:[#allocation7 + $0xac0] sm:$0xff]
    %v240 = vld [vmem:[#allocation7 + $0xae0] sm:$0xff]
    %v241 = vld [vmem:[#allocation7 + $0xae8] sm:$0xff]
    %v242 = vld [vmem:[#allocation7 + $0xaf0] sm:$0xff]
    %v243 = vld [vmem:[#allocation7 + $0xb10] sm:$0xff]
    %v244 = vld [vmem:[#allocation7 + $0xb18] sm:$0xff]
    %v245 = vld [vmem:[#allocation7 + $0xb20] sm:$0xff]
    %v246 = vld [vmem:[#allocation7 + $0xb40] sm:$0xff]
    %v247 = vld [vmem:[#allocation7 + $0xb48] sm:$0xff]
    %v248 = vld [vmem:[#allocation7 + $0xb50] sm:$0xff]
    %v249 = vld [vmem:[#allocation7 + $0xb70] sm:$0xff]
    %v250 = vld [vmem:[#allocation7 + $0xb78] sm:$0xff]
    %v251 = vld [vmem:[#allocation7 + $0xb80] sm:$0xff]
    %v252 = vld [vmem:[#allocation7 + $0xba0] sm:$0xff]
    %v253 = vld [vmem:[#allocation7 + $0xba8] sm:$0xff]
    %v254 = vld [vmem:[#allocation7 + $0xbb0] sm:$0xff]
    %v255 = vld [vmem:[#allocation7 + $0xbd0] sm:$0xff]
    %v256 = vld [vmem:[#allocation7 + $0xbd8] sm:$0xff]
    %v257 = vld [vmem:[#allocation7 + $0xbe0] sm:$0xff]
    %v258 = vld [vmem:[#allocation7 + $0xc00] sm:$0xff]
    %v259 = vld [vmem:[#allocation7 + $0xc08] sm:$0xff]
    %v260 = vld [vmem:[#allocation7 + $0xc10] sm:$0xff]
    %v261 = vld [vmem:[#allocation7 + $0xc30] sm:$0xff]
    %v262 = vld [vmem:[#allocation7 + $0xc38] sm:$0xff]
    %v263 = vld [vmem:[#allocation7 + $0xc40] sm:$0xff]
    %v264 = vld [vmem:[#allocation7 + $0xc60] sm:$0xff]
    %v265 = vld [vmem:[#allocation7 + $0xc68] sm:$0xff]
    %v266 = vld [vmem:[#allocation7 + $0xc70] sm:$0xff]
    %v267 = vld [vmem:[#allocation7 + $0xc90] sm:$0xff]
    %v268 = vld [vmem:[#allocation7 + $0xc98] sm:$0xff]
    %v269 = vld [vmem:[#allocation7 + $0xca0] sm:$0xff]
    %v270 = vld [vmem:[#allocation7 + $0xcc0] sm:$0xff]
    %v271 = vld [vmem:[#allocation7 + $0xcc8] sm:$0xff]
    %v272 = vld [vmem:[#allocation7 + $0xcd0] sm:$0xff]
    %v273 = vld [vmem:[#allocation7 + $0xcf0] sm:$0xff]
    %v274 = vld [vmem:[#allocation7 + $0xcf8] sm:$0xff]
    %v275 = vld [vmem:[#allocation7 + $0xd00] sm:$0xff]
    %v276 = vld [vmem:[#allocation7 + $0xd20] sm:$0xff]
    %v277 = vld [vmem:[#allocation7 + $0xd28] sm:$0xff]
    %v278 = vld [vmem:[#allocation7 + $0xd30] sm:$0xff]
    %v279 = vld [vmem:[#allocation7 + $0xd50] sm:$0xff]
    %v280 = vld [vmem:[#allocation7 + $0xd58] sm:$0xff]
    %v281 = vld [vmem:[#allocation7 + $0xd60] sm:$0xff]
    %v282 = vld [vmem:[#allocation7 + $0xd80] sm:$0xff]
    %v283 = vld [vmem:[#allocation7 + $0xd88] sm:$0xff]
    %v284 = vld [vmem:[#allocation7 + $0xd90] sm:$0xff]
    %v285 = vld [vmem:[#allocation7 + $0xdb0] sm:$0xff]
    %v286 = vld [vmem:[#allocation7 + $0xdb8] sm:$0xff]
    %v287 = vld [vmem:[#allocation7 + $0xdc0] sm:$0xff]
    %v288 = vld [vmem:[#allocation7 + $0xde0] sm:$0xff]
    %v289 = vld [vmem:[#allocation7 + $0xde8] sm:$0xff]
    %v290 = vld [vmem:[#allocation7 + $0xdf0] sm:$0xff]
    %v291 = vld [vmem:[#allocation7 + $0xe10] sm:$0xff]
    %v292 = vld [vmem:[#allocation7 + $0xe18] sm:$0xff]
    %v293 = vld [vmem:[#allocation7 + $0xe20] sm:$0xff]
    %v294 = vld [vmem:[#allocation7 + $0xe40] sm:$0xff]
    %v295 = vld [vmem:[#allocation7 + $0xe48] sm:$0xff]
    %v296 = vld [vmem:[#allocation7 + $0xe50] sm:$0xff]
    %v297 = vld [vmem:[#allocation7 + $0xe70] sm:$0xff]
    %v298 = vld [vmem:[#allocation7 + $0xe78] sm:$0xff]
    %v299 = vld [vmem:[#allocation7 + $0xe80] sm:$0xff]
    %v300 = vld [vmem:[#allocation7 + $0xea0] sm:$0xff]
    %v301 = vld [vmem:[#allocation7 + $0xea8] sm:$0xff]
    %v302 = vld [vmem:[#allocation7 + $0xeb0] sm:$0xff]
    %v303 = vld [vmem:[#allocation7 + $0xed0] sm:$0xff]
    %v304 = vld [vmem:[#allocation7 + $0xed8] sm:$0xff]
    %v305 = vld [vmem:[#allocation7 + $0xee0] sm:$0xff]
    %v306 = vld [vmem:[#allocation7 + $0xf00] sm:$0xff]
    %v307 = vld [vmem:[#allocation7 + $0xf08] sm:$0xff]
    %v308 = vld [vmem:[#allocation7 + $0xf10] sm:$0xff]
    %v309 = vld [vmem:[#allocation7 + $0xf30] sm:$0xff]
    %v310 = vld [vmem:[#allocation7 + $0xf38] sm:$0xff]
    %v311 = vld [vmem:[#allocation7 + $0xf40] sm:$0xff]
    %v312 = vld [vmem:[#allocation7 + $0xf60] sm:$0xff]
    %v313 = vld [vmem:[#allocation7 + $0xf68] sm:$0xff]
    %v314 = vld [vmem:[#allocation7 + $0xf70] sm:$0xff]
    %v315 = vld [vmem:[#allocation7 + $0xf90] sm:$0xff]
    %v316 = vld [vmem:[#allocation7 + $0xf98] sm:$0xff]
    %v317 = vld [vmem:[#allocation7 + $0xfa0] sm:$0xff]
    %v318 = vld [vmem:[#allocation7 + $0xfc0] sm:$0xff]
    %v319 = vld [vmem:[#allocation7 + $0xfc8] sm:$0xff]
    %v320 = vld [vmem:[#allocation7 + $0xfd0] sm:$0xff]
    %v321 = vld [vmem:[#allocation7 + $0xff0] sm:$0xff]
    %v322 = vld [vmem:[#allocation7 + $0xff8] sm:$0xff]
    %v323 = vld [vmem:[#allocation7 + $0x1000] sm:$0xff]
    %v324 = vld [vmem:[#allocation7 + $0x1020] sm:$0xff]
    %v325 = vld [vmem:[#allocation7 + $0x1028] sm:$0xff]
    %v326 = vld [vmem:[#allocation7 + $0x1030] sm:$0xff]
    %v327 = vld [vmem:[#allocation7 + $0x1050] sm:$0xff]
    %v328 = vld [vmem:[#allocation7 + $0x1058] sm:$0xff]
    %v329 = vld [vmem:[#allocation7 + $0x1060] sm:$0xff]
    %v330 = vld [vmem:[#allocation7 + $0x1080] sm:$0xff]
    %v331 = vld [vmem:[#allocation7 + $0x1088] sm:$0xff]
    %v332 = vld [vmem:[#allocation7 + $0x1090] sm:$0xff]
    %v333 = vld [vmem:[#allocation7 + $0x10b0] sm:$0xff]
    %v334 = vld [vmem:[#allocation7 + $0x10b8] sm:$0xff]
    %v335 = vld [vmem:[#allocation7 + $0x10c0] sm:$0xff]
    %v336 = vld [vmem:[#allocation7 + $0x10e0] sm:$0xff]
    %v337 = vld [vmem:[#allocation7 + $0x10e8] sm:$0xff]
    %v338 = vld [vmem:[#allocation7 + $0x10f0] sm:$0xff]
    %v339 = vld [vmem:[#allocation7 + $0x1110] sm:$0xff]
    %v340 = vld [vmem:[#allocation7 + $0x1118] sm:$0xff]
    %v341 = vld [vmem:[#allocation7 + $0x1120] sm:$0xff]
    %v342 = vld [vmem:[#allocation7 + $0x1140] sm:$0xff]
    %v343 = vld [vmem:[#allocation7 + $0x1148] sm:$0xff]
    %v344 = vld [vmem:[#allocation7 + $0x1150] sm:$0xff]
    %v345 = vld [vmem:[#allocation7 + $0x1170] sm:$0xff]
    %v346 = vld [vmem:[#allocation7 + $0x1178] sm:$0xff]
    %v347 = vld [vmem:[#allocation7 + $0x1180] sm:$0xff]
    %v348 = vld [vmem:[#allocation7 + $0x11a0] sm:$0xff]
    %v349 = vld [vmem:[#allocation7 + $0x11a8] sm:$0xff]
    %v350 = vld [vmem:[#allocation7 + $0x11b0] sm:$0xff]
    %v351 = vld [vmem:[#allocation7 + $0x11d0] sm:$0xff]
    %v352 = vld [vmem:[#allocation7 + $0x11d8] sm:$0xff]
    %v353 = vld [vmem:[#allocation7 + $0x11e0] sm:$0xff]
    %v360 = vunpack.c.l.b16 %v60
    %v361 = vunpack.c.h.b16 %v60
    %v362 = vunpack.c.l.b16 %v61
    %v363 = vunpack.c.h.b16 %v61
    %v364 = vunpack.c.l.b16 %v62
    %v365 = vunpack.c.h.b16 %v62
    %v366 = vunpack.c.l.b16 %v63
    %v367 = vunpack.c.h.b16 %v63
    %v368 = vunpack.c.l.b16 %v64
    %v369 = vunpack.c.h.b16 %v64
    %v370 = vunpack.c.l.b16 %v65
    %v371 = vunpack.c.h.b16 %v65
    %v372 = vpack.c.b16 %v366, %v360
    %v373 = vpack.c.b16 %v367, %v361
    %v374 = vpack.c.b16 %v368, %v362
    %v375 = vpack.c.b16 %v369, %v363
    %v376 = vpack.c.b16 %v370, %v364
    %v377 = vpack.c.b16 %v371, %v365
    %v672 = vunpack.c.l.b16 %v66
    %v673 = vunpack.c.h.b16 %v66
    %v674 = vunpack.c.l.b16 %v67
    %v675 = vunpack.c.h.b16 %v67
    %v676 = vunpack.c.l.b16 %v68
    %v677 = vunpack.c.h.b16 %v68
    %v678 = vunpack.c.l.b16 %v69
    %v679 = vunpack.c.h.b16 %v69
    %v680 = vunpack.c.l.b16 %v70
    %v681 = vunpack.c.h.b16 %v70
    %v682 = vunpack.c.l.b16 %v71
    %v683 = vunpack.c.h.b16 %v71
    %v684 = vunpack.c.l.b16 %v72
    %v685 = vunpack.c.h.b16 %v72
    %v686 = vunpack.c.l.b16 %v73
    %v687 = vunpack.c.h.b16 %v73
    %v688 = vunpack.c.l.b16 %v74
    %v689 = vunpack.c.h.b16 %v74
    %v690 = vunpack.c.l.b16 %v75
    %v691 = vunpack.c.h.b16 %v75
    %v692 = vunpack.c.l.b16 %v76
    %v693 = vunpack.c.h.b16 %v76
    %v694 = vunpack.c.l.b16 %v77
    %v695 = vunpack.c.h.b16 %v77
    %v696 = vunpack.c.l.b16 %v78
    %v697 = vunpack.c.h.b16 %v78
    %v698 = vunpack.c.l.b16 %v79
    %v699 = vunpack.c.h.b16 %v79
    %v700 = vunpack.c.l.b16 %v80
    %v701 = vunpack.c.h.b16 %v80
    %v702 = vunpack.c.l.b16 %v81
    %v703 = vunpack.c.h.b16 %v81
    %v704 = vunpack.c.l.b16 %v82
    %v705 = vunpack.c.h.b16 %v82
    %v706 = vunpack.c.l.b16 %v83
    %v707 = vunpack.c.h.b16 %v83
    %v708 = vunpack.c.l.b16 %v84
    %v709 = vunpack.c.h.b16 %v84
    %v710 = vunpack.c.l.b16 %v85
    %v711 = vunpack.c.h.b16 %v85
    %v712 = vunpack.c.l.b16 %v86
    %v713 = vunpack.c.h.b16 %v86
    %v714 = vunpack.c.l.b16 %v87
    %v715 = vunpack.c.h.b16 %v87
    %v716 = vunpack.c.l.b16 %v88
    %v717 = vunpack.c.h.b16 %v88
    %v718 = vunpack.c.l.b16 %v89
    %v719 = vunpack.c.h.b16 %v89
    %v720 = vunpack.c.l.b16 %v90
    %v721 = vunpack.c.h.b16 %v90
    %v722 = vunpack.c.l.b16 %v91
    %v723 = vunpack.c.h.b16 %v91
    %v724 = vunpack.c.l.b16 %v92
    %v725 = vunpack.c.h.b16 %v92
    %v726 = vunpack.c.l.b16 %v93
    %v727 = vunpack.c.h.b16 %v93
    %v728 = vunpack.c.l.b16 %v94
    %v729 = vunpack.c.h.b16 %v94
    %v730 = vunpack.c.l.b16 %v95
    %v731 = vunpack.c.h.b16 %v95
    %v732 = vunpack.c.l.b16 %v96
    %v733 = vunpack.c.h.b16 %v96
    %v734 = vunpack.c.l.b16 %v97
    %v735 = vunpack.c.h.b16 %v97
    %v736 = vunpack.c.l.b16 %v98
    %v737 = vunpack.c.h.b16 %v98
    %v738 = vunpack.c.l.b16 %v99
    %v739 = vunpack.c.h.b16 %v99
    %v740 = vunpack.c.l.b16 %v100
    %v741 = vunpack.c.h.b16 %v100
    %v742 = vunpack.c.l.b16 %v101
    %v743 = vunpack.c.h.b16 %v101
    %v744 = vunpack.c.l.b16 %v102
    %v745 = vunpack.c.h.b16 %v102
    %v746 = vunpack.c.l.b16 %v103
    %v747 = vunpack.c.h.b16 %v103
    %v748 = vunpack.c.l.b16 %v104
    %v749 = vunpack.c.h.b16 %v104
    %v750 = vunpack.c.l.b16 %v105
    %v751 = vunpack.c.h.b16 %v105
    %v752 = vunpack.c.l.b16 %v106
    %v753 = vunpack.c.h.b16 %v106
    %v754 = vunpack.c.l.b16 %v107
    %v755 = vunpack.c.h.b16 %v107
    %v756 = vunpack.c.l.b16 %v108
    %v757 = vunpack.c.h.b16 %v108
    %v758 = vunpack.c.l.b16 %v109
    %v759 = vunpack.c.h.b16 %v109
    %v760 = vunpack.c.l.b16 %v110
    %v761 = vunpack.c.h.b16 %v110
    %v762 = vunpack.c.l.b16 %v111
    %v763 = vunpack.c.h.b16 %v111
    %v764 = vunpack.c.l.b16 %v112
    %v765 = vunpack.c.h.b16 %v112
    %v766 = vunpack.c.l.b16 %v113
    %v767 = vunpack.c.h.b16 %v113
    %v768 = vunpack.c.l.b16 %v114
    %v769 = vunpack.c.h.b16 %v114
    %v770 = vunpack.c.l.b16 %v115
    %v771 = vunpack.c.h.b16 %v115
    %v772 = vunpack.c.l.b16 %v116
    %v773 = vunpack.c.h.b16 %v116
    %v774 = vunpack.c.l.b16 %v117
    %v775 = vunpack.c.h.b16 %v117
    %v776 = vunpack.c.l.b16 %v118
    %v777 = vunpack.c.h.b16 %v118
    %v778 = vunpack.c.l.b16 %v119
    %v779 = vunpack.c.h.b16 %v119
    %v780 = vunpack.c.l.b16 %v120
    %v781 = vunpack.c.h.b16 %v120
    %v782 = vunpack.c.l.b16 %v121
    %v783 = vunpack.c.h.b16 %v121
    %v784 = vunpack.c.l.b16 %v122
    %v785 = vunpack.c.h.b16 %v122
    %v786 = vunpack.c.l.b16 %v123
    %v787 = vunpack.c.h.b16 %v123
    %v788 = vunpack.c.l.b16 %v124
    %v789 = vunpack.c.h.b16 %v124
    %v790 = vunpack.c.l.b16 %v125
    %v791 = vunpack.c.h.b16 %v125
    %v792 = vunpack.c.l.b16 %v126
    %v793 = vunpack.c.h.b16 %v126
    %v794 = vunpack.c.l.b16 %v127
    %v795 = vunpack.c.h.b16 %v127
    %v796 = vunpack.c.l.b16 %v128
    %v797 = vunpack.c.h.b16 %v128
    %v798 = vunpack.c.l.b16 %v129
    %v799 = vunpack.c.h.b16 %v129
    %v800 = vunpack.c.l.b16 %v130
    %v801 = vunpack.c.h.b16 %v130
    %v802 = vunpack.c.l.b16 %v131
    %v803 = vunpack.c.h.b16 %v131
    %v804 = vunpack.c.l.b16 %v132
    %v805 = vunpack.c.h.b16 %v132
    %v806 = vunpack.c.l.b16 %v133
    %v807 = vunpack.c.h.b16 %v133
    %v808 = vunpack.c.l.b16 %v134
    %v809 = vunpack.c.h.b16 %v134
    %v810 = vunpack.c.l.b16 %v135
    %v811 = vunpack.c.h.b16 %v135
    %v812 = vunpack.c.l.b16 %v136
    %v813 = vunpack.c.h.b16 %v136
    %v814 = vunpack.c.l.b16 %v137
    %v815 = vunpack.c.h.b16 %v137
    %v816 = vunpack.c.l.b16 %v138
    %v817 = vunpack.c.h.b16 %v138
    %v818 = vunpack.c.l.b16 %v139
    %v819 = vunpack.c.h.b16 %v139
    %v820 = vunpack.c.l.b16 %v140
    %v821 = vunpack.c.h.b16 %v140
    %v822 = vunpack.c.l.b16 %v141
    %v823 = vunpack.c.h.b16 %v141
    %v824 = vunpack.c.l.b16 %v142
    %v825 = vunpack.c.h.b16 %v142
    %v826 = vunpack.c.l.b16 %v143
    %v827 = vunpack.c.h.b16 %v143
    %v828 = vunpack.c.l.b16 %v144
    %v829 = vunpack.c.h.b16 %v144
    %v830 = vunpack.c.l.b16 %v145
    %v831 = vunpack.c.h.b16 %v145
    %v832 = vunpack.c.l.b16 %v146
    %v833 = vunpack.c.h.b16 %v146
    %v834 = vunpack.c.l.b16 %v147
    %v835 = vunpack.c.h.b16 %v147
    %v836 = vunpack.c.l.b16 %v148
    %v837 = vunpack.c.h.b16 %v148
    %v838 = vunpack.c.l.b16 %v149
    %v839 = vunpack.c.h.b16 %v149
    %v840 = vunpack.c.l.b16 %v150
    %v841 = vunpack.c.h.b16 %v150
    %v842 = vunpack.c.l.b16 %v151
    %v843 = vunpack.c.h.b16 %v151
    %v844 = vunpack.c.l.b16 %v152
    %v845 = vunpack.c.h.b16 %v152
    %v846 = vunpack.c.l.b16 %v153
    %v847 = vunpack.c.h.b16 %v153
    %v848 = vunpack.c.l.b16 %v154
    %v849 = vunpack.c.h.b16 %v154
    %v850 = vunpack.c.l.b16 %v155
    %v851 = vunpack.c.h.b16 %v155
    %v852 = vunpack.c.l.b16 %v156
    %v853 = vunpack.c.h.b16 %v156
    %v854 = vunpack.c.l.b16 %v157
    %v855 = vunpack.c.h.b16 %v157
    %v856 = vunpack.c.l.b16 %v158
    %v857 = vunpack.c.h.b16 %v158
    %v858 = vunpack.c.l.b16 %v159
    %v859 = vunpack.c.h.b16 %v159
    %v860 = vunpack.c.l.b16 %v160
    %v861 = vunpack.c.h.b16 %v160
    %v862 = vunpack.c.l.b16 %v161
    %v863 = vunpack.c.h.b16 %v161
    %v864 = vunpack.c.l.b16 %v162
    %v865 = vunpack.c.h.b16 %v162
    %v866 = vunpack.c.l.b16 %v163
    %v867 = vunpack.c.h.b16 %v163
    %v868 = vunpack.c.l.b16 %v164
    %v869 = vunpack.c.h.b16 %v164
    %v870 = vunpack.c.l.b16 %v165
    %v871 = vunpack.c.h.b16 %v165
    %v872 = vunpack.c.l.b16 %v166
    %v873 = vunpack.c.h.b16 %v166
    %v874 = vunpack.c.l.b16 %v167
    %v875 = vunpack.c.h.b16 %v167
    %v876 = vunpack.c.l.b16 %v168
    %v877 = vunpack.c.h.b16 %v168
    %v878 = vunpack.c.l.b16 %v169
    %v879 = vunpack.c.h.b16 %v169
    %v880 = vunpack.c.l.b16 %v170
    %v881 = vunpack.c.h.b16 %v170
    %v882 = vunpack.c.l.b16 %v171
    %v883 = vunpack.c.h.b16 %v171
    %v884 = vunpack.c.l.b16 %v172
    %v885 = vunpack.c.h.b16 %v172
    %v886 = vunpack.c.l.b16 %v173
    %v887 = vunpack.c.h.b16 %v173
    %v888 = vunpack.c.l.b16 %v174
    %v889 = vunpack.c.h.b16 %v174
    %v890 = vunpack.c.l.b16 %v175
    %v891 = vunpack.c.h.b16 %v175
    %v892 = vunpack.c.l.b16 %v176
    %v893 = vunpack.c.h.b16 %v176
    %v894 = vunpack.c.l.b16 %v177
    %v895 = vunpack.c.h.b16 %v177
    %v896 = vunpack.c.l.b16 %v178
    %v897 = vunpack.c.h.b16 %v178
    %v898 = vunpack.c.l.b16 %v179
    %v899 = vunpack.c.h.b16 %v179
    %v900 = vunpack.c.l.b16 %v180
    %v901 = vunpack.c.h.b16 %v180
    %v902 = vunpack.c.l.b16 %v181
    %v903 = vunpack.c.h.b16 %v181
    %v904 = vunpack.c.l.b16 %v182
    %v905 = vunpack.c.h.b16 %v182
    %v906 = vunpack.c.l.b16 %v183
    %v907 = vunpack.c.h.b16 %v183
    %v908 = vunpack.c.l.b16 %v184
    %v909 = vunpack.c.h.b16 %v184
    %v910 = vunpack.c.l.b16 %v185
    %v911 = vunpack.c.h.b16 %v185
    %v912 = vunpack.c.l.b16 %v186
    %v913 = vunpack.c.h.b16 %v186
    %v914 = vunpack.c.l.b16 %v187
    %v915 = vunpack.c.h.b16 %v187
    %v916 = vunpack.c.l.b16 %v188
    %v917 = vunpack.c.h.b16 %v188
    %v918 = vunpack.c.l.b16 %v189
    %v919 = vunpack.c.h.b16 %v189
    %v920 = vunpack.c.l.b16 %v190
    %v921 = vunpack.c.h.b16 %v190
    %v922 = vunpack.c.l.b16 %v191
    %v923 = vunpack.c.h.b16 %v191
    %v924 = vunpack.c.l.b16 %v192
    %v925 = vunpack.c.h.b16 %v192
    %v926 = vunpack.c.l.b16 %v193
    %v927 = vunpack.c.h.b16 %v193
    %v928 = vunpack.c.l.b16 %v194
    %v929 = vunpack.c.h.b16 %v194
    %v930 = vunpack.c.l.b16 %v195
    %v931 = vunpack.c.h.b16 %v195
    %v932 = vunpack.c.l.b16 %v196
    %v933 = vunpack.c.h.b16 %v196
    %v934 = vunpack.c.l.b16 %v197
    %v935 = vunpack.c.h.b16 %v197
    %v936 = vunpack.c.l.b16 %v198
    %v937 = vunpack.c.h.b16 %v198
    %v938 = vunpack.c.l.b16 %v199
    %v939 = vunpack.c.h.b16 %v199
    %v940 = vunpack.c.l.b16 %v200
    %v941 = vunpack.c.h.b16 %v200
    %v942 = vunpack.c.l.b16 %v201
    %v943 = vunpack.c.h.b16 %v201
    %v944 = vunpack.c.l.b16 %v202
    %v945 = vunpack.c.h.b16 %v202
    %v946 = vunpack.c.l.b16 %v203
    %v947 = vunpack.c.h.b16 %v203
    %v948 = vunpack.c.l.b16 %v204
    %v949 = vunpack.c.h.b16 %v204
    %v950 = vunpack.c.l.b16 %v205
    %v951 = vunpack.c.h.b16 %v205
    %v952 = vunpack.c.l.b16 %v206
    %v953 = vunpack.c.h.b16 %v206
    %v954 = vunpack.c.l.b16 %v207
    %v955 = vunpack.c.h.b16 %v207
    %v956 = vunpack.c.l.b16 %v208
    %v957 = vunpack.c.h.b16 %v208
    %v958 = vunpack.c.l.b16 %v209
    %v959 = vunpack.c.h.b16 %v209
    %v960 = vunpack.c.l.b16 %v210
    %v961 = vunpack.c.h.b16 %v210
    %v962 = vunpack.c.l.b16 %v211
    %v963 = vunpack.c.h.b16 %v211
    %v964 = vunpack.c.l.b16 %v212
    %v965 = vunpack.c.h.b16 %v212
    %v966 = vunpack.c.l.b16 %v213
    %v967 = vunpack.c.h.b16 %v213
    %v968 = vunpack.c.l.b16 %v214
    %v969 = vunpack.c.h.b16 %v214
    %v970 = vunpack.c.l.b16 %v215
    %v971 = vunpack.c.h.b16 %v215
    %v972 = vunpack.c.l.b16 %v216
    %v973 = vunpack.c.h.b16 %v216
    %v974 = vunpack.c.l.b16 %v217
    %v975 = vunpack.c.h.b16 %v217
    %v976 = vunpack.c.l.b16 %v218
    %v977 = vunpack.c.h.b16 %v218
    %v978 = vunpack.c.l.b16 %v219
    %v979 = vunpack.c.h.b16 %v219
    %v980 = vunpack.c.l.b16 %v220
    %v981 = vunpack.c.h.b16 %v220
    %v982 = vunpack.c.l.b16 %v221
    %v983 = vunpack.c.h.b16 %v221
    %v984 = vunpack.c.l.b16 %v222
    %v985 = vunpack.c.h.b16 %v222
    %v986 = vunpack.c.l.b16 %v223
    %v987 = vunpack.c.h.b16 %v223
    %v988 = vunpack.c.l.b16 %v224
    %v989 = vunpack.c.h.b16 %v224
    %v990 = vunpack.c.l.b16 %v225
    %v991 = vunpack.c.h.b16 %v225
    %v992 = vunpack.c.l.b16 %v226
    %v993 = vunpack.c.h.b16 %v226
    %v994 = vunpack.c.l.b16 %v227
    %v995 = vunpack.c.h.b16 %v227
    %v996 = vunpack.c.l.b16 %v228
    %v997 = vunpack.c.h.b16 %v228
    %v998 = vunpack.c.l.b16 %v229
    %v999 = vunpack.c.h.b16 %v229
    %v1000 = vunpack.c.l.b16 %v230
    %v1001 = vunpack.c.h.b16 %v230
    %v1002 = vunpack.c.l.b16 %v231
    %v1003 = vunpack.c.h.b16 %v231
    %v1004 = vunpack.c.l.b16 %v232
    %v1005 = vunpack.c.h.b16 %v232
    %v1006 = vunpack.c.l.b16 %v233
    %v1007 = vunpack.c.h.b16 %v233
    %v1008 = vunpack.c.l.b16 %v234
    %v1009 = vunpack.c.h.b16 %v234
    %v1010 = vunpack.c.l.b16 %v235
    %v1011 = vunpack.c.h.b16 %v235
    %v1012 = vunpack.c.l.b16 %v236
    %v1013 = vunpack.c.h.b16 %v236
    %v1014 = vunpack.c.l.b16 %v237
    %v1015 = vunpack.c.h.b16 %v237
    %v1016 = vunpack.c.l.b16 %v238
    %v1017 = vunpack.c.h.b16 %v238
    %v1018 = vunpack.c.l.b16 %v239
    %v1019 = vunpack.c.h.b16 %v239
    %v1020 = vunpack.c.l.b16 %v240
    %v1021 = vunpack.c.h.b16 %v240
    %v1022 = vunpack.c.l.b16 %v241
    %v1023 = vunpack.c.h.b16 %v241
    %v1024 = vunpack.c.l.b16 %v242
    %v1025 = vunpack.c.h.b16 %v242
    %v1026 = vunpack.c.l.b16 %v243
    %v1027 = vunpack.c.h.b16 %v243
    %v1028 = vunpack.c.l.b16 %v244
    %v1029 = vunpack.c.h.b16 %v244
    %v1030 = vunpack.c.l.b16 %v245
    %v1031 = vunpack.c.h.b16 %v245
    %v1032 = vunpack.c.l.b16 %v246
    %v1033 = vunpack.c.h.b16 %v246
    %v1034 = vunpack.c.l.b16 %v247
    %v1035 = vunpack.c.h.b16 %v247
    %v1036 = vunpack.c.l.b16 %v248
    %v1037 = vunpack.c.h.b16 %v248
    %v1038 = vunpack.c.l.b16 %v249
    %v1039 = vunpack.c.h.b16 %v249
    %v1040 = vunpack.c.l.b16 %v250
    %v1041 = vunpack.c.h.b16 %v250
    %v1042 = vunpack.c.l.b16 %v251
    %v1043 = vunpack.c.h.b16 %v251
    %v1044 = vunpack.c.l.b16 %v252
    %v1045 = vunpack.c.h.b16 %v252
    %v1046 = vunpack.c.l.b16 %v253
    %v1047 = vunpack.c.h.b16 %v253
    %v1048 = vunpack.c.l.b16 %v254
    %v1049 = vunpack.c.h.b16 %v254
    %v1050 = vunpack.c.l.b16 %v255
    %v1051 = vunpack.c.h.b16 %v255
    %v1052 = vunpack.c.l.b16 %v256
    %v1053 = vunpack.c.h.b16 %v256
    %v1054 = vunpack.c.l.b16 %v257
    %v1055 = vunpack.c.h.b16 %v257
    %v1056 = vunpack.c.l.b16 %v258
    %v1057 = vunpack.c.h.b16 %v258
    %v1058 = vunpack.c.l.b16 %v259
    %v1059 = vunpack.c.h.b16 %v259
    %v1060 = vunpack.c.l.b16 %v260
    %v1061 = vunpack.c.h.b16 %v260
    %v1062 = vunpack.c.l.b16 %v261
    %v1063 = vunpack.c.h.b16 %v261
    %v1064 = vunpack.c.l.b16 %v262
    %v1065 = vunpack.c.h.b16 %v262
    %v1066 = vunpack.c.l.b16 %v263
    %v1067 = vunpack.c.h.b16 %v263
    %v1068 = vunpack.c.l.b16 %v264
    %v1069 = vunpack.c.h.b16 %v264
    %v1070 = vunpack.c.l.b16 %v265
    %v1071 = vunpack.c.h.b16 %v265
    %v1072 = vunpack.c.l.b16 %v266
    %v1073 = vunpack.c.h.b16 %v266
    %v1074 = vunpack.c.l.b16 %v267
    %v1075 = vunpack.c.h.b16 %v267
    %v1076 = vunpack.c.l.b16 %v268
    %v1077 = vunpack.c.h.b16 %v268
    %v1078 = vunpack.c.l.b16 %v269
    %v1079 = vunpack.c.h.b16 %v269
    %v1080 = vunpack.c.l.b16 %v270
    %v1081 = vunpack.c.h.b16 %v270
    %v1082 = vunpack.c.l.b16 %v271
    %v1083 = vunpack.c.h.b16 %v271
    %v1084 = vunpack.c.l.b16 %v272
    %v1085 = vunpack.c.h.b16 %v272
    %v1086 = vunpack.c.l.b16 %v273
    %v1087 = vunpack.c.h.b16 %v273
    %v1088 = vunpack.c.l.b16 %v274
    %v1089 = vunpack.c.h.b16 %v274
    %v1090 = vunpack.c.l.b16 %v275
    %v1091 = vunpack.c.h.b16 %v275
    %v1092 = vunpack.c.l.b16 %v276
    %v1093 = vunpack.c.h.b16 %v276
    %v1094 = vunpack.c.l.b16 %v277
    %v1095 = vunpack.c.h.b16 %v277
    %v1096 = vunpack.c.l.b16 %v278
    %v1097 = vunpack.c.h.b16 %v278
    %v1098 = vunpack.c.l.b16 %v279
    %v1099 = vunpack.c.h.b16 %v279
    %v1100 = vunpack.c.l.b16 %v280
    %v1101 = vunpack.c.h.b16 %v280
    %v1102 = vunpack.c.l.b16 %v281
    %v1103 = vunpack.c.h.b16 %v281
    %v1104 = vunpack.c.l.b16 %v282
    %v1105 = vunpack.c.h.b16 %v282
    %v1106 = vunpack.c.l.b16 %v283
    %v1107 = vunpack.c.h.b16 %v283
    %v1108 = vunpack.c.l.b16 %v284
    %v1109 = vunpack.c.h.b16 %v284
    %v1110 = vunpack.c.l.b16 %v285
    %v1111 = vunpack.c.h.b16 %v285
    %v1112 = vunpack.c.l.b16 %v286
    %v1113 = vunpack.c.h.b16 %v286
    %v1114 = vunpack.c.l.b16 %v287
    %v1115 = vunpack.c.h.b16 %v287
    %v1116 = vunpack.c.l.b16 %v288
    %v1117 = vunpack.c.h.b16 %v288
    %v1118 = vunpack.c.l.b16 %v289
    %v1119 = vunpack.c.h.b16 %v289
    %v1120 = vunpack.c.l.b16 %v290
    %v1121 = vunpack.c.h.b16 %v290
    %v1122 = vunpack.c.l.b16 %v291
    %v1123 = vunpack.c.h.b16 %v291
    %v1124 = vunpack.c.l.b16 %v292
    %v1125 = vunpack.c.h.b16 %v292
    %v1126 = vunpack.c.l.b16 %v293
    %v1127 = vunpack.c.h.b16 %v293
    %v1128 = vunpack.c.l.b16 %v294
    %v1129 = vunpack.c.h.b16 %v294
    %v1130 = vunpack.c.l.b16 %v295
    %v1131 = vunpack.c.h.b16 %v295
    %v1132 = vunpack.c.l.b16 %v296
    %v1133 = vunpack.c.h.b16 %v296
    %v1134 = vunpack.c.l.b16 %v297
    %v1135 = vunpack.c.h.b16 %v297
    %v1136 = vunpack.c.l.b16 %v298
    %v1137 = vunpack.c.h.b16 %v298
    %v1138 = vunpack.c.l.b16 %v299
    %v1139 = vunpack.c.h.b16 %v299
    %v1140 = vunpack.c.l.b16 %v300
    %v1141 = vunpack.c.h.b16 %v300
    %v1142 = vunpack.c.l.b16 %v301
    %v1143 = vunpack.c.h.b16 %v301
    %v1144 = vunpack.c.l.b16 %v302
    %v1145 = vunpack.c.h.b16 %v302
    %v1146 = vunpack.c.l.b16 %v303
    %v1147 = vunpack.c.h.b16 %v303
    %v1148 = vunpack.c.l.b16 %v304
    %v1149 = vunpack.c.h.b16 %v304
    %v1150 = vunpack.c.l.b16 %v305
    %v1151 = vunpack.c.h.b16 %v305
    %v1152 = vunpack.c.l.b16 %v306
    %v1153 = vunpack.c.h.b16 %v306
    %v1154 = vunpack.c.l.b16 %v307
    %v1155 = vunpack.c.h.b16 %v307
    %v1156 = vunpack.c.l.b16 %v308
    %v1157 = vunpack.c.h.b16 %v308
    %v1158 = vunpack.c.l.b16 %v309
    %v1159 = vunpack.c.h.b16 %v309
    %v1160 = vunpack.c.l.b16 %v310
    %v1161 = vunpack.c.h.b16 %v310
    %v1162 = vunpack.c.l.b16 %v311
    %v1163 = vunpack.c.h.b16 %v311
    %v1164 = vunpack.c.l.b16 %v312
    %v1165 = vunpack.c.h.b16 %v312
    %v1166 = vunpack.c.l.b16 %v313
    %v1167 = vunpack.c.h.b16 %v313
    %v1168 = vunpack.c.l.b16 %v314
    %v1169 = vunpack.c.h.b16 %v314
    %v1170 = vunpack.c.l.b16 %v315
    %v1171 = vunpack.c.h.b16 %v315
    %v1172 = vunpack.c.l.b16 %v316
    %v1173 = vunpack.c.h.b16 %v316
    %v1174 = vunpack.c.l.b16 %v317
    %v1175 = vunpack.c.h.b16 %v317
    %v1176 = vunpack.c.l.b16 %v318
    %v1177 = vunpack.c.h.b16 %v318
    %v1178 = vunpack.c.l.b16 %v319
    %v1179 = vunpack.c.h.b16 %v319
    %v1180 = vunpack.c.l.b16 %v320
    %v1181 = vunpack.c.h.b16 %v320
    %v1182 = vunpack.c.l.b16 %v321
    %v1183 = vunpack.c.h.b16 %v321
    %v1184 = vunpack.c.l.b16 %v322
    %v1185 = vunpack.c.h.b16 %v322
    %v1186 = vunpack.c.l.b16 %v323
    %v1187 = vunpack.c.h.b16 %v323
    %v1188 = vunpack.c.l.b16 %v324
    %v1189 = vunpack.c.h.b16 %v324
    %v1190 = vunpack.c.l.b16 %v325
    %v1191 = vunpack.c.h.b16 %v325
    %v1192 = vunpack.c.l.b16 %v326
    %v1193 = vunpack.c.h.b16 %v326
    %v1194 = vunpack.c.l.b16 %v327
    %v1195 = vunpack.c.h.b16 %v327
    %v1196 = vunpack.c.l.b16 %v328
    %v1197 = vunpack.c.h.b16 %v328
    %v1198 = vunpack.c.l.b16 %v329
    %v1199 = vunpack.c.h.b16 %v329
    %v1200 = vunpack.c.l.b16 %v330
    %v1201 = vunpack.c.h.b16 %v330
    %v1202 = vunpack.c.l.b16 %v331
    %v1203 = vunpack.c.h.b16 %v331
    %v1204 = vunpack.c.l.b16 %v332
    %v1205 = vunpack.c.h.b16 %v332
    %v1206 = vunpack.c.l.b16 %v333
    %v1207 = vunpack.c.h.b16 %v333
    %v1208 = vunpack.c.l.b16 %v334
    %v1209 = vunpack.c.h.b16 %v334
    %v1210 = vunpack.c.l.b16 %v335
    %v1211 = vunpack.c.h.b16 %v335
    %v1212 = vunpack.c.l.b16 %v336
    %v1213 = vunpack.c.h.b16 %v336
    %v1214 = vunpack.c.l.b16 %v337
    %v1215 = vunpack.c.h.b16 %v337
    %v1216 = vunpack.c.l.b16 %v338
    %v1217 = vunpack.c.h.b16 %v338
    %v1218 = vunpack.c.l.b16 %v339
    %v1219 = vunpack.c.h.b16 %v339
    %v1220 = vunpack.c.l.b16 %v340
    %v1221 = vunpack.c.h.b16 %v340
    %v1222 = vunpack.c.l.b16 %v341
    %v1223 = vunpack.c.h.b16 %v341
    %v1224 = vunpack.c.l.b16 %v342
    %v1225 = vunpack.c.h.b16 %v342
    %v1226 = vunpack.c.l.b16 %v343
    %v1227 = vunpack.c.h.b16 %v343
    %v1228 = vunpack.c.l.b16 %v344
    %v1229 = vunpack.c.h.b16 %v344
    %v1230 = vunpack.c.l.b16 %v345
    %v1231 = vunpack.c.h.b16 %v345
    %v1232 = vunpack.c.l.b16 %v346
    %v1233 = vunpack.c.h.b16 %v346
    %v1234 = vunpack.c.l.b16 %v347
    %v1235 = vunpack.c.h.b16 %v347
    %v1236 = vunpack.c.l.b16 %v348
    %v1237 = vunpack.c.h.b16 %v348
    %v1238 = vunpack.c.l.b16 %v349
    %v1239 = vunpack.c.h.b16 %v349
    %v1240 = vunpack.c.l.b16 %v350
    %v1241 = vunpack.c.h.b16 %v350
    %v1242 = vunpack.c.l.b16 %v351
    %v1243 = vunpack.c.h.b16 %v351
    %v1244 = vunpack.c.l.b16 %v352
    %v1245 = vunpack.c.h.b16 %v352
    %v1246 = vunpack.c.l.b16 %v353
    %v1247 = vunpack.c.h.b16 %v353
    %v1248 = vpack.c.b16 %v678, %v672
    %v1249 = vpack.c.b16 %v679, %v673
    %v1250 = vpack.c.b16 %v680, %v674
    %v1251 = vpack.c.b16 %v681, %v675
    %v1252 = vpack.c.b16 %v682, %v676
    %v1253 = vpack.c.b16 %v683, %v677
    %v1254 = vpack.c.b16 %v690, %v684
    %v1255 = vpack.c.b16 %v691, %v685
    %v1256 = vpack.c.b16 %v692, %v686
    %v1257 = vpack.c.b16 %v693, %v687
    %v1258 = vpack.c.b16 %v694, %v688
    %v1259 = vpack.c.b16 %v695, %v689
    %v1260 = vpack.c.b16 %v702, %v696
    %v1261 = vpack.c.b16 %v703, %v697
    %v1262 = vpack.c.b16 %v704, %v698
    %v1263 = vpack.c.b16 %v705, %v699
    %v1264 = vpack.c.b16 %v706, %v700
    %v1265 = vpack.c.b16 %v707, %v701
    %v1266 = vpack.c.b16 %v714, %v708
    %v1267 = vpack.c.b16 %v715, %v709
    %v1268 = vpack.c.b16 %v716, %v710
    %v1269 = vpack.c.b16 %v717, %v711
    %v1270 = vpack.c.b16 %v718, %v712
    %v1271 = vpack.c.b16 %v719, %v713
    %v1272 = vpack.c.b16 %v726, %v720
    %v1273 = vpack.c.b16 %v727, %v721
    %v1274 = vpack.c.b16 %v728, %v722
    %v1275 = vpack.c.b16 %v729, %v723
    %v1276 = vpack.c.b16 %v730, %v724
    %v1277 = vpack.c.b16 %v731, %v725
    %v1278 = vpack.c.b16 %v738, %v732
    %v1279 = vpack.c.b16 %v739, %v733
    %v1280 = vpack.c.b16 %v740, %v734
    %v1281 = vpack.c.b16 %v741, %v735
    %v1282 = vpack.c.b16 %v742, %v736
    %v1283 = vpack.c.b16 %v743, %v737
    %v1284 = vpack.c.b16 %v750, %v744
    %v1285 = vpack.c.b16 %v751, %v745
    %v1286 = vpack.c.b16 %v752, %v746
    %v1287 = vpack.c.b16 %v753, %v747
    %v1288 = vpack.c.b16 %v754, %v748
    %v1289 = vpack.c.b16 %v755, %v749
    %v1290 = vpack.c.b16 %v762, %v756
    %v1291 = vpack.c.b16 %v763, %v757
    %v1292 = vpack.c.b16 %v764, %v758
    %v1293 = vpack.c.b16 %v765, %v759
    %v1294 = vpack.c.b16 %v766, %v760
    %v1295 = vpack.c.b16 %v767, %v761
    %v1296 = vpack.c.b16 %v774, %v768
    %v1297 = vpack.c.b16 %v775, %v769
    %v1298 = vpack.c.b16 %v776, %v770
    %v1299 = vpack.c.b16 %v777, %v771
    %v1300 = vpack.c.b16 %v778, %v772
    %v1301 = vpack.c.b16 %v779, %v773
    %v1302 = vpack.c.b16 %v786, %v780
    %v1303 = vpack.c.b16 %v787, %v781
    %v1304 = vpack.c.b16 %v788, %v782
    %v1305 = vpack.c.b16 %v789, %v783
    %v1306 = vpack.c.b16 %v790, %v784
    %v1307 = vpack.c.b16 %v791, %v785
    %v1308 = vpack.c.b16 %v798, %v792
    %v1309 = vpack.c.b16 %v799, %v793
    %v1310 = vpack.c.b16 %v800, %v794
    %v1311 = vpack.c.b16 %v801, %v795
    %v1312 = vpack.c.b16 %v802, %v796
    %v1313 = vpack.c.b16 %v803, %v797
    %v1314 = vpack.c.b16 %v810, %v804
    %v1315 = vpack.c.b16 %v811, %v805
    %v1316 = vpack.c.b16 %v812, %v806
    %v1317 = vpack.c.b16 %v813, %v807
    %v1318 = vpack.c.b16 %v814, %v808
    %v1319 = vpack.c.b16 %v815, %v809
    %v1320 = vpack.c.b16 %v822, %v816
    %v1321 = vpack.c.b16 %v823, %v817
    %v1322 = vpack.c.b16 %v824, %v818
    %v1323 = vpack.c.b16 %v825, %v819
    %v1324 = vpack.c.b16 %v826, %v820
    %v1325 = vpack.c.b16 %v827, %v821
    %v1326 = vpack.c.b16 %v834, %v828
    %v1327 = vpack.c.b16 %v835, %v829
    %v1328 = vpack.c.b16 %v836, %v830
    %v1329 = vpack.c.b16 %v837, %v831
    %v1330 = vpack.c.b16 %v838, %v832
    %v1331 = vpack.c.b16 %v839, %v833
    %v1332 = vpack.c.b16 %v846, %v840
    %v1333 = vpack.c.b16 %v847, %v841
    %v1334 = vpack.c.b16 %v848, %v842
    %v1335 = vpack.c.b16 %v849, %v843
    %v1336 = vpack.c.b16 %v850, %v844
    %v1337 = vpack.c.b16 %v851, %v845
    %v1338 = vpack.c.b16 %v858, %v852
    %v1339 = vpack.c.b16 %v859, %v853
    %v1340 = vpack.c.b16 %v860, %v854
    %v1341 = vpack.c.b16 %v861, %v855
    %v1342 = vpack.c.b16 %v862, %v856
    %v1343 = vpack.c.b16 %v863, %v857
    %v1344 = vpack.c.b16 %v870, %v864
    %v1345 = vpack.c.b16 %v871, %v865
    %v1346 = vpack.c.b16 %v872, %v866
    %v1347 = vpack.c.b16 %v873, %v867
    %v1348 = vpack.c.b16 %v874, %v868
    %v1349 = vpack.c.b16 %v875, %v869
    %v1350 = vpack.c.b16 %v882, %v876
    %v1351 = vpack.c.b16 %v883, %v877
    %v1352 = vpack.c.b16 %v884, %v878
    %v1353 = vpack.c.b16 %v885, %v879
    %v1354 = vpack.c.b16 %v886, %v880
    %v1355 = vpack.c.b16 %v887, %v881
    %v1356 = vpack.c.b16 %v894, %v888
    %v1357 = vpack.c.b16 %v895, %v889
    %v1358 = vpack.c.b16 %v896, %v890
    %v1359 = vpack.c.b16 %v897, %v891
    %v1360 = vpack.c.b16 %v898, %v892
    %v1361 = vpack.c.b16 %v899, %v893
    %v1362 = vpack.c.b16 %v906, %v900
    %v1363 = vpack.c.b16 %v907, %v901
    %v1364 = vpack.c.b16 %v908, %v902
    %v1365 = vpack.c.b16 %v909, %v903
    %v1366 = vpack.c.b16 %v910, %v904
    %v1367 = vpack.c.b16 %v911, %v905
    %v1368 = vpack.c.b16 %v918, %v912
    %v1369 = vpack.c.b16 %v919, %v913
    %v1370 = vpack.c.b16 %v920, %v914
    %v1371 = vpack.c.b16 %v921, %v915
    %v1372 = vpack.c.b16 %v922, %v916
    %v1373 = vpack.c.b16 %v923, %v917
    %v1374 = vpack.c.b16 %v930, %v924
    %v1375 = vpack.c.b16 %v931, %v925
    %v1376 = vpack.c.b16 %v932, %v926
    %v1377 = vpack.c.b16 %v933, %v927
    %v1378 = vpack.c.b16 %v934, %v928
    %v1379 = vpack.c.b16 %v935, %v929
    %v1380 = vpack.c.b16 %v942, %v936
    %v1381 = vpack.c.b16 %v943, %v937
    %v1382 = vpack.c.b16 %v944, %v938
    %v1383 = vpack.c.b16 %v945, %v939
    %v1384 = vpack.c.b16 %v946, %v940
    %v1385 = vpack.c.b16 %v947, %v941
    %v1386 = vpack.c.b16 %v954, %v948
    %v1387 = vpack.c.b16 %v955, %v949
    %v1388 = vpack.c.b16 %v956, %v950
    %v1389 = vpack.c.b16 %v957, %v951
    %v1390 = vpack.c.b16 %v958, %v952
    %v1391 = vpack.c.b16 %v959, %v953
    %v1392 = vpack.c.b16 %v966, %v960
    %v1393 = vpack.c.b16 %v967, %v961
    %v1394 = vpack.c.b16 %v968, %v962
    %v1395 = vpack.c.b16 %v969, %v963
    %v1396 = vpack.c.b16 %v970, %v964
    %v1397 = vpack.c.b16 %v971, %v965
    %v1398 = vpack.c.b16 %v978, %v972
    %v1399 = vpack.c.b16 %v979, %v973
    %v1400 = vpack.c.b16 %v980, %v974
    %v1401 = vpack.c.b16 %v981, %v975
    %v1402 = vpack.c.b16 %v982, %v976
    %v1403 = vpack.c.b16 %v983, %v977
    %v1404 = vpack.c.b16 %v990, %v984
    %v1405 = vpack.c.b16 %v991, %v985
    %v1406 = vpack.c.b16 %v992, %v986
    %v1407 = vpack.c.b16 %v993, %v987
    %v1408 = vpack.c.b16 %v994, %v988
    %v1409 = vpack.c.b16 %v995, %v989
    %v1410 = vpack.c.b16 %v1002, %v996
    %v1411 = vpack.c.b16 %v1003, %v997
    %v1412 = vpack.c.b16 %v1004, %v998
    %v1413 = vpack.c.b16 %v1005, %v999
    %v1414 = vpack.c.b16 %v1006, %v1000
    %v1415 = vpack.c.b16 %v1007, %v1001
    %v1416 = vpack.c.b16 %v1014, %v1008
    %v1417 = vpack.c.b16 %v1015, %v1009
    %v1418 = vpack.c.b16 %v1016, %v1010
    %v1419 = vpack.c.b16 %v1017, %v1011
    %v1420 = vpack.c.b16 %v1018, %v1012
    %v1421 = vpack.c.b16 %v1019, %v1013
    %v1422 = vpack.c.b16 %v1026, %v1020
    %v1423 = vpack.c.b16 %v1027, %v1021
    %v1424 = vpack.c.b16 %v1028, %v1022
    %v1425 = vpack.c.b16 %v1029, %v1023
    %v1426 = vpack.c.b16 %v1030, %v1024
    %v1427 = vpack.c.b16 %v1031, %v1025
    %v1428 = vpack.c.b16 %v1038, %v1032
    %v1429 = vpack.c.b16 %v1039, %v1033
    %v1430 = vpack.c.b16 %v1040, %v1034
    %v1431 = vpack.c.b16 %v1041, %v1035
    %v1432 = vpack.c.b16 %v1042, %v1036
    %v1433 = vpack.c.b16 %v1043, %v1037
    %v1434 = vpack.c.b16 %v1050, %v1044
    %v1435 = vpack.c.b16 %v1051, %v1045
    %v1436 = vpack.c.b16 %v1052, %v1046
    %v1437 = vpack.c.b16 %v1053, %v1047
    %v1438 = vpack.c.b16 %v1054, %v1048
    %v1439 = vpack.c.b16 %v1055, %v1049
    %v1440 = vpack.c.b16 %v1062, %v1056
    %v1441 = vpack.c.b16 %v1063, %v1057
    %v1442 = vpack.c.b16 %v1064, %v1058
    %v1443 = vpack.c.b16 %v1065, %v1059
    %v1444 = vpack.c.b16 %v1066, %v1060
    %v1445 = vpack.c.b16 %v1067, %v1061
    %v1446 = vpack.c.b16 %v1074, %v1068
    %v1447 = vpack.c.b16 %v1075, %v1069
    %v1448 = vpack.c.b16 %v1076, %v1070
    %v1449 = vpack.c.b16 %v1077, %v1071
    %v1450 = vpack.c.b16 %v1078, %v1072
    %v1451 = vpack.c.b16 %v1079, %v1073
    %v1452 = vpack.c.b16 %v1086, %v1080
    %v1453 = vpack.c.b16 %v1087, %v1081
    %v1454 = vpack.c.b16 %v1088, %v1082
    %v1455 = vpack.c.b16 %v1089, %v1083
    %v1456 = vpack.c.b16 %v1090, %v1084
    %v1457 = vpack.c.b16 %v1091, %v1085
    %v1458 = vpack.c.b16 %v1098, %v1092
    %v1459 = vpack.c.b16 %v1099, %v1093
    %v1460 = vpack.c.b16 %v1100, %v1094
    %v1461 = vpack.c.b16 %v1101, %v1095
    %v1462 = vpack.c.b16 %v1102, %v1096
    %v1463 = vpack.c.b16 %v1103, %v1097
    %v1464 = vpack.c.b16 %v1110, %v1104
    %v1465 = vpack.c.b16 %v1111, %v1105
    %v1466 = vpack.c.b16 %v1112, %v1106
    %v1467 = vpack.c.b16 %v1113, %v1107
    %v1468 = vpack.c.b16 %v1114, %v1108
    %v1469 = vpack.c.b16 %v1115, %v1109
    %v1470 = vpack.c.b16 %v1122, %v1116
    %v1471 = vpack.c.b16 %v1123, %v1117
    %v1472 = vpack.c.b16 %v1124, %v1118
    %v1473 = vpack.c.b16 %v1125, %v1119
    %v1474 = vpack.c.b16 %v1126, %v1120
    %v1475 = vpack.c.b16 %v1127, %v1121
    %v1476 = vpack.c.b16 %v1134, %v1128
    %v1477 = vpack.c.b16 %v1135, %v1129
    %v1478 = vpack.c.b16 %v1136, %v1130
    %v1479 = vpack.c.b16 %v1137, %v1131
    %v1480 = vpack.c.b16 %v1138, %v1132
    %v1481 = vpack.c.b16 %v1139, %v1133
    %v1482 = vpack.c.b16 %v1146, %v1140
    %v1483 = vpack.c.b16 %v1147, %v1141
    %v1484 = vpack.c.b16 %v1148, %v1142
    %v1485 = vpack.c.b16 %v1149, %v1143
    %v1486 = vpack.c.b16 %v1150, %v1144
    %v1487 = vpack.c.b16 %v1151, %v1145
    %v1488 = vpack.c.b16 %v1158, %v1152
    %v1489 = vpack.c.b16 %v1159, %v1153
    %v1490 = vpack.c.b16 %v1160, %v1154
    %v1491 = vpack.c.b16 %v1161, %v1155
    %v1492 = vpack.c.b16 %v1162, %v1156
    %v1493 = vpack.c.b16 %v1163, %v1157
    %v1494 = vpack.c.b16 %v1170, %v1164
    %v1495 = vpack.c.b16 %v1171, %v1165
    %v1496 = vpack.c.b16 %v1172, %v1166
    %v1497 = vpack.c.b16 %v1173, %v1167
    %v1498 = vpack.c.b16 %v1174, %v1168
    %v1499 = vpack.c.b16 %v1175, %v1169
    %v1500 = vpack.c.b16 %v1182, %v1176
    %v1501 = vpack.c.b16 %v1183, %v1177
    %v1502 = vpack.c.b16 %v1184, %v1178
    %v1503 = vpack.c.b16 %v1185, %v1179
    %v1504 = vpack.c.b16 %v1186, %v1180
    %v1505 = vpack.c.b16 %v1187, %v1181
    %v1506 = vpack.c.b16 %v1194, %v1188
    %v1507 = vpack.c.b16 %v1195, %v1189
    %v1508 = vpack.c.b16 %v1196, %v1190
    %v1509 = vpack.c.b16 %v1197, %v1191
    %v1510 = vpack.c.b16 %v1198, %v1192
    %v1511 = vpack.c.b16 %v1199, %v1193
    %v1512 = vpack.c.b16 %v1206, %v1200
    %v1513 = vpack.c.b16 %v1207, %v1201
    %v1514 = vpack.c.b16 %v1208, %v1202
    %v1515 = vpack.c.b16 %v1209, %v1203
    %v1516 = vpack.c.b16 %v1210, %v1204
    %v1517 = vpack.c.b16 %v1211, %v1205
    %v1518 = vpack.c.b16 %v1218, %v1212
    %v1519 = vpack.c.b16 %v1219, %v1213
    %v1520 = vpack.c.b16 %v1220, %v1214
    %v1521 = vpack.c.b16 %v1221, %v1215
    %v1522 = vpack.c.b16 %v1222, %v1216
    %v1523 = vpack.c.b16 %v1223, %v1217
    %v1524 = vpack.c.b16 %v1230, %v1224
    %v1525 = vpack.c.b16 %v1231, %v1225
    %v1526 = vpack.c.b16 %v1232, %v1226
    %v1527 = vpack.c.b16 %v1233, %v1227
    %v1528 = vpack.c.b16 %v1234, %v1228
    %v1529 = vpack.c.b16 %v1235, %v1229
    %v1530 = vpack.c.b16 %v1242, %v1236
    %v1531 = vpack.c.b16 %v1243, %v1237
    %v1532 = vpack.c.b16 %v1244, %v1238
    %v1533 = vpack.c.b16 %v1245, %v1239
    %v1534 = vpack.c.b16 %v1246, %v1240
    %v1535 = vpack.c.b16 %v1247, %v1241
    %1824 = vmatprep.subr.bf16.mxu0 %v1249
    %1825 = vmatpush1.bf16.msra.mxu0 %v1248
    %1826 = vmatprep.subr.bf16.mxu0 %v1255
    %1827 = vmatpush1.bf16.msra.mxu0 %v1254
    %1828 = vmatprep.subr.bf16.mxu0 %v1261
    %1829 = vmatpush1.bf16.msra.mxu0 %v1260
    %1830 = vmatprep.subr.bf16.mxu0 %v1267
    %1831 = vmatpush1.bf16.msra.mxu0 %v1266
    %1832 = vmatprep.subr.bf16.mxu0 %v1273
    %1833 = vmatpush1.bf16.msra.mxu0 %v1272
    %1834 = vmatprep.subr.bf16.mxu0 %v1279
    %1835 = vmatpush1.bf16.msra.mxu0 %v1278
    %1836 = vmatprep.subr.bf16.mxu0 %v1285
    %1837 = vmatpush1.bf16.msra.mxu0 %v1284
    %1838 = vmatprep.subr.bf16.mxu0 %v1291
    %1839 = vmatpush1.bf16.msra.mxu0 %v1290
    %1840 = vmatprep.subr.bf16.mxu0 %v1297
    %1841 = vmatpush1.bf16.msra.mxu0 %v1296
    %1842 = vmatprep.subr.bf16.mxu0 %v1303
    %1843 = vmatpush1.bf16.msra.mxu0 %v1302
    %1844 = vmatprep.subr.bf16.mxu0 %v1309
    %1845 = vmatpush1.bf16.msra.mxu0 %v1308
    %1846 = vmatprep.subr.bf16.mxu0 %v1315
    %1847 = vmatpush1.bf16.msra.mxu0 %v1314
    %1848 = vmatprep.subr.bf16.mxu0 %v1321
    %1849 = vmatpush1.bf16.msra.mxu0 %v1320
    %1850 = vmatprep.subr.bf16.mxu0 %v1327
    %1851 = vmatpush1.bf16.msra.mxu0 %v1326
    %1852 = vmatprep.subr.bf16.mxu0 %v1333
    %1853 = vmatpush1.bf16.msra.mxu0 %v1332
    %1854 = vmatprep.subr.bf16.mxu0 %v1339
    %1855 = vmatpush1.bf16.msra.mxu0 %v1338
    %1856 = vmatprep.mubr.bf16.mxu0 %v373
    %1857 = vmatmul.mubr.bf16.gmra.mrb[0].mxu0 %v372
    %v1858 = vpop.f32.mrb[0].mxu0
    %v1859 = vadd.f32 0.0, %v1858
    %v1860 = vpop.f32.mrb[0].mxu0
    %v1861 = vadd.f32 0.0, %v1860
    %v1862 = vpop.f32.mrb[0].mxu0
    %v1863 = vadd.f32 0.0, %v1862
    %v1864 = vpop.f32.mrb[0].mxu0
    %v1865 = vadd.f32 0.0, %v1864
    %1866 = vdwg.mxu0
    %1867 = vmatprep.subr.bf16.mxu0 %v1345
    %1868 = vmatpush1.bf16.msra.mxu0 %v1344
    %1869 = vmatprep.subr.bf16.mxu0 %v1351
    %1870 = vmatpush1.bf16.msra.mxu0 %v1350
    %1871 = vmatprep.subr.bf16.mxu0 %v1357
    %1872 = vmatpush1.bf16.msra.mxu0 %v1356
    %1873 = vmatprep.subr.bf16.mxu0 %v1363
    %1874 = vmatpush1.bf16.msra.mxu0 %v1362
    %1875 = vmatprep.subr.bf16.mxu0 %v1369
    %1876 = vmatpush1.bf16.msra.mxu0 %v1368
    %1877 = vmatprep.subr.bf16.mxu0 %v1375
    %1878 = vmatpush1.bf16.msra.mxu0 %v1374
    %1879 = vmatprep.subr.bf16.mxu0 %v1381
    %1880 = vmatpush1.bf16.msra.mxu0 %v1380
    %1881 = vmatprep.subr.bf16.mxu0 %v1387
    %1882 = vmatpush1.bf16.msra.mxu0 %v1386
    %1883 = vmatprep.subr.bf16.mxu0 %v1393
    %1884 = vmatpush1.bf16.msra.mxu0 %v1392
    %1885 = vmatprep.subr.bf16.mxu0 %v1399
    %1886 = vmatpush1.bf16.msra.mxu0 %v1398
    %1887 = vmatprep.subr.bf16.mxu0 %v1405
    %1888 = vmatpush1.bf16.msra.mxu0 %v1404
    %1889 = vmatprep.subr.bf16.mxu0 %v1411
    %1890 = vmatpush1.bf16.msra.mxu0 %v1410
    %1891 = vmatprep.subr.bf16.mxu0 %v1417
    %1892 = vmatpush1.bf16.msra.mxu0 %v1416
    %1893 = vmatprep.subr.bf16.mxu0 %v1423
    %1894 = vmatpush1.bf16.msra.mxu0 %v1422
    %1895 = vmatprep.subr.bf16.mxu0 %v1429
    %1896 = vmatpush1.bf16.msra.mxu0 %v1428
    %1897 = vmatprep.subr.bf16.mxu0 %v1435
    %1898 = vmatpush1.bf16.msra.mxu0 %v1434
    %1899 = vmatprep.mubr.bf16.mxu0 %v375
    %1900 = vmatmul.mubr.bf16.gmra.mrb[0].mxu0 %v374
    %v1901 = vpop.f32.mrb[0].mxu0
    %v1902 = vadd.f32 %v1859, %v1901
    %v1903 = vpop.f32.mrb[0].mxu0
    %v1904 = vadd.f32 %v1861, %v1903
    %v1905 = vpop.f32.mrb[0].mxu0
    %v1906 = vadd.f32 %v1863, %v1905
    %v1907 = vpop.f32.mrb[0].mxu0
    %v1908 = vadd.f32 %v1865, %v1907
    %1909 = vdwg.mxu0
    %1910 = vmatprep.subr.bf16.mxu0 %v1441
    %1911 = vmatpush1.bf16.msra.mxu0 %v1440
    %1912 = vmatprep.subr.bf16.mxu0 %v1447
    %1913 = vmatpush1.bf16.msra.mxu0 %v1446
    %1914 = vmatprep.subr.bf16.mxu0 %v1453
    %1915 = vmatpush1.bf16.msra.mxu0 %v1452
    %1916 = vmatprep.subr.bf16.mxu0 %v1459
    %1917 = vmatpush1.bf16.msra.mxu0 %v1458
    %1918 = vmatprep.subr.bf16.mxu0 %v1465
    %1919 = vmatpush1.bf16.msra.mxu0 %v1464
    %1920 = vmatprep.subr.bf16.mxu0 %v1471
    %1921 = vmatpush1.bf16.msra.mxu0 %v1470
    %1922 = vmatprep.subr.bf16.mxu0 %v1477
    %1923 = vmatpush1.bf16.msra.mxu0 %v1476
    %1924 = vmatprep.subr.bf16.mxu0 %v1483
    %1925 = vmatpush1.bf16.msra.mxu0 %v1482
    %1926 = vmatprep.subr.bf16.mxu0 %v1489
    %1927 = vmatpush1.bf16.msra.mxu0 %v1488
    %1928 = vmatprep.subr.bf16.mxu0 %v1495
    %1929 = vmatpush1.bf16.msra.mxu0 %v1494
    %1930 = vmatprep.subr.bf16.mxu0 %v1501
    %1931 = vmatpush1.bf16.msra.mxu0 %v1500
    %1932 = vmatprep.subr.bf16.mxu0 %v1507
    %1933 = vmatpush1.bf16.msra.mxu0 %v1506
    %1934 = vmatprep.subr.bf16.mxu0 %v1513
    %1935 = vmatpush1.bf16.msra.mxu0 %v1512
    %1936 = vmatprep.subr.bf16.mxu0 %v1519
    %1937 = vmatpush1.bf16.msra.mxu0 %v1518
    %1938 = vmatprep.subr.bf16.mxu0 %v1525
    %1939 = vmatpush1.bf16.msra.mxu0 %v1524
    %1940 = vmatprep.subr.bf16.mxu0 %v1531
    %1941 = vmatpush1.bf16.msra.mxu0 %v1530
    %1942 = vmatprep.mubr.bf16.mxu0 %v377
    %1943 = vmatmul.mubr.bf16.gmra.mrb[0].mxu0 %v376
    %v1944 = vpop.f32.mrb[0].mxu0
    %v1945 = vadd.f32 %v1902, %v1944
    %v1946 = vpop.f32.mrb[0].mxu0
    %v1947 = vadd.f32 %v1904, %v1946
    %v1948 = vpop.f32.mrb[0].mxu0
    %v1949 = vadd.f32 %v1906, %v1948
    %v1950 = vpop.f32.mrb[0].mxu0
    %v1951 = vadd.f32 %v1908, %v1950
    %1952 = vdwg.mxu0
    %1953 = vmatprep.subr.bf16.mxu0 %v1251
    %1954 = vmatpush1.bf16.msra.mxu0 %v1250
    %1955 = vmatprep.subr.bf16.mxu0 %v1257
    %1956 = vmatpush1.bf16.msra.mxu0 %v1256
    %1957 = vmatprep.subr.bf16.mxu0 %v1263
    %1958 = vmatpush1.bf16.msra.mxu0 %v1262
    %1959 = vmatprep.subr.bf16.mxu0 %v1269
    %1960 = vmatpush1.bf16.msra.mxu0 %v1268
    %1961 = vmatprep.subr.bf16.mxu0 %v1275
    %1962 = vmatpush1.bf16.msra.mxu0 %v1274
    %1963 = vmatprep.subr.bf16.mxu0 %v1281
    %1964 = vmatpush1.bf16.msra.mxu0 %v1280
    %1965 = vmatprep.subr.bf16.mxu0 %v1287
    %1966 = vmatpush1.bf16.msra.mxu0 %v1286
    %1967 = vmatprep.subr.bf16.mxu0 %v1293
    %1968 = vmatpush1.bf16.msra.mxu0 %v1292
    %1969 = vmatprep.subr.bf16.mxu0 %v1299
    %1970 = vmatpush1.bf16.msra.mxu0 %v1298
    %1971 = vmatprep.subr.bf16.mxu0 %v1305
    %1972 = vmatpush1.bf16.msra.mxu0 %v1304
    %1973 = vmatprep.subr.bf16.mxu0 %v1311
    %1974 = vmatpush1.bf16.msra.mxu0 %v1310
    %1975 = vmatprep.subr.bf16.mxu0 %v1317
    %1976 = vmatpush1.bf16.msra.mxu0 %v1316
    %1977 = vmatprep.subr.bf16.mxu0 %v1323
    %1978 = vmatpush1.bf16.msra.mxu0 %v1322
    %1979 = vmatprep.subr.bf16.mxu0 %v1329
    %1980 = vmatpush1.bf16.msra.mxu0 %v1328
    %1981 = vmatprep.subr.bf16.mxu0 %v1335
    %1982 = vmatpush1.bf16.msra.mxu0 %v1334
    %1983 = vmatprep.subr.bf16.mxu0 %v1341
    %1984 = vmatpush1.bf16.msra.mxu0 %v1340
    %1985 = vmatprep.mubr.bf16.mxu0 %v373
    %1986 = vmatmul.mubr.bf16.gmra.mrb[0].mxu0 %v372
    %v1987 = vpop.f32.mrb[0].mxu0
    %v1988 = vadd.f32 0.0, %v1987
    %v1989 = vpop.f32.mrb[0].mxu0
    %v1990 = vadd.f32 0.0, %v1989
    %v1991 = vpop.f32.mrb[0].mxu0
    %v1992 = vadd.f32 0.0, %v1991
    %v1993 = vpop.f32.mrb[0].mxu0
    %v1994 = vadd.f32 0.0, %v1993
    %1995 = vdwg.mxu0
    %1996 = vmatprep.subr.bf16.mxu0 %v1347
    %1997 = vmatpush1.bf16.msra.mxu0 %v1346
    %1998 = vmatprep.subr.bf16.mxu0 %v1353
    %1999 = vmatpush1.bf16.msra.mxu0 %v1352
    %2000 = vmatprep.subr.bf16.mxu0 %v1359
    %2001 = vmatpush1.bf16.msra.mxu0 %v1358
    %2002 = vmatprep.subr.bf16.mxu0 %v1365
    %2003 = vmatpush1.bf16.msra.mxu0 %v1364
    %2004 = vmatprep.subr.bf16.mxu0 %v1371
    %2005 = vmatpush1.bf16.msra.mxu0 %v1370
    %2006 = vmatprep.subr.bf16.mxu0 %v1377
    %2007 = vmatpush1.bf16.msra.mxu0 %v1376
    %2008 = vmatprep.subr.bf16.mxu0 %v1383
    %2009 = vmatpush1.bf16.msra.mxu0 %v1382
    %2010 = vmatprep.subr.bf16.mxu0 %v1389
    %2011 = vmatpush1.bf16.msra.mxu0 %v1388
    %2012 = vmatprep.subr.bf16.mxu0 %v1395
    %2013 = vmatpush1.bf16.msra.mxu0 %v1394
    %2014 = vmatprep.subr.bf16.mxu0 %v1401
    %2015 = vmatpush1.bf16.msra.mxu0 %v1400
    %2016 = vmatprep.subr.bf16.mxu0 %v1407
    %2017 = vmatpush1.bf16.msra.mxu0 %v1406
    %2018 = vmatprep.subr.bf16.mxu0 %v1413
    %2019 = vmatpush1.bf16.msra.mxu0 %v1412
    %2020 = vmatprep.subr.bf16.mxu0 %v1419
    %2021 = vmatpush1.bf16.msra.mxu0 %v1418
    %2022 = vmatprep.subr.bf16.mxu0 %v1425
    %2023 = vmatpush1.bf16.msra.mxu0 %v1424
    %2024 = vmatprep.subr.bf16.mxu0 %v1431
    %2025 = vmatpush1.bf16.msra.mxu0 %v1430
    %2026 = vmatprep.subr.bf16.mxu0 %v1437
    %2027 = vmatpush1.bf16.msra.mxu0 %v1436
    %2028 = vmatprep.mubr.bf16.mxu0 %v375
    %2029 = vmatmul.mubr.bf16.gmra.mrb[0].mxu0 %v374
    %v2030 = vpop.f32.mrb[0].mxu0
    %v2031 = vadd.f32 %v1988, %v2030
    %v2032 = vpop.f32.mrb[0].mxu0
    %v2033 = vadd.f32 %v1990, %v2032
    %v2034 = vpop.f32.mrb[0].mxu0
    %v2035 = vadd.f32 %v1992, %v2034
    %v2036 = vpop.f32.mrb[0].mxu0
    %v2037 = vadd.f32 %v1994, %v2036
    %2038 = vdwg.mxu0
    %2039 = vmatprep.subr.bf16.mxu0 %v1443
    %2040 = vmatpush1.bf16.msra.mxu0 %v1442
    %2041 = vmatprep.subr.bf16.mxu0 %v1449
    %2042 = vmatpush1.bf16.msra.mxu0 %v1448
    %2043 = vmatprep.subr.bf16.mxu0 %v1455
    %2044 = vmatpush1.bf16.msra.mxu0 %v1454
    %2045 = vmatprep.subr.bf16.mxu0 %v1461
    %2046 = vmatpush1.bf16.msra.mxu0 %v1460
    %2047 = vmatprep.subr.bf16.mxu0 %v1467
    %2048 = vmatpush1.bf16.msra.mxu0 %v1466
    %2049 = vmatprep.subr.bf16.mxu0 %v1473
    %2050 = vmatpush1.bf16.msra.mxu0 %v1472
    %2051 = vmatprep.subr.bf16.mxu0 %v1479
    %2052 = vmatpush1.bf16.msra.mxu0 %v1478
    %2053 = vmatprep.subr.bf16.mxu0 %v1485
    %2054 = vmatpush1.bf16.msra.mxu0 %v1484
    %2055 = vmatprep.subr.bf16.mxu0 %v1491
    %2056 = vmatpush1.bf16.msra.mxu0 %v1490
    %2057 = vmatprep.subr.bf16.mxu0 %v1497
    %2058 = vmatpush1.bf16.msra.mxu0 %v1496
    %2059 = vmatprep.subr.bf16.mxu0 %v1503
    %2060 = vmatpush1.bf16.msra.mxu0 %v1502
    %2061 = vmatprep.subr.bf16.mxu0 %v1509
    %2062 = vmatpush1.bf16.msra.mxu0 %v1508
    %2063 = vmatprep.subr.bf16.mxu0 %v1515
    %2064 = vmatpush1.bf16.msra.mxu0 %v1514
    %2065 = vmatprep.subr.bf16.mxu0 %v1521
    %2066 = vmatpush1.bf16.msra.mxu0 %v1520
    %2067 = vmatprep.subr.bf16.mxu0 %v1527
    %2068 = vmatpush1.bf16.msra.mxu0 %v1526
    %2069 = vmatprep.subr.bf16.mxu0 %v1533
    %2070 = vmatpush1.bf16.msra.mxu0 %v1532
    %2071 = vmatprep.mubr.bf16.mxu0 %v377
    %2072 = vmatmul.mubr.bf16.gmra.mrb[0].mxu0 %v376
    %v2073 = vpop.f32.mrb[0].mxu0
    %v2074 = vadd.f32 %v2031, %v2073
    %v2075 = vpop.f32.mrb[0].mxu0
    %v2076 = vadd.f32 %v2033, %v2075
    %v2077 = vpop.f32.mrb[0].mxu0
    %v2078 = vadd.f32 %v2035, %v2077
    %v2079 = vpop.f32.mrb[0].mxu0
    %v2080 = vadd.f32 %v2037, %v2079
    %2081 = vdwg.mxu0
    %2082 = vmatprep.subr.bf16.mxu0 %v1253
    %2083 = vmatpush1.bf16.msra.mxu0 %v1252
    %2084 = vmatprep.subr.bf16.mxu0 %v1259
    %2085 = vmatpush1.bf16.msra.mxu0 %v1258
    %2086 = vmatprep.subr.bf16.mxu0 %v1265
    %2087 = vmatpush1.bf16.msra.mxu0 %v1264
    %2088 = vmatprep.subr.bf16.mxu0 %v1271
    %2089 = vmatpush1.bf16.msra.mxu0 %v1270
    %2090 = vmatprep.subr.bf16.mxu0 %v1277
    %2091 = vmatpush1.bf16.msra.mxu0 %v1276
    %2092 = vmatprep.subr.bf16.mxu0 %v1283
    %2093 = vmatpush1.bf16.msra.mxu0 %v1282
    %2094 = vmatprep.subr.bf16.mxu0 %v1289
    %2095 = vmatpush1.bf16.msra.mxu0 %v1288
    %2096 = vmatprep.subr.bf16.mxu0 %v1295
    %2097 = vmatpush1.bf16.msra.mxu0 %v1294
    %2098 = vmatprep.subr.bf16.mxu0 %v1301
    %2099 = vmatpush1.bf16.msra.mxu0 %v1300
    %2100 = vmatprep.subr.bf16.mxu0 %v1307
    %2101 = vmatpush1.bf16.msra.mxu0 %v1306
    %2102 = vmatprep.subr.bf16.mxu0 %v1313
    %2103 = vmatpush1.bf16.msra.mxu0 %v1312
    %2104 = vmatprep.subr.bf16.mxu0 %v1319
    %2105 = vmatpush1.bf16.msra.mxu0 %v1318
    %2106 = vmatprep.subr.bf16.mxu0 %v1325
    %2107 = vmatpush1.bf16.msra.mxu0 %v1324
    %2108 = vmatprep.subr.bf16.mxu0 %v1331
    %2109 = vmatpush1.bf16.msra.mxu0 %v1330
    %2110 = vmatprep.subr.bf16.mxu0 %v1337
    %2111 = vmatpush1.bf16.msra.mxu0 %v1336
    %2112 = vmatprep.subr.bf16.mxu0 %v1343
    %2113 = vmatpush1.bf16.msra.mxu0 %v1342
    %2114 = vmatprep.mubr.bf16.mxu0 %v373
    %2115 = vmatmul.mubr.bf16.gmra.mrb[0].mxu0 %v372
    %v2116 = vpop.f32.mrb[0].mxu0
    %v2117 = vadd.f32 0.0, %v2116
    %v2118 = vpop.f32.mrb[0].mxu0
    %v2119 = vadd.f32 0.0, %v2118
    %v2120 = vpop.f32.mrb[0].mxu0
    %v2121 = vadd.f32 0.0, %v2120
    %v2122 = vpop.f32.mrb[0].mxu0
    %v2123 = vadd.f32 0.0, %v2122
    %2124 = vdwg.mxu0
    %2125 = vmatprep.subr.bf16.mxu0 %v1349
    %2126 = vmatpush1.bf16.msra.mxu0 %v1348
    %2127 = vmatprep.subr.bf16.mxu0 %v1355
    %2128 = vmatpush1.bf16.msra.mxu0 %v1354
    %2129 = vmatprep.subr.bf16.mxu0 %v1361
    %2130 = vmatpush1.bf16.msra.mxu0 %v1360
    %2131 = vmatprep.subr.bf16.mxu0 %v1367
    %2132 = vmatpush1.bf16.msra.mxu0 %v1366
    %2133 = vmatprep.subr.bf16.mxu0 %v1373
    %2134 = vmatpush1.bf16.msra.mxu0 %v1372
    %2135 = vmatprep.subr.bf16.mxu0 %v1379
    %2136 = vmatpush1.bf16.msra.mxu0 %v1378
    %2137 = vmatprep.subr.bf16.mxu0 %v1385
    %2138 = vmatpush1.bf16.msra.mxu0 %v1384
    %2139 = vmatprep.subr.bf16.mxu0 %v1391
    %2140 = vmatpush1.bf16.msra.mxu0 %v1390
    %2141 = vmatprep.subr.bf16.mxu0 %v1397
    %2142 = vmatpush1.bf16.msra.mxu0 %v1396
    %2143 = vmatprep.subr.bf16.mxu0 %v1403
    %2144 = vmatpush1.bf16.msra.mxu0 %v1402
    %2145 = vmatprep.subr.bf16.mxu0 %v1409
    %2146 = vmatpush1.bf16.msra.mxu0 %v1408
    %2147 = vmatprep.subr.bf16.mxu0 %v1415
    %2148 = vmatpush1.bf16.msra.mxu0 %v1414
    %2149 = vmatprep.subr.bf16.mxu0 %v1421
    %2150 = vmatpush1.bf16.msra.mxu0 %v1420
    %2151 = vmatprep.subr.bf16.mxu0 %v1427
    %2152 = vmatpush1.bf16.msra.mxu0 %v1426
    %2153 = vmatprep.subr.bf16.mxu0 %v1433
    %2154 = vmatpush1.bf16.msra.mxu0 %v1432
    %2155 = vmatprep.subr.bf16.mxu0 %v1439
    %2156 = vmatpush1.bf16.msra.mxu0 %v1438
    %2157 = vmatprep.mubr.bf16.mxu0 %v375
    %2158 = vmatmul.mubr.bf16.gmra.mrb[0].mxu0 %v374
    %v2159 = vpop.f32.mrb[0].mxu0
    %v2160 = vadd.f32 %v2117, %v2159
    %v2161 = vpop.f32.mrb[0].mxu0
    %v2162 = vadd.f32 %v2119, %v2161
    %v2163 = vpop.f32.mrb[0].mxu0
    %v2164 = vadd.f32 %v2121, %v2163
    %v2165 = vpop.f32.mrb[0].mxu0
    %v2166 = vadd.f32 %v2123, %v2165
    %2167 = vdwg.mxu0
    %2168 = vmatprep.subr.bf16.mxu0 %v1445
    %2169 = vmatpush1.bf16.msra.mxu0 %v1444
    %2170 = vmatprep.subr.bf16.mxu0 %v1451
    %2171 = vmatpush1.bf16.msra.mxu0 %v1450
    %2172 = vmatprep.subr.bf16.mxu0 %v1457
    %2173 = vmatpush1.bf16.msra.mxu0 %v1456
    %2174 = vmatprep.subr.bf16.mxu0 %v1463
    %2175 = vmatpush1.bf16.msra.mxu0 %v1462
    %2176 = vmatprep.subr.bf16.mxu0 %v1469
    %2177 = vmatpush1.bf16.msra.mxu0 %v1468
    %2178 = vmatprep.subr.bf16.mxu0 %v1475
    %2179 = vmatpush1.bf16.msra.mxu0 %v1474
    %2180 = vmatprep.subr.bf16.mxu0 %v1481
    %2181 = vmatpush1.bf16.msra.mxu0 %v1480
    %2182 = vmatprep.subr.bf16.mxu0 %v1487
    %2183 = vmatpush1.bf16.msra.mxu0 %v1486
    %2184 = vmatprep.subr.bf16.mxu0 %v1493
    %2185 = vmatpush1.bf16.msra.mxu0 %v1492
    %2186 = vmatprep.subr.bf16.mxu0 %v1499
    %2187 = vmatpush1.bf16.msra.mxu0 %v1498
    %2188 = vmatprep.subr.bf16.mxu0 %v1505
    %2189 = vmatpush1.bf16.msra.mxu0 %v1504
    %2190 = vmatprep.subr.bf16.mxu0 %v1511
    %2191 = vmatpush1.bf16.msra.mxu0 %v1510
    %2192 = vmatprep.subr.bf16.mxu0 %v1517
    %2193 = vmatpush1.bf16.msra.mxu0 %v1516
    %2194 = vmatprep.subr.bf16.mxu0 %v1523
    %2195 = vmatpush1.bf16.msra.mxu0 %v1522
    %2196 = vmatprep.subr.bf16.mxu0 %v1529
    %2197 = vmatpush1.bf16.msra.mxu0 %v1528
    %2198 = vmatprep.subr.bf16.mxu0 %v1535
    %2199 = vmatpush1.bf16.msra.mxu0 %v1534
    %2200 = vmatprep.mubr.bf16.mxu0 %v377
    %2201 = vmatmul.mubr.bf16.gmra.mrb[0].mxu0 %v376
    %v2202 = vpop.f32.mrb[0].mxu0
    %v2203 = vadd.f32 %v2160, %v2202
    %v2204 = vpop.f32.mrb[0].mxu0
    %v2205 = vadd.f32 %v2162, %v2204
    %v2206 = vpop.f32.mrb[0].mxu0
    %v2207 = vadd.f32 %v2164, %v2206
    %v2208 = vpop.f32.mrb[0].mxu0
    %v2209 = vadd.f32 %v2166, %v2208
    %2210 = vdwg.mxu0
    %2211 = vst [vmem:[#allocation8] sm:$0xff] %v1945
    %2212 = vst [vmem:[#allocation8 + $0x8] sm:$0xff] %v1947
    %2213 = vst [vmem:[#allocation8 + $0x10] sm:$0xff] %v2074
    %2214 = vst [vmem:[#allocation8 + $0x18] sm:$0xff] %v2076
    %2215 = vst [vmem:[#allocation8 + $0x20] sm:$0xff] %v2203
    %2216 = vst [vmem:[#allocation8 + $0x28] sm:$0xff] %v2205
    %2217 = vst [vmem:[#allocation8 + $0x30] sm:$0xff] %v1949
    %2218 = vst [vmem:[#allocation8 + $0x38] sm:$0xff] %v1951
    %2219 = vst [vmem:[#allocation8 + $0x40] sm:$0xff] %v2078
    %2220 = vst [vmem:[#allocation8 + $0x48] sm:$0xff] %v2080
    %2221 = vst [vmem:[#allocation8 + $0x50] sm:$0xff] %v2207
    %2222 = vst [vmem:[#allocation8 + $0x58] sm:$0xff] %v2209
    %v2223 = vld [vmem:[#allocation5] sm:$0xff]
    %v2224 = vld [vmem:[#allocation5 + $0x8] sm:$0xff]
    %v2225 = vld [vmem:[#allocation5 + $0x10] sm:$0xff]
    %v2226 = vld [vmem:[#allocation5 + $0x18] sm:$0xff]
    %v2227 = vld [vmem:[#allocation5 + $0x20] sm:$0xff]
    %v2228 = vld [vmem:[#allocation5 + $0x28] sm:$0xff]
    %v2229 = vld [vmem:[#allocation7] sm:$0xff]
    %v2230 = vld [vmem:[#allocation7 + $0x8] sm:$0xff]
    %v2231 = vld [vmem:[#allocation7 + $0x10] sm:$0xff]
    %v2232 = vld [vmem:[#allocation7 + $0x18] sm:$0xff]
    %v2233 = vld [vmem:[#allocation7 + $0x20] sm:$0xff]
    %v2234 = vld [vmem:[#allocation7 + $0x28] sm:$0xff]
    %v2235 = vld [vmem:[#allocation7 + $0x30] sm:$0xff]
    %v2236 = vld [vmem:[#allocation7 + $0x38] sm:$0xff]
    %v2237 = vld [vmem:[#allocation7 + $0x40] sm:$0xff]
    %v2238 = vld [vmem:[#allocation7 + $0x48] sm:$0xff]
    %v2239 = vld [vmem:[#allocation7 + $0x50] sm:$0xff]
    %v2240 = vld [vmem:[#allocation7 + $0x58] sm:$0xff]
    %v2241 = vld [vmem:[#allocation7 + $0x60] sm:$0xff]
    %v2242 = vld [vmem:[#allocation7 + $0x68] sm:$0xff]
    %v2243 = vld [vmem:[#allocation7 + $0x70] sm:$0xff]
    %v2244 = vld [vmem:[#allocation7 + $0x78] sm:$0xff]
    %v2245 = vld [vmem:[#allocation7 + $0x80] sm:$0xff]
    %v2246 = vld [vmem:[#allocation7 + $0x88] sm:$0xff]
    %v2247 = vld [vmem:[#allocation7 + $0x90] sm:$0xff]
    %v2248 = vld [vmem:[#allocation7 + $0x98] sm:$0xff]
    %v2249 = vld [vmem:[#allocation7 + $0xa0] sm:$0xff]
    %v2250 = vld [vmem:[#allocation7 + $0xa8] sm:$0xff]
    %v2251 = vld [vmem:[#allocation7 + $0xb0] sm:$0xff]
    %v2252 = vld [vmem:[#allocation7 + $0xb8] sm:$0xff]
    %v2253 = vld [vmem:[#allocation7 + $0xc0] sm:$0xff]
    %v2254 = vld [vmem:[#allocation7 + $0xc8] sm:$0xff]
    %v2255 = vld [vmem:[#allocation7 + $0xd0] sm:$0xff]
    %v2256 = vld [vmem:[#allocation7 + $0xd8] sm:$0xff]
    %v2257 = vld [vmem:[#allocation7 + $0xe0] sm:$0xff]
    %v2258 = vld [vmem:[#allocation7 + $0xe8] sm:$0xff]
    %v2259 = vld [vmem:[#allocation7 + $0xf0] sm:$0xff]
    %v2260 = vld [vmem:[#allocation7 + $0xf8] sm:$0xff]
    %v2261 = vld [vmem:[#allocation7 + $0x100] sm:$0xff]
    %v2262 = vld [vmem:[#allocation7 + $0x108] sm:$0xff]
    %v2263 = vld [vmem:[#allocation7 + $0x110] sm:$0xff]
    %v2264 = vld [vmem:[#allocation7 + $0x118] sm:$0xff]
    %v2265 = vld [vmem:[#allocation7 + $0x120] sm:$0xff]
    %v2266 = vld [vmem:[#allocation7 + $0x128] sm:$0xff]
    %v2267 = vld [vmem:[#allocation7 + $0x130] sm:$0xff]
    %v2268 = vld [vmem:[#allocation7 + $0x138] sm:$0xff]
    %v2269 = vld [vmem:[#allocation7 + $0x140] sm:$0xff]
    %v2270 = vld [vmem:[#allocation7 + $0x148] sm:$0xff]
    %v2271 = vld [vmem:[#allocation7 + $0x150] sm:$0xff]
    %v2272 = vld [vmem:[#allocation7 + $0x158] sm:$0xff]
    %v2273 = vld [vmem:[#allocation7 + $0x160] sm:$0xff]
    %v2274 = vld [vmem:[#allocation7 + $0x168] sm:$0xff]
    %v2275 = vld [vmem:[#allocation7 + $0x170] sm:$0xff]
    %v2276 = vld [vmem:[#allocation7 + $0x178] sm:$0xff]
    %v2277 = vld [vmem:[#allocation7 + $0x180] sm:$0xff]
    %v2278 = vld [vmem:[#allocation7 + $0x188] sm:$0xff]
    %v2279 = vld [vmem:[#allocation7 + $0x190] sm:$0xff]
    %v2280 = vld [vmem:[#allocation7 + $0x198] sm:$0xff]
    %v2281 = vld [vmem:[#allocation7 + $0x1a0] sm:$0xff]
    %v2282 = vld [vmem:[#allocation7 + $0x1a8] sm:$0xff]
    %v2283 = vld [vmem:[#allocation7 + $0x1b0] sm:$0xff]
    %v2284 = vld [vmem:[#allocation7 + $0x1b8] sm:$0xff]
    %v2285 = vld [vmem:[#allocation7 + $0x1c0] sm:$0xff]
    %v2286 = vld [vmem:[#allocation7 + $0x1c8] sm:$0xff]
    %v2287 = vld [vmem:[#allocation7 + $0x1d0] sm:$0xff]
    %v2288 = vld [vmem:[#allocation7 + $0x1d8] sm:$0xff]
    %v2289 = vld [vmem:[#allocation7 + $0x1e0] sm:$0xff]
    %v2290 = vld [vmem:[#allocation7 + $0x1e8] sm:$0xff]
    %v2291 = vld [vmem:[#allocation7 + $0x1f0] sm:$0xff]
    %v2292 = vld [vmem:[#allocation7 + $0x1f8] sm:$0xff]
    %v2293 = vld [vmem:[#allocation7 + $0x200] sm:$0xff]
    %v2294 = vld [vmem:[#allocation7 + $0x208] sm:$0xff]
    %v2295 = vld [vmem:[#allocation7 + $0x210] sm:$0xff]
    %v2296 = vld [vmem:[#allocation7 + $0x218] sm:$0xff]
    %v2297 = vld [vmem:[#allocation7 + $0x220] sm:$0xff]
    %v2298 = vld [vmem:[#allocation7 + $0x228] sm:$0xff]
    %v2299 = vld [vmem:[#allocation7 + $0x230] sm:$0xff]
    %v2300 = vld [vmem:[#allocation7 + $0x238] sm:$0xff]
    %v2301 = vld [vmem:[#allocation7 + $0x240] sm:$0xff]
    %v2302 = vld [vmem:[#allocation7 + $0x248] sm:$0xff]
    %v2303 = vld [vmem:[#allocation7 + $0x250] sm:$0xff]
    %v2304 = vld [vmem:[#allocation7 + $0x258] sm:$0xff]
    %v2305 = vld [vmem:[#allocation7 + $0x260] sm:$0xff]
    %v2306 = vld [vmem:[#allocation7 + $0x268] sm:$0xff]
    %v2307 = vld [vmem:[#allocation7 + $0x270] sm:$0xff]
    %v2308 = vld [vmem:[#allocation7 + $0x278] sm:$0xff]
    %v2309 = vld [vmem:[#allocation7 + $0x280] sm:$0xff]
    %v2310 = vld [vmem:[#allocation7 + $0x288] sm:$0xff]
    %v2311 = vld [vmem:[#allocation7 + $0x290] sm:$0xff]
    %v2312 = vld [vmem:[#allocation7 + $0x298] sm:$0xff]
    %v2313 = vld [vmem:[#allocation7 + $0x2a0] sm:$0xff]
    %v2314 = vld [vmem:[#allocation7 + $0x2a8] sm:$0xff]
    %v2315 = vld [vmem:[#allocation7 + $0x2b0] sm:$0xff]
    %v2316 = vld [vmem:[#allocation7 + $0x2b8] sm:$0xff]
    %v2317 = vld [vmem:[#allocation7 + $0x2c0] sm:$0xff]
    %v2318 = vld [vmem:[#allocation7 + $0x2c8] sm:$0xff]
    %v2319 = vld [vmem:[#allocation7 + $0x2d0] sm:$0xff]
    %v2320 = vld [vmem:[#allocation7 + $0x2d8] sm:$0xff]
    %v2321 = vld [vmem:[#allocation7 + $0x2e0] sm:$0xff]
    %v2322 = vld [vmem:[#allocation7 + $0x2e8] sm:$0xff]
    %v2323 = vld [vmem:[#allocation7 + $0x2f0] sm:$0xff]
    %v2324 = vld [vmem:[#allocation7 + $0x2f8] sm:$0xff]
    %v2325 = vld [vmem:[#allocation7 + $0x300] sm:$0xff]
    %v2326 = vld [vmem:[#allocation7 + $0x308] sm:$0xff]
    %v2327 = vld [vmem:[#allocation7 + $0x310] sm:$0xff]
    %v2328 = vld [vmem:[#allocation7 + $0x318] sm:$0xff]
    %v2329 = vld [vmem:[#allocation7 + $0x320] sm:$0xff]
    %v2330 = vld [vmem:[#allocation7 + $0x328] sm:$0xff]
    %v2331 = vld [vmem:[#allocation7 + $0x330] sm:$0xff]
    %v2332 = vld [vmem:[#allocation7 + $0x338] sm:$0xff]
    %v2333 = vld [vmem:[#allocation7 + $0x340] sm:$0xff]
    %v2334 = vld [vmem:[#allocation7 + $0x348] sm:$0xff]
    %v2335 = vld [vmem:[#allocation7 + $0x350] sm:$0xff]
    %v2336 = vld [vmem:[#allocation7 + $0x358] sm:$0xff]
    %v2337 = vld [vmem:[#allocation7 + $0x360] sm:$0xff]
    %v2338 = vld [vmem:[#allocation7 + $0x368] sm:$0xff]
    %v2339 = vld [vmem:[#allocation7 + $0x370] sm:$0xff]
    %v2340 = vld [vmem:[#allocation7 + $0x378] sm:$0xff]
    %v2341 = vld [vmem:[#allocation7 + $0x380] sm:$0xff]
    %v2342 = vld [vmem:[#allocation7 + $0x388] sm:$0xff]
    %v2343 = vld [vmem:[#allocation7 + $0x390] sm:$0xff]
    %v2344 = vld [vmem:[#allocation7 + $0x398] sm:$0xff]
    %v2345 = vld [vmem:[#allocation7 + $0x3a0] sm:$0xff]
    %v2346 = vld [vmem:[#allocation7 + $0x3a8] sm:$0xff]
    %v2347 = vld [vmem:[#allocation7 + $0x3b0] sm:$0xff]
    %v2348 = vld [vmem:[#allocation7 + $0x3b8] sm:$0xff]
    %v2349 = vld [vmem:[#allocation7 + $0x3c0] sm:$0xff]
    %v2350 = vld [vmem:[#allocation7 + $0x3c8] sm:$0xff]
    %v2351 = vld [vmem:[#allocation7 + $0x3d0] sm:$0xff]
    %v2352 = vld [vmem:[#allocation7 + $0x3d8] sm:$0xff]
    %v2353 = vld [vmem:[#allocation7 + $0x3e0] sm:$0xff]
    %v2354 = vld [vmem:[#allocation7 + $0x3e8] sm:$0xff]
    %v2355 = vld [vmem:[#allocation7 + $0x3f0] sm:$0xff]
    %v2356 = vld [vmem:[#allocation7 + $0x3f8] sm:$0xff]
    %v2357 = vld [vmem:[#allocation7 + $0x400] sm:$0xff]
    %v2358 = vld [vmem:[#allocation7 + $0x408] sm:$0xff]
    %v2359 = vld [vmem:[#allocation7 + $0x410] sm:$0xff]
    %v2360 = vld [vmem:[#allocation7 + $0x418] sm:$0xff]
    %v2361 = vld [vmem:[#allocation7 + $0x420] sm:$0xff]
    %v2362 = vld [vmem:[#allocation7 + $0x428] sm:$0xff]
    %v2363 = vld [vmem:[#allocation7 + $0x430] sm:$0xff]
    %v2364 = vld [vmem:[#allocation7 + $0x438] sm:$0xff]
    %v2365 = vld [vmem:[#allocation7 + $0x440] sm:$0xff]
    %v2366 = vld [vmem:[#allocation7 + $0x448] sm:$0xff]
    %v2367 = vld [vmem:[#allocation7 + $0x450] sm:$0xff]
    %v2368 = vld [vmem:[#allocation7 + $0x458] sm:$0xff]
    %v2369 = vld [vmem:[#allocation7 + $0x460] sm:$0xff]
    %v2370 = vld [vmem:[#allocation7 + $0x468] sm:$0xff]
    %v2371 = vld [vmem:[#allocation7 + $0x470] sm:$0xff]
    %v2372 = vld [vmem:[#allocation7 + $0x478] sm:$0xff]
    %v2373 = vld [vmem:[#allocation7 + $0x480] sm:$0xff]
    %v2374 = vld [vmem:[#allocation7 + $0x488] sm:$0xff]
    %v2375 = vld [vmem:[#allocation7 + $0x490] sm:$0xff]
    %v2376 = vld [vmem:[#allocation7 + $0x498] sm:$0xff]
    %v2377 = vld [vmem:[#allocation7 + $0x4a0] sm:$0xff]
    %v2378 = vld [vmem:[#allocation7 + $0x4a8] sm:$0xff]
    %v2379 = vld [vmem:[#allocation7 + $0x4b0] sm:$0xff]
    %v2380 = vld [vmem:[#allocation7 + $0x4b8] sm:$0xff]
    %v2381 = vld [vmem:[#allocation7 + $0x4c0] sm:$0xff]
    %v2382 = vld [vmem:[#allocation7 + $0x4c8] sm:$0xff]
    %v2383 = vld [vmem:[#allocation7 + $0x4d0] sm:$0xff]
    %v2384 = vld [vmem:[#allocation7 + $0x4d8] sm:$0xff]
    %v2385 = vld [vmem:[#allocation7 + $0x4e0] sm:$0xff]
    %v2386 = vld [vmem:[#allocation7 + $0x4e8] sm:$0xff]
    %v2387 = vld [vmem:[#allocation7 + $0x4f0] sm:$0xff]
    %v2388 = vld [vmem:[#allocation7 + $0x4f8] sm:$0xff]
    %v2389 = vld [vmem:[#allocation7 + $0x500] sm:$0xff]
    %v2390 = vld [vmem:[#allocation7 + $0x508] sm:$0xff]
    %v2391 = vld [vmem:[#allocation7 + $0x510] sm:$0xff]
    %v2392 = vld [vmem:[#allocation7 + $0x518] sm:$0xff]
    %v2393 = vld [vmem:[#allocation7 + $0x520] sm:$0xff]
    %v2394 = vld [vmem:[#allocation7 + $0x528] sm:$0xff]
    %v2395 = vld [vmem:[#allocation7 + $0x530] sm:$0xff]
    %v2396 = vld [vmem:[#allocation7 + $0x538] sm:$0xff]
    %v2397 = vld [vmem:[#allocation7 + $0x540] sm:$0xff]
    %v2398 = vld [vmem:[#allocation7 + $0x548] sm:$0xff]
    %v2399 = vld [vmem:[#allocation7 + $0x550] sm:$0xff]
    %v2400 = vld [vmem:[#allocation7 + $0x558] sm:$0xff]
    %v2401 = vld [vmem:[#allocation7 + $0x560] sm:$0xff]
    %v2402 = vld [vmem:[#allocation7 + $0x568] sm:$0xff]
    %v2403 = vld [vmem:[#allocation7 + $0x570] sm:$0xff]
    %v2404 = vld [vmem:[#allocation7 + $0x578] sm:$0xff]
    %v2405 = vld [vmem:[#allocation7 + $0x580] sm:$0xff]
    %v2406 = vld [vmem:[#allocation7 + $0x588] sm:$0xff]
    %v2407 = vld [vmem:[#allocation7 + $0x590] sm:$0xff]
    %v2408 = vld [vmem:[#allocation7 + $0x598] sm:$0xff]
    %v2409 = vld [vmem:[#allocation7 + $0x5a0] sm:$0xff]
    %v2410 = vld [vmem:[#allocation7 + $0x5a8] sm:$0xff]
    %v2411 = vld [vmem:[#allocation7 + $0x5b0] sm:$0xff]
    %v2412 = vld [vmem:[#allocation7 + $0x5b8] sm:$0xff]
    %v2413 = vld [vmem:[#allocation7 + $0x5c0] sm:$0xff]
    %v2414 = vld [vmem:[#allocation7 + $0x5c8] sm:$0xff]
    %v2415 = vld [vmem:[#allocation7 + $0x5d0] sm:$0xff]
    %v2416 = vld [vmem:[#allocation7 + $0x5d8] sm:$0xff]
    %v2417 = vld [vmem:[#allocation7 + $0x5e0] sm:$0xff]
    %v2418 = vld [vmem:[#allocation7 + $0x5e8] sm:$0xff]
    %v2419 = vld [vmem:[#allocation7 + $0x5f0] sm:$0xff]
    %v2420 = vld [vmem:[#allocation7 + $0x5f8] sm:$0xff]
    %v2421 = vld [vmem:[#allocation7 + $0x600] sm:$0xff]
    %v2422 = vld [vmem:[#allocation7 + $0x608] sm:$0xff]
    %v2423 = vld [vmem:[#allocation7 + $0x610] sm:$0xff]
    %v2424 = vld [vmem:[#allocation7 + $0x618] sm:$0xff]
    %v2425 = vld [vmem:[#allocation7 + $0x620] sm:$0xff]
    %v2426 = vld [vmem:[#allocation7 + $0x628] sm:$0xff]
    %v2427 = vld [vmem:[#allocation7 + $0x630] sm:$0xff]
    %v2428 = vld [vmem:[#allocation7 + $0x638] sm:$0xff]
    %v2429 = vld [vmem:[#allocation7 + $0x640] sm:$0xff]
    %v2430 = vld [vmem:[#allocation7 + $0x648] sm:$0xff]
    %v2431 = vld [vmem:[#allocation7 + $0x650] sm:$0xff]
    %v2432 = vld [vmem:[#allocation7 + $0x658] sm:$0xff]
    %v2433 = vld [vmem:[#allocation7 + $0x660] sm:$0xff]
    %v2434 = vld [vmem:[#allocation7 + $0x668] sm:$0xff]
    %v2435 = vld [vmem:[#allocation7 + $0x670] sm:$0xff]
    %v2436 = vld [vmem:[#allocation7 + $0x678] sm:$0xff]
    %v2437 = vld [vmem:[#allocation7 + $0x680] sm:$0xff]
    %v2438 = vld [vmem:[#allocation7 + $0x688] sm:$0xff]
    %v2439 = vld [vmem:[#allocation7 + $0x690] sm:$0xff]
    %v2440 = vld [vmem:[#allocation7 + $0x698] sm:$0xff]
    %v2441 = vld [vmem:[#allocation7 + $0x6a0] sm:$0xff]
    %v2442 = vld [vmem:[#allocation7 + $0x6a8] sm:$0xff]
    %v2443 = vld [vmem:[#allocation7 + $0x6b0] sm:$0xff]
    %v2444 = vld [vmem:[#allocation7 + $0x6b8] sm:$0xff]
    %v2445 = vld [vmem:[#allocation7 + $0x6c0] sm:$0xff]
    %v2446 = vld [vmem:[#allocation7 + $0x6c8] sm:$0xff]
    %v2447 = vld [vmem:[#allocation7 + $0x6d0] sm:$0xff]
    %v2448 = vld [vmem:[#allocation7 + $0x6d8] sm:$0xff]
    %v2449 = vld [vmem:[#allocation7 + $0x6e0] sm:$0xff]
    %v2450 = vld [vmem:[#allocation7 + $0x6e8] sm:$0xff]
    %v2451 = vld [vmem:[#allocation7 + $0x6f0] sm:$0xff]
    %v2452 = vld [vmem:[#allocation7 + $0x6f8] sm:$0xff]
    %v2453 = vld [vmem:[#allocation7 + $0x700] sm:$0xff]
    %v2454 = vld [vmem:[#allocation7 + $0x708] sm:$0xff]
    %v2455 = vld [vmem:[#allocation7 + $0x710] sm:$0xff]
    %v2456 = vld [vmem:[#allocation7 + $0x718] sm:$0xff]
    %v2457 = vld [vmem:[#allocation7 + $0x720] sm:$0xff]
    %v2458 = vld [vmem:[#allocation7 + $0x728] sm:$0xff]
    %v2459 = vld [vmem:[#allocation7 + $0x730] sm:$0xff]
    %v2460 = vld [vmem:[#allocation7 + $0x738] sm:$0xff]
    %v2461 = vld [vmem:[#allocation7 + $0x740] sm:$0xff]
    %v2462 = vld [vmem:[#allocation7 + $0x748] sm:$0xff]
    %v2463 = vld [vmem:[#allocation7 + $0x750] sm:$0xff]
    %v2464 = vld [vmem:[#allocation7 + $0x758] sm:$0xff]
    %v2465 = vld [vmem:[#allocation7 + $0x760] sm:$0xff]
    %v2466 = vld [vmem:[#allocation7 + $0x768] sm:$0xff]
    %v2467 = vld [vmem:[#allocation7 + $0x770] sm:$0xff]
    %v2468 = vld [vmem:[#allocation7 + $0x778] sm:$0xff]
    %v2469 = vld [vmem:[#allocation7 + $0x780] sm:$0xff]
    %v2470 = vld [vmem:[#allocation7 + $0x788] sm:$0xff]
    %v2471 = vld [vmem:[#allocation7 + $0x790] sm:$0xff]
    %v2472 = vld [vmem:[#allocation7 + $0x798] sm:$0xff]
    %v2473 = vld [vmem:[#allocation7 + $0x7a0] sm:$0xff]
    %v2474 = vld [vmem:[#allocation7 + $0x7a8] sm:$0xff]
    %v2475 = vld [vmem:[#allocation7 + $0x7b0] sm:$0xff]
    %v2476 = vld [vmem:[#allocation7 + $0x7b8] sm:$0xff]
    %v2477 = vld [vmem:[#allocation7 + $0x7c0] sm:$0xff]
    %v2478 = vld [vmem:[#allocation7 + $0x7c8] sm:$0xff]
    %v2479 = vld [vmem:[#allocation7 + $0x7d0] sm:$0xff]
    %v2480 = vld [vmem:[#allocation7 + $0x7d8] sm:$0xff]
    %v2481 = vld [vmem:[#allocation7 + $0x7e0] sm:$0xff]
    %v2482 = vld [vmem:[#allocation7 + $0x7e8] sm:$0xff]
    %v2483 = vld [vmem:[#allocation7 + $0x7f0] sm:$0xff]
    %v2484 = vld [vmem:[#allocation7 + $0x7f8] sm:$0xff]
    %v2485 = vld [vmem:[#allocation7 + $0x800] sm:$0xff]
    %v2486 = vld [vmem:[#allocation7 + $0x808] sm:$0xff]
    %v2487 = vld [vmem:[#allocation7 + $0x810] sm:$0xff]
    %v2488 = vld [vmem:[#allocation7 + $0x818] sm:$0xff]
    %v2489 = vld [vmem:[#allocation7 + $0x820] sm:$0xff]
    %v2490 = vld [vmem:[#allocation7 + $0x828] sm:$0xff]
    %v2491 = vld [vmem:[#allocation7 + $0x830] sm:$0xff]
    %v2492 = vld [vmem:[#allocation7 + $0x838] sm:$0xff]
    %v2493 = vld [vmem:[#allocation7 + $0x840] sm:$0xff]
    %v2494 = vld [vmem:[#allocation7 + $0x848] sm:$0xff]
    %v2495 = vld [vmem:[#allocation7 + $0x850] sm:$0xff]
    %v2496 = vld [vmem:[#allocation7 + $0x858] sm:$0xff]
    %v2497 = vld [vmem:[#allocation7 + $0x860] sm:$0xff]
    %v2498 = vld [vmem:[#allocation7 + $0x868] sm:$0xff]
    %v2499 = vld [vmem:[#allocation7 + $0x870] sm:$0xff]
    %v2500 = vld [vmem:[#allocation7 + $0x878] sm:$0xff]
    %v2501 = vld [vmem:[#allocation7 + $0x880] sm:$0xff]
    %v2502 = vld [vmem:[#allocation7 + $0x888] sm:$0xff]
    %v2503 = vld [vmem:[#allocation7 + $0x890] sm:$0xff]
    %v2504 = vld [vmem:[#allocation7 + $0x898] sm:$0xff]
    %v2505 = vld [vmem:[#allocation7 + $0x8a0] sm:$0xff]
    %v2506 = vld [vmem:[#allocation7 + $0x8a8] sm:$0xff]
    %v2507 = vld [vmem:[#allocation7 + $0x8b0] sm:$0xff]
    %v2508 = vld [vmem:[#allocation7 + $0x8b8] sm:$0xff]
    %v2509 = vld [vmem:[#allocation7 + $0x8c0] sm:$0xff]
    %v2510 = vld [vmem:[#allocation7 + $0x8c8] sm:$0xff]
    %v2511 = vld [vmem:[#allocation7 + $0x8d0] sm:$0xff]
    %v2512 = vld [vmem:[#allocation7 + $0x8d8] sm:$0xff]
    %v2513 = vld [vmem:[#allocation7 + $0x8e0] sm:$0xff]
    %v2514 = vld [vmem:[#allocation7 + $0x8e8] sm:$0xff]
    %v2515 = vld [vmem:[#allocation7 + $0x8f0] sm:$0xff]
    %v2516 = vld [vmem:[#allocation7 + $0x8f8] sm:$0xff]
    %v2517 = vld [vmem:[#allocation7 + $0x900] sm:$0xff]
    %v2518 = vld [vmem:[#allocation7 + $0x908] sm:$0xff]
    %v2519 = vld [vmem:[#allocation7 + $0x910] sm:$0xff]
    %v2520 = vld [vmem:[#allocation7 + $0x918] sm:$0xff]
    %v2521 = vld [vmem:[#allocation7 + $0x920] sm:$0xff]
    %v2522 = vld [vmem:[#allocation7 + $0x928] sm:$0xff]
    %v2523 = vld [vmem:[#allocation7 + $0x930] sm:$0xff]
    %v2524 = vld [vmem:[#allocation7 + $0x938] sm:$0xff]
    %v2525 = vld [vmem:[#allocation7 + $0x940] sm:$0xff]
    %v2526 = vld [vmem:[#allocation7 + $0x948] sm:$0xff]
    %v2527 = vld [vmem:[#allocation7 + $0x950] sm:$0xff]
    %v2528 = vld [vmem:[#allocation7 + $0x958] sm:$0xff]
    %v2529 = vld [vmem:[#allocation7 + $0x960] sm:$0xff]
    %v2530 = vld [vmem:[#allocation7 + $0x968] sm:$0xff]
    %v2531 = vld [vmem:[#allocation7 + $0x970] sm:$0xff]
    %v2532 = vld [vmem:[#allocation7 + $0x978] sm:$0xff]
    %v2533 = vld [vmem:[#allocation7 + $0x980] sm:$0xff]
    %v2534 = vld [vmem:[#allocation7 + $0x988] sm:$0xff]
    %v2535 = vld [vmem:[#allocation7 + $0x990] sm:$0xff]
    %v2536 = vld [vmem:[#allocation7 + $0x998] sm:$0xff]
    %v2537 = vld [vmem:[#allocation7 + $0x9a0] sm:$0xff]
    %v2538 = vld [vmem:[#allocation7 + $0x9a8] sm:$0xff]
    %v2539 = vld [vmem:[#allocation7 + $0x9b0] sm:$0xff]
    %v2540 = vld [vmem:[#allocation7 + $0x9b8] sm:$0xff]
    %v2541 = vld [vmem:[#allocation7 + $0x9c0] sm:$0xff]
    %v2542 = vld [vmem:[#allocation7 + $0x9c8] sm:$0xff]
    %v2543 = vld [vmem:[#allocation7 + $0x9d0] sm:$0xff]
    %v2544 = vld [vmem:[#allocation7 + $0x9d8] sm:$0xff]
    %v2545 = vld [vmem:[#allocation7 + $0x9e0] sm:$0xff]
    %v2546 = vld [vmem:[#allocation7 + $0x9e8] sm:$0xff]
    %v2547 = vld [vmem:[#allocation7 + $0x9f0] sm:$0xff]
    %v2548 = vld [vmem:[#allocation7 + $0x9f8] sm:$0xff]
    %v2549 = vld [vmem:[#allocation7 + $0xa00] sm:$0xff]
    %v2550 = vld [vmem:[#allocation7 + $0xa08] sm:$0xff]
    %v2551 = vld [vmem:[#allocation7 + $0xa10] sm:$0xff]
    %v2552 = vld [vmem:[#allocation7 + $0xa18] sm:$0xff]
    %v2553 = vld [vmem:[#allocation7 + $0xa20] sm:$0xff]
    %v2554 = vld [vmem:[#allocation7 + $0xa28] sm:$0xff]
    %v2555 = vld [vmem:[#allocation7 + $0xa30] sm:$0xff]
    %v2556 = vld [vmem:[#allocation7 + $0xa38] sm:$0xff]
    %v2557 = vld [vmem:[#allocation7 + $0xa40] sm:$0xff]
    %v2558 = vld [vmem:[#allocation7 + $0xa48] sm:$0xff]
    %v2559 = vld [vmem:[#allocation7 + $0xa50] sm:$0xff]
    %v2560 = vld [vmem:[#allocation7 + $0xa58] sm:$0xff]
    %v2561 = vld [vmem:[#allocation7 + $0xa60] sm:$0xff]
    %v2562 = vld [vmem:[#allocation7 + $0xa68] sm:$0xff]
    %v2563 = vld [vmem:[#allocation7 + $0xa70] sm:$0xff]
    %v2564 = vld [vmem:[#allocation7 + $0xa78] sm:$0xff]
    %v2565 = vld [vmem:[#allocation7 + $0xa80] sm:$0xff]
    %v2566 = vld [vmem:[#allocation7 + $0xa88] sm:$0xff]
    %v2567 = vld [vmem:[#allocation7 + $0xa90] sm:$0xff]
    %v2568 = vld [vmem:[#allocation7 + $0xa98] sm:$0xff]
    %v2569 = vld [vmem:[#allocation7 + $0xaa0] sm:$0xff]
    %v2570 = vld [vmem:[#allocation7 + $0xaa8] sm:$0xff]
    %v2571 = vld [vmem:[#allocation7 + $0xab0] sm:$0xff]
    %v2572 = vld [vmem:[#allocation7 + $0xab8] sm:$0xff]
    %v2573 = vld [vmem:[#allocation7 + $0xac0] sm:$0xff]
    %v2574 = vld [vmem:[#allocation7 + $0xac8] sm:$0xff]
    %v2575 = vld [vmem:[#allocation7 + $0xad0] sm:$0xff]
    %v2576 = vld [vmem:[#allocation7 + $0xad8] sm:$0xff]
    %v2577 = vld [vmem:[#allocation7 + $0xae0] sm:$0xff]
    %v2578 = vld [vmem:[#allocation7 + $0xae8] sm:$0xff]
    %v2579 = vld [vmem:[#allocation7 + $0xaf0] sm:$0xff]
    %v2580 = vld [vmem:[#allocation7 + $0xaf8] sm:$0xff]
    %v2581 = vld [vmem:[#allocation7 + $0xb00] sm:$0xff]
    %v2582 = vld [vmem:[#allocation7 + $0xb08] sm:$0xff]
    %v2583 = vld [vmem:[#allocation7 + $0xb10] sm:$0xff]
    %v2584 = vld [vmem:[#allocation7 + $0xb18] sm:$0xff]
    %v2585 = vld [vmem:[#allocation7 + $0xb20] sm:$0xff]
    %v2586 = vld [vmem:[#allocation7 + $0xb28] sm:$0xff]
    %v2587 = vld [vmem:[#allocation7 + $0xb30] sm:$0xff]
    %v2588 = vld [vmem:[#allocation7 + $0xb38] sm:$0xff]
    %v2589 = vld [vmem:[#allocation7 + $0xb40] sm:$0xff]
    %v2590 = vld [vmem:[#allocation7 + $0xb48] sm:$0xff]
    %v2591 = vld [vmem:[#allocation7 + $0xb50] sm:$0xff]
    %v2592 = vld [vmem:[#allocation7 + $0xb58] sm:$0xff]
    %v2593 = vld [vmem:[#allocation7 + $0xb60] sm:$0xff]
    %v2594 = vld [vmem:[#allocation7 + $0xb68] sm:$0xff]
    %v2595 = vld [vmem:[#allocation7 + $0xb70] sm:$0xff]
    %v2596 = vld [vmem:[#allocation7 + $0xb78] sm:$0xff]
    %v2597 = vld [vmem:[#allocation7 + $0xb80] sm:$0xff]
    %v2598 = vld [vmem:[#allocation7 + $0xb88] sm:$0xff]
    %v2599 = vld [vmem:[#allocation7 + $0xb90] sm:$0xff]
    %v2600 = vld [vmem:[#allocation7 + $0xb98] sm:$0xff]
    %v2601 = vld [vmem:[#allocation7 + $0xba0] sm:$0xff]
    %v2602 = vld [vmem:[#allocation7 + $0xba8] sm:$0xff]
    %v2603 = vld [vmem:[#allocation7 + $0xbb0] sm:$0xff]
    %v2604 = vld [vmem:[#allocation7 + $0xbb8] sm:$0xff]
    %v2605 = vld [vmem:[#allocation7 + $0xbc0] sm:$0xff]
    %v2606 = vld [vmem:[#allocation7 + $0xbc8] sm:$0xff]
    %v2607 = vld [vmem:[#allocation7 + $0xbd0] sm:$0xff]
    %v2608 = vld [vmem:[#allocation7 + $0xbd8] sm:$0xff]
    %v2609 = vld [vmem:[#allocation7 + $0xbe0] sm:$0xff]
    %v2610 = vld [vmem:[#allocation7 + $0xbe8] sm:$0xff]
    %v2611 = vld [vmem:[#allocation7 + $0xbf0] sm:$0xff]
    %v2612 = vld [vmem:[#allocation7 + $0xbf8] sm:$0xff]
    %v2613 = vld [vmem:[#allocation7 + $0xc00] sm:$0xff]
    %v2614 = vld [vmem:[#allocation7 + $0xc08] sm:$0xff]
    %v2615 = vld [vmem:[#allocation7 + $0xc10] sm:$0xff]
    %v2616 = vld [vmem:[#allocation7 + $0xc18] sm:$0xff]
    %v2617 = vld [vmem:[#allocation7 + $0xc20] sm:$0xff]
    %v2618 = vld [vmem:[#allocation7 + $0xc28] sm:$0xff]
    %v2619 = vld [vmem:[#allocation7 + $0xc30] sm:$0xff]
    %v2620 = vld [vmem:[#allocation7 + $0xc38] sm:$0xff]
    %v2621 = vld [vmem:[#allocation7 + $0xc40] sm:$0xff]
    %v2622 = vld [vmem:[#allocation7 + $0xc48] sm:$0xff]
    %v2623 = vld [vmem:[#allocation7 + $0xc50] sm:$0xff]
    %v2624 = vld [vmem:[#allocation7 + $0xc58] sm:$0xff]
    %v2625 = vld [vmem:[#allocation7 + $0xc60] sm:$0xff]
    %v2626 = vld [vmem:[#allocation7 + $0xc68] sm:$0xff]
    %v2627 = vld [vmem:[#allocation7 + $0xc70] sm:$0xff]
    %v2628 = vld [vmem:[#allocation7 + $0xc78] sm:$0xff]
    %v2629 = vld [vmem:[#allocation7 + $0xc80] sm:$0xff]
    %v2630 = vld [vmem:[#allocation7 + $0xc88] sm:$0xff]
    %v2631 = vld [vmem:[#allocation7 + $0xc90] sm:$0xff]
    %v2632 = vld [vmem:[#allocation7 + $0xc98] sm:$0xff]
    %v2633 = vld [vmem:[#allocation7 + $0xca0] sm:$0xff]
    %v2634 = vld [vmem:[#allocation7 + $0xca8] sm:$0xff]
    %v2635 = vld [vmem:[#allocation7 + $0xcb0] sm:$0xff]
    %v2636 = vld [vmem:[#allocation7 + $0xcb8] sm:$0xff]
    %v2637 = vld [vmem:[#allocation7 + $0xcc0] sm:$0xff]
    %v2638 = vld [vmem:[#allocation7 + $0xcc8] sm:$0xff]
    %v2639 = vld [vmem:[#allocation7 + $0xcd0] sm:$0xff]
    %v2640 = vld [vmem:[#allocation7 + $0xcd8] sm:$0xff]
    %v2641 = vld [vmem:[#allocation7 + $0xce0] sm:$0xff]
    %v2642 = vld [vmem:[#allocation7 + $0xce8] sm:$0xff]
    %v2643 = vld [vmem:[#allocation7 + $0xcf0] sm:$0xff]
    %v2644 = vld [vmem:[#allocation7 + $0xcf8] sm:$0xff]
    %v2645 = vld [vmem:[#allocation7 + $0xd00] sm:$0xff]
    %v2646 = vld [vmem:[#allocation7 + $0xd08] sm:$0xff]
    %v2647 = vld [vmem:[#allocation7 + $0xd10] sm:$0xff]
    %v2648 = vld [vmem:[#allocation7 + $0xd18] sm:$0xff]
    %v2649 = vld [vmem:[#allocation7 + $0xd20] sm:$0xff]
    %v2650 = vld [vmem:[#allocation7 + $0xd28] sm:$0xff]
    %v2651 = vld [vmem:[#allocation7 + $0xd30] sm:$0xff]
    %v2652 = vld [vmem:[#allocation7 + $0xd38] sm:$0xff]
    %v2653 = vld [vmem:[#allocation7 + $0xd40] sm:$0xff]
    %v2654 = vld [vmem:[#allocation7 + $0xd48] sm:$0xff]
    %v2655 = vld [vmem:[#allocation7 + $0xd50] sm:$0xff]
    %v2656 = vld [vmem:[#allocation7 + $0xd58] sm:$0xff]
    %v2657 = vld [vmem:[#allocation7 + $0xd60] sm:$0xff]
    %v2658 = vld [vmem:[#allocation7 + $0xd68] sm:$0xff]
    %v2659 = vld [vmem:[#allocation7 + $0xd70] sm:$0xff]
    %v2660 = vld [vmem:[#allocation7 + $0xd78] sm:$0xff]
    %v2661 = vld [vmem:[#allocation7 + $0xd80] sm:$0xff]
    %v2662 = vld [vmem:[#allocation7 + $0xd88] sm:$0xff]
    %v2663 = vld [vmem:[#allocation7 + $0xd90] sm:$0xff]
    %v2664 = vld [vmem:[#allocation7 + $0xd98] sm:$0xff]
    %v2665 = vld [vmem:[#allocation7 + $0xda0] sm:$0xff]
    %v2666 = vld [vmem:[#allocation7 + $0xda8] sm:$0xff]
    %v2667 = vld [vmem:[#allocation7 + $0xdb0] sm:$0xff]
    %v2668 = vld [vmem:[#allocation7 + $0xdb8] sm:$0xff]
    %v2669 = vld [vmem:[#allocation7 + $0xdc0] sm:$0xff]
    %v2670 = vld [vmem:[#allocation7 + $0xdc8] sm:$0xff]
    %v2671 = vld [vmem:[#allocation7 + $0xdd0] sm:$0xff]
    %v2672 = vld [vmem:[#allocation7 + $0xdd8] sm:$0xff]
    %v2673 = vld [vmem:[#allocation7 + $0xde0] sm:$0xff]
    %v2674 = vld [vmem:[#allocation7 + $0xde8] sm:$0xff]
    %v2675 = vld [vmem:[#allocation7 + $0xdf0] sm:$0xff]
    %v2676 = vld [vmem:[#allocation7 + $0xdf8] sm:$0xff]
    %v2677 = vld [vmem:[#allocation7 + $0xe00] sm:$0xff]
    %v2678 = vld [vmem:[#allocation7 + $0xe08] sm:$0xff]
    %v2679 = vld [vmem:[#allocation7 + $0xe10] sm:$0xff]
    %v2680 = vld [vmem:[#allocation7 + $0xe18] sm:$0xff]
    %v2681 = vld [vmem:[#allocation7 + $0xe20] sm:$0xff]
    %v2682 = vld [vmem:[#allocation7 + $0xe28] sm:$0xff]
    %v2683 = vld [vmem:[#allocation7 + $0xe30] sm:$0xff]
    %v2684 = vld [vmem:[#allocation7 + $0xe38] sm:$0xff]
    %v2685 = vld [vmem:[#allocation7 + $0xe40] sm:$0xff]
    %v2686 = vld [vmem:[#allocation7 + $0xe48] sm:$0xff]
    %v2687 = vld [vmem:[#allocation7 + $0xe50] sm:$0xff]
    %v2688 = vld [vmem:[#allocation7 + $0xe58] sm:$0xff]
    %v2689 = vld [vmem:[#allocation7 + $0xe60] sm:$0xff]
    %v2690 = vld [vmem:[#allocation7 + $0xe68] sm:$0xff]
    %v2691 = vld [vmem:[#allocation7 + $0xe70] sm:$0xff]
    %v2692 = vld [vmem:[#allocation7 + $0xe78] sm:$0xff]
    %v2693 = vld [vmem:[#allocation7 + $0xe80] sm:$0xff]
    %v2694 = vld [vmem:[#allocation7 + $0xe88] sm:$0xff]
    %v2695 = vld [vmem:[#allocation7 + $0xe90] sm:$0xff]
    %v2696 = vld [vmem:[#allocation7 + $0xe98] sm:$0xff]
    %v2697 = vld [vmem:[#allocation7 + $0xea0] sm:$0xff]
    %v2698 = vld [vmem:[#allocation7 + $0xea8] sm:$0xff]
    %v2699 = vld [vmem:[#allocation7 + $0xeb0] sm:$0xff]
    %v2700 = vld [vmem:[#allocation7 + $0xeb8] sm:$0xff]
    %v2701 = vld [vmem:[#allocation7 + $0xec0] sm:$0xff]
    %v2702 = vld [vmem:[#allocation7 + $0xec8] sm:$0xff]
    %v2703 = vld [vmem:[#allocation7 + $0xed0] sm:$0xff]
    %v2704 = vld [vmem:[#allocation7 + $0xed8] sm:$0xff]
    %v2705 = vld [vmem:[#allocation7 + $0xee0] sm:$0xff]
    %v2706 = vld [vmem:[#allocation7 + $0xee8] sm:$0xff]
    %v2707 = vld [vmem:[#allocation7 + $0xef0] sm:$0xff]
    %v2708 = vld [vmem:[#allocation7 + $0xef8] sm:$0xff]
    %v2709 = vld [vmem:[#allocation7 + $0xf00] sm:$0xff]
    %v2710 = vld [vmem:[#allocation7 + $0xf08] sm:$0xff]
    %v2711 = vld [vmem:[#allocation7 + $0xf10] sm:$0xff]
    %v2712 = vld [vmem:[#allocation7 + $0xf18] sm:$0xff]
    %v2713 = vld [vmem:[#allocation7 + $0xf20] sm:$0xff]
    %v2714 = vld [vmem:[#allocation7 + $0xf28] sm:$0xff]
    %v2715 = vld [vmem:[#allocation7 + $0xf30] sm:$0xff]
    %v2716 = vld [vmem:[#allocation7 + $0xf38] sm:$0xff]
    %v2717 = vld [vmem:[#allocation7 + $0xf40] sm:$0xff]
    %v2718 = vld [vmem:[#allocation7 + $0xf48] sm:$0xff]
    %v2719 = vld [vmem:[#allocation7 + $0xf50] sm:$0xff]
    %v2720 = vld [vmem:[#allocation7 + $0xf58] sm:$0xff]
    %v2721 = vld [vmem:[#allocation7 + $0xf60] sm:$0xff]
    %v2722 = vld [vmem:[#allocation7 + $0xf68] sm:$0xff]
    %v2723 = vld [vmem:[#allocation7 + $0xf70] sm:$0xff]
    %v2724 = vld [vmem:[#allocation7 + $0xf78] sm:$0xff]
    %v2725 = vld [vmem:[#allocation7 + $0xf80] sm:$0xff]
    %v2726 = vld [vmem:[#allocation7 + $0xf88] sm:$0xff]
    %v2727 = vld [vmem:[#allocation7 + $0xf90] sm:$0xff]
    %v2728 = vld [vmem:[#allocation7 + $0xf98] sm:$0xff]
    %v2729 = vld [vmem:[#allocation7 + $0xfa0] sm:$0xff]
    %v2730 = vld [vmem:[#allocation7 + $0xfa8] sm:$0xff]
    %v2731 = vld [vmem:[#allocation7 + $0xfb0] sm:$0xff]
    %v2732 = vld [vmem:[#allocation7 + $0xfb8] sm:$0xff]
    %v2733 = vld [vmem:[#allocation7 + $0xfc0] sm:$0xff]
    %v2734 = vld [vmem:[#allocation7 + $0xfc8] sm:$0xff]
    %v2735 = vld [vmem:[#allocation7 + $0xfd0] sm:$0xff]
    %v2736 = vld [vmem:[#allocation7 + $0xfd8] sm:$0xff]
    %v2737 = vld [vmem:[#allocation7 + $0xfe0] sm:$0xff]
    %v2738 = vld [vmem:[#allocation7 + $0xfe8] sm:$0xff]
    %v2739 = vld [vmem:[#allocation7 + $0xff0] sm:$0xff]
    %v2740 = vld [vmem:[#allocation7 + $0xff8] sm:$0xff]
    %v2741 = vld [vmem:[#allocation7 + $0x1000] sm:$0xff]
    %v2742 = vld [vmem:[#allocation7 + $0x1008] sm:$0xff]
    %v2743 = vld [vmem:[#allocation7 + $0x1010] sm:$0xff]
    %v2744 = vld [vmem:[#allocation7 + $0x1018] sm:$0xff]
    %v2745 = vld [vmem:[#allocation7 + $0x1020] sm:$0xff]
    %v2746 = vld [vmem:[#allocation7 + $0x1028] sm:$0xff]
    %v2747 = vld [vmem:[#allocation7 + $0x1030] sm:$0xff]
    %v2748 = vld [vmem:[#allocation7 + $0x1038] sm:$0xff]
    %v2749 = vld [vmem:[#allocation7 + $0x1040] sm:$0xff]
    %v2750 = vld [vmem:[#allocation7 + $0x1048] sm:$0xff]
    %v2751 = vld [vmem:[#allocation7 + $0x1050] sm:$0xff]
    %v2752 = vld [vmem:[#allocation7 + $0x1058] sm:$0xff]
    %v2753 = vld [vmem:[#allocation7 + $0x1060] sm:$0xff]
    %v2754 = vld [vmem:[#allocation7 + $0x1068] sm:$0xff]
    %v2755 = vld [vmem:[#allocation7 + $0x1070] sm:$0xff]
    %v2756 = vld [vmem:[#allocation7 + $0x1078] sm:$0xff]
    %v2757 = vld [vmem:[#allocation7 + $0x1080] sm:$0xff]
    %v2758 = vld [vmem:[#allocation7 + $0x1088] sm:$0xff]
    %v2759 = vld [vmem:[#allocation7 + $0x1090] sm:$0xff]
    %v2760 = vld [vmem:[#allocation7 + $0x1098] sm:$0xff]
    %v2761 = vld [vmem:[#allocation7 + $0x10a0] sm:$0xff]
    %v2762 = vld [vmem:[#allocation7 + $0x10a8] sm:$0xff]
    %v2763 = vld [vmem:[#allocation7 + $0x10b0] sm:$0xff]
    %v2764 = vld [vmem:[#allocation7 + $0x10b8] sm:$0xff]
    %v2765 = vld [vmem:[#allocation7 + $0x10c0] sm:$0xff]
    %v2766 = vld [vmem:[#allocation7 + $0x10c8] sm:$0xff]
    %v2767 = vld [vmem:[#allocation7 + $0x10d0] sm:$0xff]
    %v2768 = vld [vmem:[#allocation7 + $0x10d8] sm:$0xff]
    %v2769 = vld [vmem:[#allocation7 + $0x10e0] sm:$0xff]
    %v2770 = vld [vmem:[#allocation7 + $0x10e8] sm:$0xff]
    %v2771 = vld [vmem:[#allocation7 + $0x10f0] sm:$0xff]
    %v2772 = vld [vmem:[#allocation7 + $0x10f8] sm:$0xff]
    %v2773 = vld [vmem:[#allocation7 + $0x1100] sm:$0xff]
    %v2774 = vld [vmem:[#allocation7 + $0x1108] sm:$0xff]
    %v2775 = vld [vmem:[#allocation7 + $0x1110] sm:$0xff]
    %v2776 = vld [vmem:[#allocation7 + $0x1118] sm:$0xff]
    %v2777 = vld [vmem:[#allocation7 + $0x1120] sm:$0xff]
    %v2778 = vld [vmem:[#allocation7 + $0x1128] sm:$0xff]
    %v2779 = vld [vmem:[#allocation7 + $0x1130] sm:$0xff]
    %v2780 = vld [vmem:[#allocation7 + $0x1138] sm:$0xff]
    %v2781 = vld [vmem:[#allocation7 + $0x1140] sm:$0xff]
    %v2782 = vld [vmem:[#allocation7 + $0x1148] sm:$0xff]
    %v2783 = vld [vmem:[#allocation7 + $0x1150] sm:$0xff]
    %v2784 = vld [vmem:[#allocation7 + $0x1158] sm:$0xff]
    %v2785 = vld [vmem:[#allocation7 + $0x1160] sm:$0xff]
    %v2786 = vld [vmem:[#allocation7 + $0x1168] sm:$0xff]
    %v2787 = vld [vmem:[#allocation7 + $0x1170] sm:$0xff]
    %v2788 = vld [vmem:[#allocation7 + $0x1178] sm:$0xff]
    %v2789 = vld [vmem:[#allocation7 + $0x1180] sm:$0xff]
    %v2790 = vld [vmem:[#allocation7 + $0x1188] sm:$0xff]
    %v2791 = vld [vmem:[#allocation7 + $0x1190] sm:$0xff]
    %v2792 = vld [vmem:[#allocation7 + $0x1198] sm:$0xff]
    %v2793 = vld [vmem:[#allocation7 + $0x11a0] sm:$0xff]
    %v2794 = vld [vmem:[#allocation7 + $0x11a8] sm:$0xff]
    %v2795 = vld [vmem:[#allocation7 + $0x11b0] sm:$0xff]
    %v2796 = vld [vmem:[#allocation7 + $0x11b8] sm:$0xff]
    %v2797 = vld [vmem:[#allocation7 + $0x11c0] sm:$0xff]
    %v2798 = vld [vmem:[#allocation7 + $0x11c8] sm:$0xff]
    %v2799 = vld [vmem:[#allocation7 + $0x11d0] sm:$0xff]
    %v2800 = vld [vmem:[#allocation7 + $0x11d8] sm:$0xff]
    %v2801 = vld [vmem:[#allocation7 + $0x11e0] sm:$0xff]
    %v2802 = vld [vmem:[#allocation7 + $0x11e8] sm:$0xff]
    %v2803 = vld [vmem:[#allocation7 + $0x11f0] sm:$0xff]
    %v2804 = vld [vmem:[#allocation7 + $0x11f8] sm:$0xff]
    %v2811 = vunpack.c.l.b16 %v2223
    %v2812 = vunpack.c.h.b16 %v2223
    %v2813 = vunpack.c.l.b16 %v2224
    %v2814 = vunpack.c.h.b16 %v2224
    %v2815 = vunpack.c.l.b16 %v2225
    %v2816 = vunpack.c.h.b16 %v2225
    %v2817 = vunpack.c.l.b16 %v2226
    %v2818 = vunpack.c.h.b16 %v2226
    %v2819 = vunpack.c.l.b16 %v2227
    %v2820 = vunpack.c.h.b16 %v2227
    %v2821 = vunpack.c.l.b16 %v2228
    %v2822 = vunpack.c.h.b16 %v2228
    %v2823 = vpack.c.b16 %v2817, %v2811
    %v2824 = vpack.c.b16 %v2818, %v2812
    %v2825 = vpack.c.b16 %v2819, %v2813
    %v2826 = vpack.c.b16 %v2820, %v2814
    %v2827 = vpack.c.b16 %v2821, %v2815
    %v2828 = vpack.c.b16 %v2822, %v2816
    %v3411 = vunpack.c.l.b16 %v2229
    %v3412 = vunpack.c.h.b16 %v2229
    %v3413 = vunpack.c.l.b16 %v2230
    %v3414 = vunpack.c.h.b16 %v2230
    %v3415 = vunpack.c.l.b16 %v2231
    %v3416 = vunpack.c.h.b16 %v2231
    %v3417 = vunpack.c.l.b16 %v2232
    %v3418 = vunpack.c.h.b16 %v2232
    %v3419 = vunpack.c.l.b16 %v2233
    %v3420 = vunpack.c.h.b16 %v2233
    %v3421 = vunpack.c.l.b16 %v2234
    %v3422 = vunpack.c.h.b16 %v2234
    %v3423 = vunpack.c.l.b16 %v2235
    %v3424 = vunpack.c.h.b16 %v2235
    %v3425 = vunpack.c.l.b16 %v2236
    %v3426 = vunpack.c.h.b16 %v2236
    %v3427 = vunpack.c.l.b16 %v2237
    %v3428 = vunpack.c.h.b16 %v2237
    %v3429 = vunpack.c.l.b16 %v2238
    %v3430 = vunpack.c.h.b16 %v2238
    %v3431 = vunpack.c.l.b16 %v2239
    %v3432 = vunpack.c.h.b16 %v2239
    %v3433 = vunpack.c.l.b16 %v2240
    %v3434 = vunpack.c.h.b16 %v2240
    %v3435 = vunpack.c.l.b16 %v2241
    %v3436 = vunpack.c.h.b16 %v2241
    %v3437 = vunpack.c.l.b16 %v2242
    %v3438 = vunpack.c.h.b16 %v2242
    %v3439 = vunpack.c.l.b16 %v2243
    %v3440 = vunpack.c.h.b16 %v2243
    %v3441 = vunpack.c.l.b16 %v2244
    %v3442 = vunpack.c.h.b16 %v2244
    %v3443 = vunpack.c.l.b16 %v2245
    %v3444 = vunpack.c.h.b16 %v2245
    %v3445 = vunpack.c.l.b16 %v2246
    %v3446 = vunpack.c.h.b16 %v2246
    %v3447 = vunpack.c.l.b16 %v2247
    %v3448 = vunpack.c.h.b16 %v2247
    %v3449 = vunpack.c.l.b16 %v2248
    %v3450 = vunpack.c.h.b16 %v2248
    %v3451 = vunpack.c.l.b16 %v2249
    %v3452 = vunpack.c.h.b16 %v2249
    %v3453 = vunpack.c.l.b16 %v2250
    %v3454 = vunpack.c.h.b16 %v2250
    %v3455 = vunpack.c.l.b16 %v2251
    %v3456 = vunpack.c.h.b16 %v2251
    %v3457 = vunpack.c.l.b16 %v2252
    %v3458 = vunpack.c.h.b16 %v2252
    %v3459 = vunpack.c.l.b16 %v2253
    %v3460 = vunpack.c.h.b16 %v2253
    %v3461 = vunpack.c.l.b16 %v2254
    %v3462 = vunpack.c.h.b16 %v2254
    %v3463 = vunpack.c.l.b16 %v2255
    %v3464 = vunpack.c.h.b16 %v2255
    %v3465 = vunpack.c.l.b16 %v2256
    %v3466 = vunpack.c.h.b16 %v2256
    %v3467 = vunpack.c.l.b16 %v2257
    %v3468 = vunpack.c.h.b16 %v2257
    %v3469 = vunpack.c.l.b16 %v2258
    %v3470 = vunpack.c.h.b16 %v2258
    %v3471 = vunpack.c.l.b16 %v2259
    %v3472 = vunpack.c.h.b16 %v2259
    %v3473 = vunpack.c.l.b16 %v2260
    %v3474 = vunpack.c.h.b16 %v2260
    %v3475 = vunpack.c.l.b16 %v2261
    %v3476 = vunpack.c.h.b16 %v2261
    %v3477 = vunpack.c.l.b16 %v2262
    %v3478 = vunpack.c.h.b16 %v2262
    %v3479 = vunpack.c.l.b16 %v2263
    %v3480 = vunpack.c.h.b16 %v2263
    %v3481 = vunpack.c.l.b16 %v2264
    %v3482 = vunpack.c.h.b16 %v2264
    %v3483 = vunpack.c.l.b16 %v2265
    %v3484 = vunpack.c.h.b16 %v2265
    %v3485 = vunpack.c.l.b16 %v2266
    %v3486 = vunpack.c.h.b16 %v2266
    %v3487 = vunpack.c.l.b16 %v2267
    %v3488 = vunpack.c.h.b16 %v2267
    %v3489 = vunpack.c.l.b16 %v2268
    %v3490 = vunpack.c.h.b16 %v2268
    %v3491 = vunpack.c.l.b16 %v2269
    %v3492 = vunpack.c.h.b16 %v2269
    %v3493 = vunpack.c.l.b16 %v2270
    %v3494 = vunpack.c.h.b16 %v2270
    %v3495 = vunpack.c.l.b16 %v2271
    %v3496 = vunpack.c.h.b16 %v2271
    %v3497 = vunpack.c.l.b16 %v2272
    %v3498 = vunpack.c.h.b16 %v2272
    %v3499 = vunpack.c.l.b16 %v2273
    %v3500 = vunpack.c.h.b16 %v2273
    %v3501 = vunpack.c.l.b16 %v2274
    %v3502 = vunpack.c.h.b16 %v2274
    %v3503 = vunpack.c.l.b16 %v2275
    %v3504 = vunpack.c.h.b16 %v2275
    %v3505 = vunpack.c.l.b16 %v2276
    %v3506 = vunpack.c.h.b16 %v2276
    %v3507 = vunpack.c.l.b16 %v2277
    %v3508 = vunpack.c.h.b16 %v2277
    %v3509 = vunpack.c.l.b16 %v2278
    %v3510 = vunpack.c.h.b16 %v2278
    %v3511 = vunpack.c.l.b16 %v2279
    %v3512 = vunpack.c.h.b16 %v2279
    %v3513 = vunpack.c.l.b16 %v2280
    %v3514 = vunpack.c.h.b16 %v2280
    %v3515 = vunpack.c.l.b16 %v2281
    %v3516 = vunpack.c.h.b16 %v2281
    %v3517 = vunpack.c.l.b16 %v2282
    %v3518 = vunpack.c.h.b16 %v2282
    %v3519 = vunpack.c.l.b16 %v2283
    %v3520 = vunpack.c.h.b16 %v2283
    %v3521 = vunpack.c.l.b16 %v2284
    %v3522 = vunpack.c.h.b16 %v2284
    %v3523 = vunpack.c.l.b16 %v2285
    %v3524 = vunpack.c.h.b16 %v2285
    %v3525 = vunpack.c.l.b16 %v2286
    %v3526 = vunpack.c.h.b16 %v2286
    %v3527 = vunpack.c.l.b16 %v2287
    %v3528 = vunpack.c.h.b16 %v2287
    %v3529 = vunpack.c.l.b16 %v2288
    %v3530 = vunpack.c.h.b16 %v2288
    %v3531 = vunpack.c.l.b16 %v2289
    %v3532 = vunpack.c.h.b16 %v2289
    %v3533 = vunpack.c.l.b16 %v2290
    %v3534 = vunpack.c.h.b16 %v2290
    %v3535 = vunpack.c.l.b16 %v2291
    %v3536 = vunpack.c.h.b16 %v2291
    %v3537 = vunpack.c.l.b16 %v2292
    %v3538 = vunpack.c.h.b16 %v2292
    %v3539 = vunpack.c.l.b16 %v2293
    %v3540 = vunpack.c.h.b16 %v2293
    %v3541 = vunpack.c.l.b16 %v2294
    %v3542 = vunpack.c.h.b16 %v2294
    %v3543 = vunpack.c.l.b16 %v2295
    %v3544 = vunpack.c.h.b16 %v2295
    %v3545 = vunpack.c.l.b16 %v2296
    %v3546 = vunpack.c.h.b16 %v2296
    %v3547 = vunpack.c.l.b16 %v2297
    %v3548 = vunpack.c.h.b16 %v2297
    %v3549 = vunpack.c.l.b16 %v2298
    %v3550 = vunpack.c.h.b16 %v2298
    %v3551 = vunpack.c.l.b16 %v2299
    %v3552 = vunpack.c.h.b16 %v2299
    %v3553 = vunpack.c.l.b16 %v2300
    %v3554 = vunpack.c.h.b16 %v2300
    %v3555 = vunpack.c.l.b16 %v2301
    %v3556 = vunpack.c.h.b16 %v2301
    %v3557 = vunpack.c.l.b16 %v2302
    %v3558 = vunpack.c.h.b16 %v2302
    %v3559 = vunpack.c.l.b16 %v2303
    %v3560 = vunpack.c.h.b16 %v2303
    %v3561 = vunpack.c.l.b16 %v2304
    %v3562 = vunpack.c.h.b16 %v2304
    %v3563 = vunpack.c.l.b16 %v2305
    %v3564 = vunpack.c.h.b16 %v2305
    %v3565 = vunpack.c.l.b16 %v2306
    %v3566 = vunpack.c.h.b16 %v2306
    %v3567 = vunpack.c.l.b16 %v2307
    %v3568 = vunpack.c.h.b16 %v2307
    %v3569 = vunpack.c.l.b16 %v2308
    %v3570 = vunpack.c.h.b16 %v2308
    %v3571 = vunpack.c.l.b16 %v2309
    %v3572 = vunpack.c.h.b16 %v2309
    %v3573 = vunpack.c.l.b16 %v2310
    %v3574 = vunpack.c.h.b16 %v2310
    %v3575 = vunpack.c.l.b16 %v2311
    %v3576 = vunpack.c.h.b16 %v2311
    %v3577 = vunpack.c.l.b16 %v2312
    %v3578 = vunpack.c.h.b16 %v2312
    %v3579 = vunpack.c.l.b16 %v2313
    %v3580 = vunpack.c.h.b16 %v2313
    %v3581 = vunpack.c.l.b16 %v2314
    %v3582 = vunpack.c.h.b16 %v2314
    %v3583 = vunpack.c.l.b16 %v2315
    %v3584 = vunpack.c.h.b16 %v2315
    %v3585 = vunpack.c.l.b16 %v2316
    %v3586 = vunpack.c.h.b16 %v2316
    %v3587 = vunpack.c.l.b16 %v2317
    %v3588 = vunpack.c.h.b16 %v2317
    %v3589 = vunpack.c.l.b16 %v2318
    %v3590 = vunpack.c.h.b16 %v2318
    %v3591 = vunpack.c.l.b16 %v2319
    %v3592 = vunpack.c.h.b16 %v2319
    %v3593 = vunpack.c.l.b16 %v2320
    %v3594 = vunpack.c.h.b16 %v2320
    %v3595 = vunpack.c.l.b16 %v2321
    %v3596 = vunpack.c.h.b16 %v2321
    %v3597 = vunpack.c.l.b16 %v2322
    %v3598 = vunpack.c.h.b16 %v2322
    %v3599 = vunpack.c.l.b16 %v2323
    %v3600 = vunpack.c.h.b16 %v2323
    %v3601 = vunpack.c.l.b16 %v2324
    %v3602 = vunpack.c.h.b16 %v2324
    %v3603 = vunpack.c.l.b16 %v2325
    %v3604 = vunpack.c.h.b16 %v2325
    %v3605 = vunpack.c.l.b16 %v2326
    %v3606 = vunpack.c.h.b16 %v2326
    %v3607 = vunpack.c.l.b16 %v2327
    %v3608 = vunpack.c.h.b16 %v2327
    %v3609 = vunpack.c.l.b16 %v2328
    %v3610 = vunpack.c.h.b16 %v2328
    %v3611 = vunpack.c.l.b16 %v2329
    %v3612 = vunpack.c.h.b16 %v2329
    %v3613 = vunpack.c.l.b16 %v2330
    %v3614 = vunpack.c.h.b16 %v2330
    %v3615 = vunpack.c.l.b16 %v2331
    %v3616 = vunpack.c.h.b16 %v2331
    %v3617 = vunpack.c.l.b16 %v2332
    %v3618 = vunpack.c.h.b16 %v2332
    %v3619 = vunpack.c.l.b16 %v2333
    %v3620 = vunpack.c.h.b16 %v2333
    %v3621 = vunpack.c.l.b16 %v2334
    %v3622 = vunpack.c.h.b16 %v2334
    %v3623 = vunpack.c.l.b16 %v2335
    %v3624 = vunpack.c.h.b16 %v2335
    %v3625 = vunpack.c.l.b16 %v2336
    %v3626 = vunpack.c.h.b16 %v2336
    %v3627 = vunpack.c.l.b16 %v2337
    %v3628 = vunpack.c.h.b16 %v2337
    %v3629 = vunpack.c.l.b16 %v2338
    %v3630 = vunpack.c.h.b16 %v2338
    %v3631 = vunpack.c.l.b16 %v2339
    %v3632 = vunpack.c.h.b16 %v2339
    %v3633 = vunpack.c.l.b16 %v2340
    %v3634 = vunpack.c.h.b16 %v2340
    %v3635 = vunpack.c.l.b16 %v2341
    %v3636 = vunpack.c.h.b16 %v2341
    %v3637 = vunpack.c.l.b16 %v2342
    %v3638 = vunpack.c.h.b16 %v2342
    %v3639 = vunpack.c.l.b16 %v2343
    %v3640 = vunpack.c.h.b16 %v2343
    %v3641 = vunpack.c.l.b16 %v2344
    %v3642 = vunpack.c.h.b16 %v2344
    %v3643 = vunpack.c.l.b16 %v2345
    %v3644 = vunpack.c.h.b16 %v2345
    %v3645 = vunpack.c.l.b16 %v2346
    %v3646 = vunpack.c.h.b16 %v2346
    %v3647 = vunpack.c.l.b16 %v2347
    %v3648 = vunpack.c.h.b16 %v2347
    %v3649 = vunpack.c.l.b16 %v2348
    %v3650 = vunpack.c.h.b16 %v2348
    %v3651 = vunpack.c.l.b16 %v2349
    %v3652 = vunpack.c.h.b16 %v2349
    %v3653 = vunpack.c.l.b16 %v2350
    %v3654 = vunpack.c.h.b16 %v2350
    %v3655 = vunpack.c.l.b16 %v2351
    %v3656 = vunpack.c.h.b16 %v2351
    %v3657 = vunpack.c.l.b16 %v2352
    %v3658 = vunpack.c.h.b16 %v2352
    %v3659 = vunpack.c.l.b16 %v2353
    %v3660 = vunpack.c.h.b16 %v2353
    %v3661 = vunpack.c.l.b16 %v2354
    %v3662 = vunpack.c.h.b16 %v2354
    %v3663 = vunpack.c.l.b16 %v2355
    %v3664 = vunpack.c.h.b16 %v2355
    %v3665 = vunpack.c.l.b16 %v2356
    %v3666 = vunpack.c.h.b16 %v2356
    %v3667 = vunpack.c.l.b16 %v2357
    %v3668 = vunpack.c.h.b16 %v2357
    %v3669 = vunpack.c.l.b16 %v2358
    %v3670 = vunpack.c.h.b16 %v2358
    %v3671 = vunpack.c.l.b16 %v2359
    %v3672 = vunpack.c.h.b16 %v2359
    %v3673 = vunpack.c.l.b16 %v2360
    %v3674 = vunpack.c.h.b16 %v2360
    %v3675 = vunpack.c.l.b16 %v2361
    %v3676 = vunpack.c.h.b16 %v2361
    %v3677 = vunpack.c.l.b16 %v2362
    %v3678 = vunpack.c.h.b16 %v2362
    %v3679 = vunpack.c.l.b16 %v2363
    %v3680 = vunpack.c.h.b16 %v2363
    %v3681 = vunpack.c.l.b16 %v2364
    %v3682 = vunpack.c.h.b16 %v2364
    %v3683 = vunpack.c.l.b16 %v2365
    %v3684 = vunpack.c.h.b16 %v2365
    %v3685 = vunpack.c.l.b16 %v2366
    %v3686 = vunpack.c.h.b16 %v2366
    %v3687 = vunpack.c.l.b16 %v2367
    %v3688 = vunpack.c.h.b16 %v2367
    %v3689 = vunpack.c.l.b16 %v2368
    %v3690 = vunpack.c.h.b16 %v2368
    %v3691 = vunpack.c.l.b16 %v2369
    %v3692 = vunpack.c.h.b16 %v2369
    %v3693 = vunpack.c.l.b16 %v2370
    %v3694 = vunpack.c.h.b16 %v2370
    %v3695 = vunpack.c.l.b16 %v2371
    %v3696 = vunpack.c.h.b16 %v2371
    %v3697 = vunpack.c.l.b16 %v2372
    %v3698 = vunpack.c.h.b16 %v2372
    %v3699 = vunpack.c.l.b16 %v2373
    %v3700 = vunpack.c.h.b16 %v2373
    %v3701 = vunpack.c.l.b16 %v2374
    %v3702 = vunpack.c.h.b16 %v2374
    %v3703 = vunpack.c.l.b16 %v2375
    %v3704 = vunpack.c.h.b16 %v2375
    %v3705 = vunpack.c.l.b16 %v2376
    %v3706 = vunpack.c.h.b16 %v2376
    %v3707 = vunpack.c.l.b16 %v2377
    %v3708 = vunpack.c.h.b16 %v2377
    %v3709 = vunpack.c.l.b16 %v2378
    %v3710 = vunpack.c.h.b16 %v2378
    %v3711 = vunpack.c.l.b16 %v2379
    %v3712 = vunpack.c.h.b16 %v2379
    %v3713 = vunpack.c.l.b16 %v2380
    %v3714 = vunpack.c.h.b16 %v2380
    %v3715 = vunpack.c.l.b16 %v2381
    %v3716 = vunpack.c.h.b16 %v2381
    %v3717 = vunpack.c.l.b16 %v2382
    %v3718 = vunpack.c.h.b16 %v2382
    %v3719 = vunpack.c.l.b16 %v2383
    %v3720 = vunpack.c.h.b16 %v2383
    %v3721 = vunpack.c.l.b16 %v2384
    %v3722 = vunpack.c.h.b16 %v2384
    %v3723 = vunpack.c.l.b16 %v2385
    %v3724 = vunpack.c.h.b16 %v2385
    %v3725 = vunpack.c.l.b16 %v2386
    %v3726 = vunpack.c.h.b16 %v2386
    %v3727 = vunpack.c.l.b16 %v2387
    %v3728 = vunpack.c.h.b16 %v2387
    %v3729 = vunpack.c.l.b16 %v2388
    %v3730 = vunpack.c.h.b16 %v2388
    %v3731 = vunpack.c.l.b16 %v2389
    %v3732 = vunpack.c.h.b16 %v2389
    %v3733 = vunpack.c.l.b16 %v2390
    %v3734 = vunpack.c.h.b16 %v2390
    %v3735 = vunpack.c.l.b16 %v2391
    %v3736 = vunpack.c.h.b16 %v2391
    %v3737 = vunpack.c.l.b16 %v2392
    %v3738 = vunpack.c.h.b16 %v2392
    %v3739 = vunpack.c.l.b16 %v2393
    %v3740 = vunpack.c.h.b16 %v2393
    %v3741 = vunpack.c.l.b16 %v2394
    %v3742 = vunpack.c.h.b16 %v2394
    %v3743 = vunpack.c.l.b16 %v2395
    %v3744 = vunpack.c.h.b16 %v2395
    %v3745 = vunpack.c.l.b16 %v2396
    %v3746 = vunpack.c.h.b16 %v2396
    %v3747 = vunpack.c.l.b16 %v2397
    %v3748 = vunpack.c.h.b16 %v2397
    %v3749 = vunpack.c.l.b16 %v2398
    %v3750 = vunpack.c.h.b16 %v2398
    %v3751 = vunpack.c.l.b16 %v2399
    %v3752 = vunpack.c.h.b16 %v2399
    %v3753 = vunpack.c.l.b16 %v2400
    %v3754 = vunpack.c.h.b16 %v2400
    %v3755 = vunpack.c.l.b16 %v2401
    %v3756 = vunpack.c.h.b16 %v2401
    %v3757 = vunpack.c.l.b16 %v2402
    %v3758 = vunpack.c.h.b16 %v2402
    %v3759 = vunpack.c.l.b16 %v2403
    %v3760 = vunpack.c.h.b16 %v2403
    %v3761 = vunpack.c.l.b16 %v2404
    %v3762 = vunpack.c.h.b16 %v2404
    %v3763 = vunpack.c.l.b16 %v2405
    %v3764 = vunpack.c.h.b16 %v2405
    %v3765 = vunpack.c.l.b16 %v2406
    %v3766 = vunpack.c.h.b16 %v2406
    %v3767 = vunpack.c.l.b16 %v2407
    %v3768 = vunpack.c.h.b16 %v2407
    %v3769 = vunpack.c.l.b16 %v2408
    %v3770 = vunpack.c.h.b16 %v2408
    %v3771 = vunpack.c.l.b16 %v2409
    %v3772 = vunpack.c.h.b16 %v2409
    %v3773 = vunpack.c.l.b16 %v2410
    %v3774 = vunpack.c.h.b16 %v2410
    %v3775 = vunpack.c.l.b16 %v2411
    %v3776 = vunpack.c.h.b16 %v2411
    %v3777 = vunpack.c.l.b16 %v2412
    %v3778 = vunpack.c.h.b16 %v2412
    %v3779 = vunpack.c.l.b16 %v2413
    %v3780 = vunpack.c.h.b16 %v2413
    %v3781 = vunpack.c.l.b16 %v2414
    %v3782 = vunpack.c.h.b16 %v2414
    %v3783 = vunpack.c.l.b16 %v2415
    %v3784 = vunpack.c.h.b16 %v2415
    %v3785 = vunpack.c.l.b16 %v2416
    %v3786 = vunpack.c.h.b16 %v2416
    %v3787 = vunpack.c.l.b16 %v2417
    %v3788 = vunpack.c.h.b16 %v2417
    %v3789 = vunpack.c.l.b16 %v2418
    %v3790 = vunpack.c.h.b16 %v2418
    %v3791 = vunpack.c.l.b16 %v2419
    %v3792 = vunpack.c.h.b16 %v2419
    %v3793 = vunpack.c.l.b16 %v2420
    %v3794 = vunpack.c.h.b16 %v2420
    %v3795 = vunpack.c.l.b16 %v2421
    %v3796 = vunpack.c.h.b16 %v2421
    %v3797 = vunpack.c.l.b16 %v2422
    %v3798 = vunpack.c.h.b16 %v2422
    %v3799 = vunpack.c.l.b16 %v2423
    %v3800 = vunpack.c.h.b16 %v2423
    %v3801 = vunpack.c.l.b16 %v2424
    %v3802 = vunpack.c.h.b16 %v2424
    %v3803 = vunpack.c.l.b16 %v2425
    %v3804 = vunpack.c.h.b16 %v2425
    %v3805 = vunpack.c.l.b16 %v2426
    %v3806 = vunpack.c.h.b16 %v2426
    %v3807 = vunpack.c.l.b16 %v2427
    %v3808 = vunpack.c.h.b16 %v2427
    %v3809 = vunpack.c.l.b16 %v2428
    %v3810 = vunpack.c.h.b16 %v2428
    %v3811 = vunpack.c.l.b16 %v2429
    %v3812 = vunpack.c.h.b16 %v2429
    %v3813 = vunpack.c.l.b16 %v2430
    %v3814 = vunpack.c.h.b16 %v2430
    %v3815 = vunpack.c.l.b16 %v2431
    %v3816 = vunpack.c.h.b16 %v2431
    %v3817 = vunpack.c.l.b16 %v2432
    %v3818 = vunpack.c.h.b16 %v2432
    %v3819 = vunpack.c.l.b16 %v2433
    %v3820 = vunpack.c.h.b16 %v2433
    %v3821 = vunpack.c.l.b16 %v2434
    %v3822 = vunpack.c.h.b16 %v2434
    %v3823 = vunpack.c.l.b16 %v2435
    %v3824 = vunpack.c.h.b16 %v2435
    %v3825 = vunpack.c.l.b16 %v2436
    %v3826 = vunpack.c.h.b16 %v2436
    %v3827 = vunpack.c.l.b16 %v2437
    %v3828 = vunpack.c.h.b16 %v2437
    %v3829 = vunpack.c.l.b16 %v2438
    %v3830 = vunpack.c.h.b16 %v2438
    %v3831 = vunpack.c.l.b16 %v2439
    %v3832 = vunpack.c.h.b16 %v2439
    %v3833 = vunpack.c.l.b16 %v2440
    %v3834 = vunpack.c.h.b16 %v2440
    %v3835 = vunpack.c.l.b16 %v2441
    %v3836 = vunpack.c.h.b16 %v2441
    %v3837 = vunpack.c.l.b16 %v2442
    %v3838 = vunpack.c.h.b16 %v2442
    %v3839 = vunpack.c.l.b16 %v2443
    %v3840 = vunpack.c.h.b16 %v2443
    %v3841 = vunpack.c.l.b16 %v2444
    %v3842 = vunpack.c.h.b16 %v2444
    %v3843 = vunpack.c.l.b16 %v2445
    %v3844 = vunpack.c.h.b16 %v2445
    %v3845 = vunpack.c.l.b16 %v2446
    %v3846 = vunpack.c.h.b16 %v2446
    %v3847 = vunpack.c.l.b16 %v2447
    %v3848 = vunpack.c.h.b16 %v2447
    %v3849 = vunpack.c.l.b16 %v2448
    %v3850 = vunpack.c.h.b16 %v2448
    %v3851 = vunpack.c.l.b16 %v2449
    %v3852 = vunpack.c.h.b16 %v2449
    %v3853 = vunpack.c.l.b16 %v2450
    %v3854 = vunpack.c.h.b16 %v2450
    %v3855 = vunpack.c.l.b16 %v2451
    %v3856 = vunpack.c.h.b16 %v2451
    %v3857 = vunpack.c.l.b16 %v2452
    %v3858 = vunpack.c.h.b16 %v2452
    %v3859 = vunpack.c.l.b16 %v2453
    %v3860 = vunpack.c.h.b16 %v2453
    %v3861 = vunpack.c.l.b16 %v2454
    %v3862 = vunpack.c.h.b16 %v2454
    %v3863 = vunpack.c.l.b16 %v2455
    %v3864 = vunpack.c.h.b16 %v2455
    %v3865 = vunpack.c.l.b16 %v2456
    %v3866 = vunpack.c.h.b16 %v2456
    %v3867 = vunpack.c.l.b16 %v2457
    %v3868 = vunpack.c.h.b16 %v2457
    %v3869 = vunpack.c.l.b16 %v2458
    %v3870 = vunpack.c.h.b16 %v2458
    %v3871 = vunpack.c.l.b16 %v2459
    %v3872 = vunpack.c.h.b16 %v2459
    %v3873 = vunpack.c.l.b16 %v2460
    %v3874 = vunpack.c.h.b16 %v2460
    %v3875 = vunpack.c.l.b16 %v2461
    %v3876 = vunpack.c.h.b16 %v2461
    %v3877 = vunpack.c.l.b16 %v2462
    %v3878 = vunpack.c.h.b16 %v2462
    %v3879 = vunpack.c.l.b16 %v2463
    %v3880 = vunpack.c.h.b16 %v2463
    %v3881 = vunpack.c.l.b16 %v2464
    %v3882 = vunpack.c.h.b16 %v2464
    %v3883 = vunpack.c.l.b16 %v2465
    %v3884 = vunpack.c.h.b16 %v2465
    %v3885 = vunpack.c.l.b16 %v2466
    %v3886 = vunpack.c.h.b16 %v2466
    %v3887 = vunpack.c.l.b16 %v2467
    %v3888 = vunpack.c.h.b16 %v2467
    %v3889 = vunpack.c.l.b16 %v2468
    %v3890 = vunpack.c.h.b16 %v2468
    %v3891 = vunpack.c.l.b16 %v2469
    %v3892 = vunpack.c.h.b16 %v2469
    %v3893 = vunpack.c.l.b16 %v2470
    %v3894 = vunpack.c.h.b16 %v2470
    %v3895 = vunpack.c.l.b16 %v2471
    %v3896 = vunpack.c.h.b16 %v2471
    %v3897 = vunpack.c.l.b16 %v2472
    %v3898 = vunpack.c.h.b16 %v2472
    %v3899 = vunpack.c.l.b16 %v2473
    %v3900 = vunpack.c.h.b16 %v2473
    %v3901 = vunpack.c.l.b16 %v2474
    %v3902 = vunpack.c.h.b16 %v2474
    %v3903 = vunpack.c.l.b16 %v2475
    %v3904 = vunpack.c.h.b16 %v2475
    %v3905 = vunpack.c.l.b16 %v2476
    %v3906 = vunpack.c.h.b16 %v2476
    %v3907 = vunpack.c.l.b16 %v2477
    %v3908 = vunpack.c.h.b16 %v2477
    %v3909 = vunpack.c.l.b16 %v2478
    %v3910 = vunpack.c.h.b16 %v2478
    %v3911 = vunpack.c.l.b16 %v2479
    %v3912 = vunpack.c.h.b16 %v2479
    %v3913 = vunpack.c.l.b16 %v2480
    %v3914 = vunpack.c.h.b16 %v2480
    %v3915 = vunpack.c.l.b16 %v2481
    %v3916 = vunpack.c.h.b16 %v2481
    %v3917 = vunpack.c.l.b16 %v2482
    %v3918 = vunpack.c.h.b16 %v2482
    %v3919 = vunpack.c.l.b16 %v2483
    %v3920 = vunpack.c.h.b16 %v2483
    %v3921 = vunpack.c.l.b16 %v2484
    %v3922 = vunpack.c.h.b16 %v2484
    %v3923 = vunpack.c.l.b16 %v2485
    %v3924 = vunpack.c.h.b16 %v2485
    %v3925 = vunpack.c.l.b16 %v2486
    %v3926 = vunpack.c.h.b16 %v2486
    %v3927 = vunpack.c.l.b16 %v2487
    %v3928 = vunpack.c.h.b16 %v2487
    %v3929 = vunpack.c.l.b16 %v2488
    %v3930 = vunpack.c.h.b16 %v2488
    %v3931 = vunpack.c.l.b16 %v2489
    %v3932 = vunpack.c.h.b16 %v2489
    %v3933 = vunpack.c.l.b16 %v2490
    %v3934 = vunpack.c.h.b16 %v2490
    %v3935 = vunpack.c.l.b16 %v2491
    %v3936 = vunpack.c.h.b16 %v2491
    %v3937 = vunpack.c.l.b16 %v2492
    %v3938 = vunpack.c.h.b16 %v2492
    %v3939 = vunpack.c.l.b16 %v2493
    %v3940 = vunpack.c.h.b16 %v2493
    %v3941 = vunpack.c.l.b16 %v2494
    %v3942 = vunpack.c.h.b16 %v2494
    %v3943 = vunpack.c.l.b16 %v2495
    %v3944 = vunpack.c.h.b16 %v2495
    %v3945 = vunpack.c.l.b16 %v2496
    %v3946 = vunpack.c.h.b16 %v2496
    %v3947 = vunpack.c.l.b16 %v2497
    %v3948 = vunpack.c.h.b16 %v2497
    %v3949 = vunpack.c.l.b16 %v2498
    %v3950 = vunpack.c.h.b16 %v2498
    %v3951 = vunpack.c.l.b16 %v2499
    %v3952 = vunpack.c.h.b16 %v2499
    %v3953 = vunpack.c.l.b16 %v2500
    %v3954 = vunpack.c.h.b16 %v2500
    %v3955 = vunpack.c.l.b16 %v2501
    %v3956 = vunpack.c.h.b16 %v2501
    %v3957 = vunpack.c.l.b16 %v2502
    %v3958 = vunpack.c.h.b16 %v2502
    %v3959 = vunpack.c.l.b16 %v2503
    %v3960 = vunpack.c.h.b16 %v2503
    %v3961 = vunpack.c.l.b16 %v2504
    %v3962 = vunpack.c.h.b16 %v2504
    %v3963 = vunpack.c.l.b16 %v2505
    %v3964 = vunpack.c.h.b16 %v2505
    %v3965 = vunpack.c.l.b16 %v2506
    %v3966 = vunpack.c.h.b16 %v2506
    %v3967 = vunpack.c.l.b16 %v2507
    %v3968 = vunpack.c.h.b16 %v2507
    %v3969 = vunpack.c.l.b16 %v2508
    %v3970 = vunpack.c.h.b16 %v2508
    %v3971 = vunpack.c.l.b16 %v2509
    %v3972 = vunpack.c.h.b16 %v2509
    %v3973 = vunpack.c.l.b16 %v2510
    %v3974 = vunpack.c.h.b16 %v2510
    %v3975 = vunpack.c.l.b16 %v2511
    %v3976 = vunpack.c.h.b16 %v2511
    %v3977 = vunpack.c.l.b16 %v2512
    %v3978 = vunpack.c.h.b16 %v2512
    %v3979 = vunpack.c.l.b16 %v2513
    %v3980 = vunpack.c.h.b16 %v2513
    %v3981 = vunpack.c.l.b16 %v2514
    %v3982 = vunpack.c.h.b16 %v2514
    %v3983 = vunpack.c.l.b16 %v2515
    %v3984 = vunpack.c.h.b16 %v2515
    %v3985 = vunpack.c.l.b16 %v2516
    %v3986 = vunpack.c.h.b16 %v2516
    %v3987 = vunpack.c.l.b16 %v2517
    %v3988 = vunpack.c.h.b16 %v2517
    %v3989 = vunpack.c.l.b16 %v2518
    %v3990 = vunpack.c.h.b16 %v2518
    %v3991 = vunpack.c.l.b16 %v2519
    %v3992 = vunpack.c.h.b16 %v2519
    %v3993 = vunpack.c.l.b16 %v2520
    %v3994 = vunpack.c.h.b16 %v2520
    %v3995 = vunpack.c.l.b16 %v2521
    %v3996 = vunpack.c.h.b16 %v2521
    %v3997 = vunpack.c.l.b16 %v2522
    %v3998 = vunpack.c.h.b16 %v2522
    %v3999 = vunpack.c.l.b16 %v2523
    %v4000 = vunpack.c.h.b16 %v2523
    %v4001 = vunpack.c.l.b16 %v2524
    %v4002 = vunpack.c.h.b16 %v2524
    %v4003 = vunpack.c.l.b16 %v2525
    %v4004 = vunpack.c.h.b16 %v2525
    %v4005 = vunpack.c.l.b16 %v2526
    %v4006 = vunpack.c.h.b16 %v2526
    %v4007 = vunpack.c.l.b16 %v2527
    %v4008 = vunpack.c.h.b16 %v2527
    %v4009 = vunpack.c.l.b16 %v2528
    %v4010 = vunpack.c.h.b16 %v2528
    %v4011 = vunpack.c.l.b16 %v2529
    %v4012 = vunpack.c.h.b16 %v2529
    %v4013 = vunpack.c.l.b16 %v2530
    %v4014 = vunpack.c.h.b16 %v2530
    %v4015 = vunpack.c.l.b16 %v2531
    %v4016 = vunpack.c.h.b16 %v2531
    %v4017 = vunpack.c.l.b16 %v2532
    %v4018 = vunpack.c.h.b16 %v2532
    %v4019 = vunpack.c.l.b16 %v2533
    %v4020 = vunpack.c.h.b16 %v2533
    %v4021 = vunpack.c.l.b16 %v2534
    %v4022 = vunpack.c.h.b16 %v2534
    %v4023 = vunpack.c.l.b16 %v2535
    %v4024 = vunpack.c.h.b16 %v2535
    %v4025 = vunpack.c.l.b16 %v2536
    %v4026 = vunpack.c.h.b16 %v2536
    %v4027 = vunpack.c.l.b16 %v2537
    %v4028 = vunpack.c.h.b16 %v2537
    %v4029 = vunpack.c.l.b16 %v2538
    %v4030 = vunpack.c.h.b16 %v2538
    %v4031 = vunpack.c.l.b16 %v2539
    %v4032 = vunpack.c.h.b16 %v2539
    %v4033 = vunpack.c.l.b16 %v2540
    %v4034 = vunpack.c.h.b16 %v2540
    %v4035 = vunpack.c.l.b16 %v2541
    %v4036 = vunpack.c.h.b16 %v2541
    %v4037 = vunpack.c.l.b16 %v2542
    %v4038 = vunpack.c.h.b16 %v2542
    %v4039 = vunpack.c.l.b16 %v2543
    %v4040 = vunpack.c.h.b16 %v2543
    %v4041 = vunpack.c.l.b16 %v2544
    %v4042 = vunpack.c.h.b16 %v2544
    %v4043 = vunpack.c.l.b16 %v2545
    %v4044 = vunpack.c.h.b16 %v2545
    %v4045 = vunpack.c.l.b16 %v2546
    %v4046 = vunpack.c.h.b16 %v2546
    %v4047 = vunpack.c.l.b16 %v2547
    %v4048 = vunpack.c.h.b16 %v2547
    %v4049 = vunpack.c.l.b16 %v2548
    %v4050 = vunpack.c.h.b16 %v2548
    %v4051 = vunpack.c.l.b16 %v2549
    %v4052 = vunpack.c.h.b16 %v2549
    %v4053 = vunpack.c.l.b16 %v2550
    %v4054 = vunpack.c.h.b16 %v2550
    %v4055 = vunpack.c.l.b16 %v2551
    %v4056 = vunpack.c.h.b16 %v2551
    %v4057 = vunpack.c.l.b16 %v2552
    %v4058 = vunpack.c.h.b16 %v2552
    %v4059 = vunpack.c.l.b16 %v2553
    %v4060 = vunpack.c.h.b16 %v2553
    %v4061 = vunpack.c.l.b16 %v2554
    %v4062 = vunpack.c.h.b16 %v2554
    %v4063 = vunpack.c.l.b16 %v2555
    %v4064 = vunpack.c.h.b16 %v2555
    %v4065 = vunpack.c.l.b16 %v2556
    %v4066 = vunpack.c.h.b16 %v2556
    %v4067 = vunpack.c.l.b16 %v2557
    %v4068 = vunpack.c.h.b16 %v2557
    %v4069 = vunpack.c.l.b16 %v2558
    %v4070 = vunpack.c.h.b16 %v2558
    %v4071 = vunpack.c.l.b16 %v2559
    %v4072 = vunpack.c.h.b16 %v2559
    %v4073 = vunpack.c.l.b16 %v2560
    %v4074 = vunpack.c.h.b16 %v2560
    %v4075 = vunpack.c.l.b16 %v2561
    %v4076 = vunpack.c.h.b16 %v2561
    %v4077 = vunpack.c.l.b16 %v2562
    %v4078 = vunpack.c.h.b16 %v2562
    %v4079 = vunpack.c.l.b16 %v2563
    %v4080 = vunpack.c.h.b16 %v2563
    %v4081 = vunpack.c.l.b16 %v2564
    %v4082 = vunpack.c.h.b16 %v2564
    %v4083 = vunpack.c.l.b16 %v2565
    %v4084 = vunpack.c.h.b16 %v2565
    %v4085 = vunpack.c.l.b16 %v2566
    %v4086 = vunpack.c.h.b16 %v2566
    %v4087 = vunpack.c.l.b16 %v2567
    %v4088 = vunpack.c.h.b16 %v2567
    %v4089 = vunpack.c.l.b16 %v2568
    %v4090 = vunpack.c.h.b16 %v2568
    %v4091 = vunpack.c.l.b16 %v2569
    %v4092 = vunpack.c.h.b16 %v2569
    %v4093 = vunpack.c.l.b16 %v2570
    %v4094 = vunpack.c.h.b16 %v2570
    %v4095 = vunpack.c.l.b16 %v2571
    %v4096 = vunpack.c.h.b16 %v2571
    %v4097 = vunpack.c.l.b16 %v2572
    %v4098 = vunpack.c.h.b16 %v2572
    %v4099 = vunpack.c.l.b16 %v2573
    %v4100 = vunpack.c.h.b16 %v2573
    %v4101 = vunpack.c.l.b16 %v2574
    %v4102 = vunpack.c.h.b16 %v2574
    %v4103 = vunpack.c.l.b16 %v2575
    %v4104 = vunpack.c.h.b16 %v2575
    %v4105 = vunpack.c.l.b16 %v2576
    %v4106 = vunpack.c.h.b16 %v2576
    %v4107 = vunpack.c.l.b16 %v2577
    %v4108 = vunpack.c.h.b16 %v2577
    %v4109 = vunpack.c.l.b16 %v2578
    %v4110 = vunpack.c.h.b16 %v2578
    %v4111 = vunpack.c.l.b16 %v2579
    %v4112 = vunpack.c.h.b16 %v2579
    %v4113 = vunpack.c.l.b16 %v2580
    %v4114 = vunpack.c.h.b16 %v2580
    %v4115 = vunpack.c.l.b16 %v2581
    %v4116 = vunpack.c.h.b16 %v2581
    %v4117 = vunpack.c.l.b16 %v2582
    %v4118 = vunpack.c.h.b16 %v2582
    %v4119 = vunpack.c.l.b16 %v2583
    %v4120 = vunpack.c.h.b16 %v2583
    %v4121 = vunpack.c.l.b16 %v2584
    %v4122 = vunpack.c.h.b16 %v2584
    %v4123 = vunpack.c.l.b16 %v2585
    %v4124 = vunpack.c.h.b16 %v2585
    %v4125 = vunpack.c.l.b16 %v2586
    %v4126 = vunpack.c.h.b16 %v2586
    %v4127 = vunpack.c.l.b16 %v2587
    %v4128 = vunpack.c.h.b16 %v2587
    %v4129 = vunpack.c.l.b16 %v2588
    %v4130 = vunpack.c.h.b16 %v2588
    %v4131 = vunpack.c.l.b16 %v2589
    %v4132 = vunpack.c.h.b16 %v2589
    %v4133 = vunpack.c.l.b16 %v2590
    %v4134 = vunpack.c.h.b16 %v2590
    %v4135 = vunpack.c.l.b16 %v2591
    %v4136 = vunpack.c.h.b16 %v2591
    %v4137 = vunpack.c.l.b16 %v2592
    %v4138 = vunpack.c.h.b16 %v2592
    %v4139 = vunpack.c.l.b16 %v2593
    %v4140 = vunpack.c.h.b16 %v2593
    %v4141 = vunpack.c.l.b16 %v2594
    %v4142 = vunpack.c.h.b16 %v2594
    %v4143 = vunpack.c.l.b16 %v2595
    %v4144 = vunpack.c.h.b16 %v2595
    %v4145 = vunpack.c.l.b16 %v2596
    %v4146 = vunpack.c.h.b16 %v2596
    %v4147 = vunpack.c.l.b16 %v2597
    %v4148 = vunpack.c.h.b16 %v2597
    %v4149 = vunpack.c.l.b16 %v2598
    %v4150 = vunpack.c.h.b16 %v2598
    %v4151 = vunpack.c.l.b16 %v2599
    %v4152 = vunpack.c.h.b16 %v2599
    %v4153 = vunpack.c.l.b16 %v2600
    %v4154 = vunpack.c.h.b16 %v2600
    %v4155 = vunpack.c.l.b16 %v2601
    %v4156 = vunpack.c.h.b16 %v2601
    %v4157 = vunpack.c.l.b16 %v2602
    %v4158 = vunpack.c.h.b16 %v2602
    %v4159 = vunpack.c.l.b16 %v2603
    %v4160 = vunpack.c.h.b16 %v2603
    %v4161 = vunpack.c.l.b16 %v2604
    %v4162 = vunpack.c.h.b16 %v2604
    %v4163 = vunpack.c.l.b16 %v2605
    %v4164 = vunpack.c.h.b16 %v2605
    %v4165 = vunpack.c.l.b16 %v2606
    %v4166 = vunpack.c.h.b16 %v2606
    %v4167 = vunpack.c.l.b16 %v2607
    %v4168 = vunpack.c.h.b16 %v2607
    %v4169 = vunpack.c.l.b16 %v2608
    %v4170 = vunpack.c.h.b16 %v2608
    %v4171 = vunpack.c.l.b16 %v2609
    %v4172 = vunpack.c.h.b16 %v2609
    %v4173 = vunpack.c.l.b16 %v2610
    %v4174 = vunpack.c.h.b16 %v2610
    %v4175 = vunpack.c.l.b16 %v2611
    %v4176 = vunpack.c.h.b16 %v2611
    %v4177 = vunpack.c.l.b16 %v2612
    %v4178 = vunpack.c.h.b16 %v2612
    %v4179 = vunpack.c.l.b16 %v2613
    %v4180 = vunpack.c.h.b16 %v2613
    %v4181 = vunpack.c.l.b16 %v2614
    %v4182 = vunpack.c.h.b16 %v2614
    %v4183 = vunpack.c.l.b16 %v2615
    %v4184 = vunpack.c.h.b16 %v2615
    %v4185 = vunpack.c.l.b16 %v2616
    %v4186 = vunpack.c.h.b16 %v2616
    %v4187 = vunpack.c.l.b16 %v2617
    %v4188 = vunpack.c.h.b16 %v2617
    %v4189 = vunpack.c.l.b16 %v2618
    %v4190 = vunpack.c.h.b16 %v2618
    %v4191 = vunpack.c.l.b16 %v2619
    %v4192 = vunpack.c.h.b16 %v2619
    %v4193 = vunpack.c.l.b16 %v2620
    %v4194 = vunpack.c.h.b16 %v2620
    %v4195 = vunpack.c.l.b16 %v2621
    %v4196 = vunpack.c.h.b16 %v2621
    %v4197 = vunpack.c.l.b16 %v2622
    %v4198 = vunpack.c.h.b16 %v2622
    %v4199 = vunpack.c.l.b16 %v2623
    %v4200 = vunpack.c.h.b16 %v2623
    %v4201 = vunpack.c.l.b16 %v2624
    %v4202 = vunpack.c.h.b16 %v2624
    %v4203 = vunpack.c.l.b16 %v2625
    %v4204 = vunpack.c.h.b16 %v2625
    %v4205 = vunpack.c.l.b16 %v2626
    %v4206 = vunpack.c.h.b16 %v2626
    %v4207 = vunpack.c.l.b16 %v2627
    %v4208 = vunpack.c.h.b16 %v2627
    %v4209 = vunpack.c.l.b16 %v2628
    %v4210 = vunpack.c.h.b16 %v2628
    %v4211 = vunpack.c.l.b16 %v2629
    %v4212 = vunpack.c.h.b16 %v2629
    %v4213 = vunpack.c.l.b16 %v2630
    %v4214 = vunpack.c.h.b16 %v2630
    %v4215 = vunpack.c.l.b16 %v2631
    %v4216 = vunpack.c.h.b16 %v2631
    %v4217 = vunpack.c.l.b16 %v2632
    %v4218 = vunpack.c.h.b16 %v2632
    %v4219 = vunpack.c.l.b16 %v2633
    %v4220 = vunpack.c.h.b16 %v2633
    %v4221 = vunpack.c.l.b16 %v2634
    %v4222 = vunpack.c.h.b16 %v2634
    %v4223 = vunpack.c.l.b16 %v2635
    %v4224 = vunpack.c.h.b16 %v2635
    %v4225 = vunpack.c.l.b16 %v2636
    %v4226 = vunpack.c.h.b16 %v2636
    %v4227 = vunpack.c.l.b16 %v2637
    %v4228 = vunpack.c.h.b16 %v2637
    %v4229 = vunpack.c.l.b16 %v2638
    %v4230 = vunpack.c.h.b16 %v2638
    %v4231 = vunpack.c.l.b16 %v2639
    %v4232 = vunpack.c.h.b16 %v2639
    %v4233 = vunpack.c.l.b16 %v2640
    %v4234 = vunpack.c.h.b16 %v2640
    %v4235 = vunpack.c.l.b16 %v2641
    %v4236 = vunpack.c.h.b16 %v2641
    %v4237 = vunpack.c.l.b16 %v2642
    %v4238 = vunpack.c.h.b16 %v2642
    %v4239 = vunpack.c.l.b16 %v2643
    %v4240 = vunpack.c.h.b16 %v2643
    %v4241 = vunpack.c.l.b16 %v2644
    %v4242 = vunpack.c.h.b16 %v2644
    %v4243 = vunpack.c.l.b16 %v2645
    %v4244 = vunpack.c.h.b16 %v2645
    %v4245 = vunpack.c.l.b16 %v2646
    %v4246 = vunpack.c.h.b16 %v2646
    %v4247 = vunpack.c.l.b16 %v2647
    %v4248 = vunpack.c.h.b16 %v2647
    %v4249 = vunpack.c.l.b16 %v2648
    %v4250 = vunpack.c.h.b16 %v2648
    %v4251 = vunpack.c.l.b16 %v2649
    %v4252 = vunpack.c.h.b16 %v2649
    %v4253 = vunpack.c.l.b16 %v2650
    %v4254 = vunpack.c.h.b16 %v2650
    %v4255 = vunpack.c.l.b16 %v2651
    %v4256 = vunpack.c.h.b16 %v2651
    %v4257 = vunpack.c.l.b16 %v2652
    %v4258 = vunpack.c.h.b16 %v2652
    %v4259 = vunpack.c.l.b16 %v2653
    %v4260 = vunpack.c.h.b16 %v2653
    %v4261 = vunpack.c.l.b16 %v2654
    %v4262 = vunpack.c.h.b16 %v2654
    %v4263 = vunpack.c.l.b16 %v2655
    %v4264 = vunpack.c.h.b16 %v2655
    %v4265 = vunpack.c.l.b16 %v2656
    %v4266 = vunpack.c.h.b16 %v2656
    %v4267 = vunpack.c.l.b16 %v2657
    %v4268 = vunpack.c.h.b16 %v2657
    %v4269 = vunpack.c.l.b16 %v2658
    %v4270 = vunpack.c.h.b16 %v2658
    %v4271 = vunpack.c.l.b16 %v2659
    %v4272 = vunpack.c.h.b16 %v2659
    %v4273 = vunpack.c.l.b16 %v2660
    %v4274 = vunpack.c.h.b16 %v2660
    %v4275 = vunpack.c.l.b16 %v2661
    %v4276 = vunpack.c.h.b16 %v2661
    %v4277 = vunpack.c.l.b16 %v2662
    %v4278 = vunpack.c.h.b16 %v2662
    %v4279 = vunpack.c.l.b16 %v2663
    %v4280 = vunpack.c.h.b16 %v2663
    %v4281 = vunpack.c.l.b16 %v2664
    %v4282 = vunpack.c.h.b16 %v2664
    %v4283 = vunpack.c.l.b16 %v2665
    %v4284 = vunpack.c.h.b16 %v2665
    %v4285 = vunpack.c.l.b16 %v2666
    %v4286 = vunpack.c.h.b16 %v2666
    %v4287 = vunpack.c.l.b16 %v2667
    %v4288 = vunpack.c.h.b16 %v2667
    %v4289 = vunpack.c.l.b16 %v2668
    %v4290 = vunpack.c.h.b16 %v2668
    %v4291 = vunpack.c.l.b16 %v2669
    %v4292 = vunpack.c.h.b16 %v2669
    %v4293 = vunpack.c.l.b16 %v2670
    %v4294 = vunpack.c.h.b16 %v2670
    %v4295 = vunpack.c.l.b16 %v2671
    %v4296 = vunpack.c.h.b16 %v2671
    %v4297 = vunpack.c.l.b16 %v2672
    %v4298 = vunpack.c.h.b16 %v2672
    %v4299 = vunpack.c.l.b16 %v2673
    %v4300 = vunpack.c.h.b16 %v2673
    %v4301 = vunpack.c.l.b16 %v2674
    %v4302 = vunpack.c.h.b16 %v2674
    %v4303 = vunpack.c.l.b16 %v2675
    %v4304 = vunpack.c.h.b16 %v2675
    %v4305 = vunpack.c.l.b16 %v2676
    %v4306 = vunpack.c.h.b16 %v2676
    %v4307 = vunpack.c.l.b16 %v2677
    %v4308 = vunpack.c.h.b16 %v2677
    %v4309 = vunpack.c.l.b16 %v2678
    %v4310 = vunpack.c.h.b16 %v2678
    %v4311 = vunpack.c.l.b16 %v2679
    %v4312 = vunpack.c.h.b16 %v2679
    %v4313 = vunpack.c.l.b16 %v2680
    %v4314 = vunpack.c.h.b16 %v2680
    %v4315 = vunpack.c.l.b16 %v2681
    %v4316 = vunpack.c.h.b16 %v2681
    %v4317 = vunpack.c.l.b16 %v2682
    %v4318 = vunpack.c.h.b16 %v2682
    %v4319 = vunpack.c.l.b16 %v2683
    %v4320 = vunpack.c.h.b16 %v2683
    %v4321 = vunpack.c.l.b16 %v2684
    %v4322 = vunpack.c.h.b16 %v2684
    %v4323 = vunpack.c.l.b16 %v2685
    %v4324 = vunpack.c.h.b16 %v2685
    %v4325 = vunpack.c.l.b16 %v2686
    %v4326 = vunpack.c.h.b16 %v2686
    %v4327 = vunpack.c.l.b16 %v2687
    %v4328 = vunpack.c.h.b16 %v2687
    %v4329 = vunpack.c.l.b16 %v2688
    %v4330 = vunpack.c.h.b16 %v2688
    %v4331 = vunpack.c.l.b16 %v2689
    %v4332 = vunpack.c.h.b16 %v2689
    %v4333 = vunpack.c.l.b16 %v2690
    %v4334 = vunpack.c.h.b16 %v2690
    %v4335 = vunpack.c.l.b16 %v2691
    %v4336 = vunpack.c.h.b16 %v2691
    %v4337 = vunpack.c.l.b16 %v2692
    %v4338 = vunpack.c.h.b16 %v2692
    %v4339 = vunpack.c.l.b16 %v2693
    %v4340 = vunpack.c.h.b16 %v2693
    %v4341 = vunpack.c.l.b16 %v2694
    %v4342 = vunpack.c.h.b16 %v2694
    %v4343 = vunpack.c.l.b16 %v2695
    %v4344 = vunpack.c.h.b16 %v2695
    %v4345 = vunpack.c.l.b16 %v2696
    %v4346 = vunpack.c.h.b16 %v2696
    %v4347 = vunpack.c.l.b16 %v2697
    %v4348 = vunpack.c.h.b16 %v2697
    %v4349 = vunpack.c.l.b16 %v2698
    %v4350 = vunpack.c.h.b16 %v2698
    %v4351 = vunpack.c.l.b16 %v2699
    %v4352 = vunpack.c.h.b16 %v2699
    %v4353 = vunpack.c.l.b16 %v2700
    %v4354 = vunpack.c.h.b16 %v2700
    %v4355 = vunpack.c.l.b16 %v2701
    %v4356 = vunpack.c.h.b16 %v2701
    %v4357 = vunpack.c.l.b16 %v2702
    %v4358 = vunpack.c.h.b16 %v2702
    %v4359 = vunpack.c.l.b16 %v2703
    %v4360 = vunpack.c.h.b16 %v2703
    %v4361 = vunpack.c.l.b16 %v2704
    %v4362 = vunpack.c.h.b16 %v2704
    %v4363 = vunpack.c.l.b16 %v2705
    %v4364 = vunpack.c.h.b16 %v2705
    %v4365 = vunpack.c.l.b16 %v2706
    %v4366 = vunpack.c.h.b16 %v2706
    %v4367 = vunpack.c.l.b16 %v2707
    %v4368 = vunpack.c.h.b16 %v2707
    %v4369 = vunpack.c.l.b16 %v2708
    %v4370 = vunpack.c.h.b16 %v2708
    %v4371 = vunpack.c.l.b16 %v2709
    %v4372 = vunpack.c.h.b16 %v2709
    %v4373 = vunpack.c.l.b16 %v2710
    %v4374 = vunpack.c.h.b16 %v2710
    %v4375 = vunpack.c.l.b16 %v2711
    %v4376 = vunpack.c.h.b16 %v2711
    %v4377 = vunpack.c.l.b16 %v2712
    %v4378 = vunpack.c.h.b16 %v2712
    %v4379 = vunpack.c.l.b16 %v2713
    %v4380 = vunpack.c.h.b16 %v2713
    %v4381 = vunpack.c.l.b16 %v2714
    %v4382 = vunpack.c.h.b16 %v2714
    %v4383 = vunpack.c.l.b16 %v2715
    %v4384 = vunpack.c.h.b16 %v2715
    %v4385 = vunpack.c.l.b16 %v2716
    %v4386 = vunpack.c.h.b16 %v2716
    %v4387 = vunpack.c.l.b16 %v2717
    %v4388 = vunpack.c.h.b16 %v2717
    %v4389 = vunpack.c.l.b16 %v2718
    %v4390 = vunpack.c.h.b16 %v2718
    %v4391 = vunpack.c.l.b16 %v2719
    %v4392 = vunpack.c.h.b16 %v2719
    %v4393 = vunpack.c.l.b16 %v2720
    %v4394 = vunpack.c.h.b16 %v2720
    %v4395 = vunpack.c.l.b16 %v2721
    %v4396 = vunpack.c.h.b16 %v2721
    %v4397 = vunpack.c.l.b16 %v2722
    %v4398 = vunpack.c.h.b16 %v2722
    %v4399 = vunpack.c.l.b16 %v2723
    %v4400 = vunpack.c.h.b16 %v2723
    %v4401 = vunpack.c.l.b16 %v2724
    %v4402 = vunpack.c.h.b16 %v2724
    %v4403 = vunpack.c.l.b16 %v2725
    %v4404 = vunpack.c.h.b16 %v2725
    %v4405 = vunpack.c.l.b16 %v2726
    %v4406 = vunpack.c.h.b16 %v2726
    %v4407 = vunpack.c.l.b16 %v2727
    %v4408 = vunpack.c.h.b16 %v2727
    %v4409 = vunpack.c.l.b16 %v2728
    %v4410 = vunpack.c.h.b16 %v2728
    %v4411 = vunpack.c.l.b16 %v2729
    %v4412 = vunpack.c.h.b16 %v2729
    %v4413 = vunpack.c.l.b16 %v2730
    %v4414 = vunpack.c.h.b16 %v2730
    %v4415 = vunpack.c.l.b16 %v2731
    %v4416 = vunpack.c.h.b16 %v2731
    %v4417 = vunpack.c.l.b16 %v2732
    %v4418 = vunpack.c.h.b16 %v2732
    %v4419 = vunpack.c.l.b16 %v2733
    %v4420 = vunpack.c.h.b16 %v2733
    %v4421 = vunpack.c.l.b16 %v2734
    %v4422 = vunpack.c.h.b16 %v2734
    %v4423 = vunpack.c.l.b16 %v2735
    %v4424 = vunpack.c.h.b16 %v2735
    %v4425 = vunpack.c.l.b16 %v2736
    %v4426 = vunpack.c.h.b16 %v2736
    %v4427 = vunpack.c.l.b16 %v2737
    %v4428 = vunpack.c.h.b16 %v2737
    %v4429 = vunpack.c.l.b16 %v2738
    %v4430 = vunpack.c.h.b16 %v2738
    %v4431 = vunpack.c.l.b16 %v2739
    %v4432 = vunpack.c.h.b16 %v2739
    %v4433 = vunpack.c.l.b16 %v2740
    %v4434 = vunpack.c.h.b16 %v2740
    %v4435 = vunpack.c.l.b16 %v2741
    %v4436 = vunpack.c.h.b16 %v2741
    %v4437 = vunpack.c.l.b16 %v2742
    %v4438 = vunpack.c.h.b16 %v2742
    %v4439 = vunpack.c.l.b16 %v2743
    %v4440 = vunpack.c.h.b16 %v2743
    %v4441 = vunpack.c.l.b16 %v2744
    %v4442 = vunpack.c.h.b16 %v2744
    %v4443 = vunpack.c.l.b16 %v2745
    %v4444 = vunpack.c.h.b16 %v2745
    %v4445 = vunpack.c.l.b16 %v2746
    %v4446 = vunpack.c.h.b16 %v2746
    %v4447 = vunpack.c.l.b16 %v2747
    %v4448 = vunpack.c.h.b16 %v2747
    %v4449 = vunpack.c.l.b16 %v2748
    %v4450 = vunpack.c.h.b16 %v2748
    %v4451 = vunpack.c.l.b16 %v2749
    %v4452 = vunpack.c.h.b16 %v2749
    %v4453 = vunpack.c.l.b16 %v2750
    %v4454 = vunpack.c.h.b16 %v2750
    %v4455 = vunpack.c.l.b16 %v2751
    %v4456 = vunpack.c.h.b16 %v2751
    %v4457 = vunpack.c.l.b16 %v2752
    %v4458 = vunpack.c.h.b16 %v2752
    %v4459 = vunpack.c.l.b16 %v2753
    %v4460 = vunpack.c.h.b16 %v2753
    %v4461 = vunpack.c.l.b16 %v2754
    %v4462 = vunpack.c.h.b16 %v2754
    %v4463 = vunpack.c.l.b16 %v2755
    %v4464 = vunpack.c.h.b16 %v2755
    %v4465 = vunpack.c.l.b16 %v2756
    %v4466 = vunpack.c.h.b16 %v2756
    %v4467 = vunpack.c.l.b16 %v2757
    %v4468 = vunpack.c.h.b16 %v2757
    %v4469 = vunpack.c.l.b16 %v2758
    %v4470 = vunpack.c.h.b16 %v2758
    %v4471 = vunpack.c.l.b16 %v2759
    %v4472 = vunpack.c.h.b16 %v2759
    %v4473 = vunpack.c.l.b16 %v2760
    %v4474 = vunpack.c.h.b16 %v2760
    %v4475 = vunpack.c.l.b16 %v2761
    %v4476 = vunpack.c.h.b16 %v2761
    %v4477 = vunpack.c.l.b16 %v2762
    %v4478 = vunpack.c.h.b16 %v2762
    %v4479 = vunpack.c.l.b16 %v2763
    %v4480 = vunpack.c.h.b16 %v2763
    %v4481 = vunpack.c.l.b16 %v2764
    %v4482 = vunpack.c.h.b16 %v2764
    %v4483 = vunpack.c.l.b16 %v2765
    %v4484 = vunpack.c.h.b16 %v2765
    %v4485 = vunpack.c.l.b16 %v2766
    %v4486 = vunpack.c.h.b16 %v2766
    %v4487 = vunpack.c.l.b16 %v2767
    %v4488 = vunpack.c.h.b16 %v2767
    %v4489 = vunpack.c.l.b16 %v2768
    %v4490 = vunpack.c.h.b16 %v2768
    %v4491 = vunpack.c.l.b16 %v2769
    %v4492 = vunpack.c.h.b16 %v2769
    %v4493 = vunpack.c.l.b16 %v2770
    %v4494 = vunpack.c.h.b16 %v2770
    %v4495 = vunpack.c.l.b16 %v2771
    %v4496 = vunpack.c.h.b16 %v2771
    %v4497 = vunpack.c.l.b16 %v2772
    %v4498 = vunpack.c.h.b16 %v2772
    %v4499 = vunpack.c.l.b16 %v2773
    %v4500 = vunpack.c.h.b16 %v2773
    %v4501 = vunpack.c.l.b16 %v2774
    %v4502 = vunpack.c.h.b16 %v2774
    %v4503 = vunpack.c.l.b16 %v2775
    %v4504 = vunpack.c.h.b16 %v2775
    %v4505 = vunpack.c.l.b16 %v2776
    %v4506 = vunpack.c.h.b16 %v2776
    %v4507 = vunpack.c.l.b16 %v2777
    %v4508 = vunpack.c.h.b16 %v2777
    %v4509 = vunpack.c.l.b16 %v2778
    %v4510 = vunpack.c.h.b16 %v2778
    %v4511 = vunpack.c.l.b16 %v2779
    %v4512 = vunpack.c.h.b16 %v2779
    %v4513 = vunpack.c.l.b16 %v2780
    %v4514 = vunpack.c.h.b16 %v2780
    %v4515 = vunpack.c.l.b16 %v2781
    %v4516 = vunpack.c.h.b16 %v2781
    %v4517 = vunpack.c.l.b16 %v2782
    %v4518 = vunpack.c.h.b16 %v2782
    %v4519 = vunpack.c.l.b16 %v2783
    %v4520 = vunpack.c.h.b16 %v2783
    %v4521 = vunpack.c.l.b16 %v2784
    %v4522 = vunpack.c.h.b16 %v2784
    %v4523 = vunpack.c.l.b16 %v2785
    %v4524 = vunpack.c.h.b16 %v2785
    %v4525 = vunpack.c.l.b16 %v2786
    %v4526 = vunpack.c.h.b16 %v2786
    %v4527 = vunpack.c.l.b16 %v2787
    %v4528 = vunpack.c.h.b16 %v2787
    %v4529 = vunpack.c.l.b16 %v2788
    %v4530 = vunpack.c.h.b16 %v2788
    %v4531 = vunpack.c.l.b16 %v2789
    %v4532 = vunpack.c.h.b16 %v2789
    %v4533 = vunpack.c.l.b16 %v2790
    %v4534 = vunpack.c.h.b16 %v2790
    %v4535 = vunpack.c.l.b16 %v2791
    %v4536 = vunpack.c.h.b16 %v2791
    %v4537 = vunpack.c.l.b16 %v2792
    %v4538 = vunpack.c.h.b16 %v2792
    %v4539 = vunpack.c.l.b16 %v2793
    %v4540 = vunpack.c.h.b16 %v2793
    %v4541 = vunpack.c.l.b16 %v2794
    %v4542 = vunpack.c.h.b16 %v2794
    %v4543 = vunpack.c.l.b16 %v2795
    %v4544 = vunpack.c.h.b16 %v2795
    %v4545 = vunpack.c.l.b16 %v2796
    %v4546 = vunpack.c.h.b16 %v2796
    %v4547 = vunpack.c.l.b16 %v2797
    %v4548 = vunpack.c.h.b16 %v2797
    %v4549 = vunpack.c.l.b16 %v2798
    %v4550 = vunpack.c.h.b16 %v2798
    %v4551 = vunpack.c.l.b16 %v2799
    %v4552 = vunpack.c.h.b16 %v2799
    %v4553 = vunpack.c.l.b16 %v2800
    %v4554 = vunpack.c.h.b16 %v2800
    %v4555 = vunpack.c.l.b16 %v2801
    %v4556 = vunpack.c.h.b16 %v2801
    %v4557 = vunpack.c.l.b16 %v2802
    %v4558 = vunpack.c.h.b16 %v2802
    %v4559 = vunpack.c.l.b16 %v2803
    %v4560 = vunpack.c.h.b16 %v2803
    %v4561 = vunpack.c.l.b16 %v2804
    %v4562 = vunpack.c.h.b16 %v2804
    %v4563 = vpack.c.b16 %v3423, %v3411
    %v4564 = vpack.c.b16 %v3424, %v3412
    %v4565 = vpack.c.b16 %v3425, %v3413
    %v4566 = vpack.c.b16 %v3426, %v3414
    %v4567 = vpack.c.b16 %v3427, %v3415
    %v4568 = vpack.c.b16 %v3428, %v3416
    %v4569 = vpack.c.b16 %v3429, %v3417
    %v4570 = vpack.c.b16 %v3430, %v3418
    %v4571 = vpack.c.b16 %v3431, %v3419
    %v4572 = vpack.c.b16 %v3432, %v3420
    %v4573 = vpack.c.b16 %v3433, %v3421
    %v4574 = vpack.c.b16 %v3434, %v3422
    %v4575 = vpack.c.b16 %v3447, %v3435
    %v4576 = vpack.c.b16 %v3448, %v3436
    %v4577 = vpack.c.b16 %v3449, %v3437
    %v4578 = vpack.c.b16 %v3450, %v3438
    %v4579 = vpack.c.b16 %v3451, %v3439
    %v4580 = vpack.c.b16 %v3452, %v3440
    %v4581 = vpack.c.b16 %v3453, %v3441
    %v4582 = vpack.c.b16 %v3454, %v3442
    %v4583 = vpack.c.b16 %v3455, %v3443
    %v4584 = vpack.c.b16 %v3456, %v3444
    %v4585 = vpack.c.b16 %v3457, %v3445
    %v4586 = vpack.c.b16 %v3458, %v3446
    %v4587 = vpack.c.b16 %v3471, %v3459
    %v4588 = vpack.c.b16 %v3472, %v3460
    %v4589 = vpack.c.b16 %v3473, %v3461
    %v4590 = vpack.c.b16 %v3474, %v3462
    %v4591 = vpack.c.b16 %v3475, %v3463
    %v4592 = vpack.c.b16 %v3476, %v3464
    %v4593 = vpack.c.b16 %v3477, %v3465
    %v4594 = vpack.c.b16 %v3478, %v3466
    %v4595 = vpack.c.b16 %v3479, %v3467
    %v4596 = vpack.c.b16 %v3480, %v3468
    %v4597 = vpack.c.b16 %v3481, %v3469
    %v4598 = vpack.c.b16 %v3482, %v3470
    %v4599 = vpack.c.b16 %v3495, %v3483
    %v4600 = vpack.c.b16 %v3496, %v3484
    %v4601 = vpack.c.b16 %v3497, %v3485
    %v4602 = vpack.c.b16 %v3498, %v3486
    %v4603 = vpack.c.b16 %v3499, %v3487
    %v4604 = vpack.c.b16 %v3500, %v3488
    %v4605 = vpack.c.b16 %v3501, %v3489
    %v4606 = vpack.c.b16 %v3502, %v3490
    %v4607 = vpack.c.b16 %v3503, %v3491
    %v4608 = vpack.c.b16 %v3504, %v3492
    %v4609 = vpack.c.b16 %v3505, %v3493
    %v4610 = vpack.c.b16 %v3506, %v3494
    %v4611 = vpack.c.b16 %v3519, %v3507
    %v4612 = vpack.c.b16 %v3520, %v3508
    %v4613 = vpack.c.b16 %v3521, %v3509
    %v4614 = vpack.c.b16 %v3522, %v3510
    %v4615 = vpack.c.b16 %v3523, %v3511
    %v4616 = vpack.c.b16 %v3524, %v3512
    %v4617 = vpack.c.b16 %v3525, %v3513
    %v4618 = vpack.c.b16 %v3526, %v3514
    %v4619 = vpack.c.b16 %v3527, %v3515
    %v4620 = vpack.c.b16 %v3528, %v3516
    %v4621 = vpack.c.b16 %v3529, %v3517
    %v4622 = vpack.c.b16 %v3530, %v3518
    %v4623 = vpack.c.b16 %v3543, %v3531
    %v4624 = vpack.c.b16 %v3544, %v3532
    %v4625 = vpack.c.b16 %v3545, %v3533
    %v4626 = vpack.c.b16 %v3546, %v3534
    %v4627 = vpack.c.b16 %v3547, %v3535
    %v4628 = vpack.c.b16 %v3548, %v3536
    %v4629 = vpack.c.b16 %v3549, %v3537
    %v4630 = vpack.c.b16 %v3550, %v3538
    %v4631 = vpack.c.b16 %v3551, %v3539
    %v4632 = vpack.c.b16 %v3552, %v3540
    %v4633 = vpack.c.b16 %v3553, %v3541
    %v4634 = vpack.c.b16 %v3554, %v3542
    %v4635 = vpack.c.b16 %v3567, %v3555
    %v4636 = vpack.c.b16 %v3568, %v3556
    %v4637 = vpack.c.b16 %v3569, %v3557
    %v4638 = vpack.c.b16 %v3570, %v3558
    %v4639 = vpack.c.b16 %v3571, %v3559
    %v4640 = vpack.c.b16 %v3572, %v3560
    %v4641 = vpack.c.b16 %v3573, %v3561
    %v4642 = vpack.c.b16 %v3574, %v3562
    %v4643 = vpack.c.b16 %v3575, %v3563
    %v4644 = vpack.c.b16 %v3576, %v3564
    %v4645 = vpack.c.b16 %v3577, %v3565
    %v4646 = vpack.c.b16 %v3578, %v3566
    %v4647 = vpack.c.b16 %v3591, %v3579
    %v4648 = vpack.c.b16 %v3592, %v3580
    %v4649 = vpack.c.b16 %v3593, %v3581
    %v4650 = vpack.c.b16 %v3594, %v3582
    %v4651 = vpack.c.b16 %v3595, %v3583
    %v4652 = vpack.c.b16 %v3596, %v3584
    %v4653 = vpack.c.b16 %v3597, %v3585
    %v4654 = vpack.c.b16 %v3598, %v3586
    %v4655 = vpack.c.b16 %v3599, %v3587
    %v4656 = vpack.c.b16 %v3600, %v3588
    %v4657 = vpack.c.b16 %v3601, %v3589
    %v4658 = vpack.c.b16 %v3602, %v3590
    %v4659 = vpack.c.b16 %v3615, %v3603
    %v4660 = vpack.c.b16 %v3616, %v3604
    %v4661 = vpack.c.b16 %v3617, %v3605
    %v4662 = vpack.c.b16 %v3618, %v3606
    %v4663 = vpack.c.b16 %v3619, %v3607
    %v4664 = vpack.c.b16 %v3620, %v3608
    %v4665 = vpack.c.b16 %v3621, %v3609
    %v4666 = vpack.c.b16 %v3622, %v3610
    %v4667 = vpack.c.b16 %v3623, %v3611
    %v4668 = vpack.c.b16 %v3624, %v3612
    %v4669 = vpack.c.b16 %v3625, %v3613
    %v4670 = vpack.c.b16 %v3626, %v3614
    %v4671 = vpack.c.b16 %v3639, %v3627
    %v4672 = vpack.c.b16 %v3640, %v3628
    %v4673 = vpack.c.b16 %v3641, %v3629
    %v4674 = vpack.c.b16 %v3642, %v3630
    %v4675 = vpack.c.b16 %v3643, %v3631
    %v4676 = vpack.c.b16 %v3644, %v3632
    %v4677 = vpack.c.b16 %v3645, %v3633
    %v4678 = vpack.c.b16 %v3646, %v3634
    %v4679 = vpack.c.b16 %v3647, %v3635
    %v4680 = vpack.c.b16 %v3648, %v3636
    %v4681 = vpack.c.b16 %v3649, %v3637
    %v4682 = vpack.c.b16 %v3650, %v3638
    %v4683 = vpack.c.b16 %v3663, %v3651
    %v4684 = vpack.c.b16 %v3664, %v3652
    %v4685 = vpack.c.b16 %v3665, %v3653
    %v4686 = vpack.c.b16 %v3666, %v3654
    %v4687 = vpack.c.b16 %v3667, %v3655
    %v4688 = vpack.c.b16 %v3668, %v3656
    %v4689 = vpack.c.b16 %v3669, %v3657
    %v4690 = vpack.c.b16 %v3670, %v3658
    %v4691 = vpack.c.b16 %v3671, %v3659
    %v4692 = vpack.c.b16 %v3672, %v3660
    %v4693 = vpack.c.b16 %v3673, %v3661
    %v4694 = vpack.c.b16 %v3674, %v3662
    %v4695 = vpack.c.b16 %v3687, %v3675
    %v4696 = vpack.c.b16 %v3688, %v3676
    %v4697 = vpack.c.b16 %v3689, %v3677
    %v4698 = vpack.c.b16 %v3690, %v3678
    %v4699 = vpack.c.b16 %v3691, %v3679
    %v4700 = vpack.c.b16 %v3692, %v3680
    %v4701 = vpack.c.b16 %v3693, %v3681
    %v4702 = vpack.c.b16 %v3694, %v3682
    %v4703 = vpack.c.b16 %v3695, %v3683
    %v4704 = vpack.c.b16 %v3696, %v3684
    %v4705 = vpack.c.b16 %v3697, %v3685
    %v4706 = vpack.c.b16 %v3698, %v3686
    %v4707 = vpack.c.b16 %v3711, %v3699
    %v4708 = vpack.c.b16 %v3712, %v3700
    %v4709 = vpack.c.b16 %v3713, %v3701
    %v4710 = vpack.c.b16 %v3714, %v3702
    %v4711 = vpack.c.b16 %v3715, %v3703
    %v4712 = vpack.c.b16 %v3716, %v3704
    %v4713 = vpack.c.b16 %v3717, %v3705
    %v4714 = vpack.c.b16 %v3718, %v3706
    %v4715 = vpack.c.b16 %v3719, %v3707
    %v4716 = vpack.c.b16 %v3720, %v3708
    %v4717 = vpack.c.b16 %v3721, %v3709
    %v4718 = vpack.c.b16 %v3722, %v3710
    %v4719 = vpack.c.b16 %v3735, %v3723
    %v4720 = vpack.c.b16 %v3736, %v3724
    %v4721 = vpack.c.b16 %v3737, %v3725
    %v4722 = vpack.c.b16 %v3738, %v3726
    %v4723 = vpack.c.b16 %v3739, %v3727
    %v4724 = vpack.c.b16 %v3740, %v3728
    %v4725 = vpack.c.b16 %v3741, %v3729
    %v4726 = vpack.c.b16 %v3742, %v3730
    %v4727 = vpack.c.b16 %v3743, %v3731
    %v4728 = vpack.c.b16 %v3744, %v3732
    %v4729 = vpack.c.b16 %v3745, %v3733
    %v4730 = vpack.c.b16 %v3746, %v3734
    %v4731 = vpack.c.b16 %v3759, %v3747
    %v4732 = vpack.c.b16 %v3760, %v3748
    %v4733 = vpack.c.b16 %v3761, %v3749
    %v4734 = vpack.c.b16 %v3762, %v3750
    %v4735 = vpack.c.b16 %v3763, %v3751
    %v4736 = vpack.c.b16 %v3764, %v3752
    %v4737 = vpack.c.b16 %v3765, %v3753
    %v4738 = vpack.c.b16 %v3766, %v3754
    %v4739 = vpack.c.b16 %v3767, %v3755
    %v4740 = vpack.c.b16 %v3768, %v3756
    %v4741 = vpack.c.b16 %v3769, %v3757
    %v4742 = vpack.c.b16 %v3770, %v3758
    %v4743 = vpack.c.b16 %v3783, %v3771
    %v4744 = vpack.c.b16 %v3784, %v3772
    %v4745 = vpack.c.b16 %v3785, %v3773
    %v4746 = vpack.c.b16 %v3786, %v3774
    %v4747 = vpack.c.b16 %v3787, %v3775
    %v4748 = vpack.c.b16 %v3788, %v3776
    %v4749 = vpack.c.b16 %v3789, %v3777
    %v4750 = vpack.c.b16 %v3790, %v3778
    %v4751 = vpack.c.b16 %v3791, %v3779
    %v4752 = vpack.c.b16 %v3792, %v3780
    %v4753 = vpack.c.b16 %v3793, %v3781
    %v4754 = vpack.c.b16 %v3794, %v3782
    %v4755 = vpack.c.b16 %v3807, %v3795
    %v4756 = vpack.c.b16 %v3808, %v3796
    %v4757 = vpack.c.b16 %v3809, %v3797
    %v4758 = vpack.c.b16 %v3810, %v3798
    %v4759 = vpack.c.b16 %v3811, %v3799
    %v4760 = vpack.c.b16 %v3812, %v3800
    %v4761 = vpack.c.b16 %v3813, %v3801
    %v4762 = vpack.c.b16 %v3814, %v3802
    %v4763 = vpack.c.b16 %v3815, %v3803
    %v4764 = vpack.c.b16 %v3816, %v3804
    %v4765 = vpack.c.b16 %v3817, %v3805
    %v4766 = vpack.c.b16 %v3818, %v3806
    %v4767 = vpack.c.b16 %v3831, %v3819
    %v4768 = vpack.c.b16 %v3832, %v3820
    %v4769 = vpack.c.b16 %v3833, %v3821
    %v4770 = vpack.c.b16 %v3834, %v3822
    %v4771 = vpack.c.b16 %v3835, %v3823
    %v4772 = vpack.c.b16 %v3836, %v3824
    %v4773 = vpack.c.b16 %v3837, %v3825
    %v4774 = vpack.c.b16 %v3838, %v3826
    %v4775 = vpack.c.b16 %v3839, %v3827
    %v4776 = vpack.c.b16 %v3840, %v3828
    %v4777 = vpack.c.b16 %v3841, %v3829
    %v4778 = vpack.c.b16 %v3842, %v3830
    %v4779 = vpack.c.b16 %v3855, %v3843
    %v4780 = vpack.c.b16 %v3856, %v3844
    %v4781 = vpack.c.b16 %v3857, %v3845
    %v4782 = vpack.c.b16 %v3858, %v3846
    %v4783 = vpack.c.b16 %v3859, %v3847
    %v4784 = vpack.c.b16 %v3860, %v3848
    %v4785 = vpack.c.b16 %v3861, %v3849
    %v4786 = vpack.c.b16 %v3862, %v3850
    %v4787 = vpack.c.b16 %v3863, %v3851
    %v4788 = vpack.c.b16 %v3864, %v3852
    %v4789 = vpack.c.b16 %v3865, %v3853
    %v4790 = vpack.c.b16 %v3866, %v3854
    %v4791 = vpack.c.b16 %v3879, %v3867
    %v4792 = vpack.c.b16 %v3880, %v3868
    %v4793 = vpack.c.b16 %v3881, %v3869
    %v4794 = vpack.c.b16 %v3882, %v3870
    %v4795 = vpack.c.b16 %v3883, %v3871
    %v4796 = vpack.c.b16 %v3884, %v3872
    %v4797 = vpack.c.b16 %v3885, %v3873
    %v4798 = vpack.c.b16 %v3886, %v3874
    %v4799 = vpack.c.b16 %v3887, %v3875
    %v4800 = vpack.c.b16 %v3888, %v3876
    %v4801 = vpack.c.b16 %v3889, %v3877
    %v4802 = vpack.c.b16 %v3890, %v3878
    %v4803 = vpack.c.b16 %v3903, %v3891
    %v4804 = vpack.c.b16 %v3904, %v3892
    %v4805 = vpack.c.b16 %v3905, %v3893
    %v4806 = vpack.c.b16 %v3906, %v3894
    %v4807 = vpack.c.b16 %v3907, %v3895
    %v4808 = vpack.c.b16 %v3908, %v3896
    %v4809 = vpack.c.b16 %v3909, %v3897
    %v4810 = vpack.c.b16 %v3910, %v3898
    %v4811 = vpack.c.b16 %v3911, %v3899
    %v4812 = vpack.c.b16 %v3912, %v3900
    %v4813 = vpack.c.b16 %v3913, %v3901
    %v4814 = vpack.c.b16 %v3914, %v3902
    %v4815 = vpack.c.b16 %v3927, %v3915
    %v4816 = vpack.c.b16 %v3928, %v3916
    %v4817 = vpack.c.b16 %v3929, %v3917
    %v4818 = vpack.c.b16 %v3930, %v3918
    %v4819 = vpack.c.b16 %v3931, %v3919
    %v4820 = vpack.c.b16 %v3932, %v3920
    %v4821 = vpack.c.b16 %v3933, %v3921
    %v4822 = vpack.c.b16 %v3934, %v3922
    %v4823 = vpack.c.b16 %v3935, %v3923
    %v4824 = vpack.c.b16 %v3936, %v3924
    %v4825 = vpack.c.b16 %v3937, %v3925
    %v4826 = vpack.c.b16 %v3938, %v3926
    %v4827 = vpack.c.b16 %v3951, %v3939
    %v4828 = vpack.c.b16 %v3952, %v3940
    %v4829 = vpack.c.b16 %v3953, %v3941
    %v4830 = vpack.c.b16 %v3954, %v3942
    %v4831 = vpack.c.b16 %v3955, %v3943
    %v4832 = vpack.c.b16 %v3956, %v3944
    %v4833 = vpack.c.b16 %v3957, %v3945
    %v4834 = vpack.c.b16 %v3958, %v3946
    %v4835 = vpack.c.b16 %v3959, %v3947
    %v4836 = vpack.c.b16 %v3960, %v3948
    %v4837 = vpack.c.b16 %v3961, %v3949
    %v4838 = vpack.c.b16 %v3962, %v3950
    %v4839 = vpack.c.b16 %v3975, %v3963
    %v4840 = vpack.c.b16 %v3976, %v3964
    %v4841 = vpack.c.b16 %v3977, %v3965
    %v4842 = vpack.c.b16 %v3978, %v3966
    %v4843 = vpack.c.b16 %v3979, %v3967
    %v4844 = vpack.c.b16 %v3980, %v3968
    %v4845 = vpack.c.b16 %v3981, %v3969
    %v4846 = vpack.c.b16 %v3982, %v3970
    %v4847 = vpack.c.b16 %v3983, %v3971
    %v4848 = vpack.c.b16 %v3984, %v3972
    %v4849 = vpack.c.b16 %v3985, %v3973
    %v4850 = vpack.c.b16 %v3986, %v3974
    %v4851 = vpack.c.b16 %v3999, %v3987
    %v4852 = vpack.c.b16 %v4000, %v3988
    %v4853 = vpack.c.b16 %v4001, %v3989
    %v4854 = vpack.c.b16 %v4002, %v3990
    %v4855 = vpack.c.b16 %v4003, %v3991
    %v4856 = vpack.c.b16 %v4004, %v3992
    %v4857 = vpack.c.b16 %v4005, %v3993
    %v4858 = vpack.c.b16 %v4006, %v3994
    %v4859 = vpack.c.b16 %v4007, %v3995
    %v4860 = vpack.c.b16 %v4008, %v3996
    %v4861 = vpack.c.b16 %v4009, %v3997
    %v4862 = vpack.c.b16 %v4010, %v3998
    %v4863 = vpack.c.b16 %v4023, %v4011
    %v4864 = vpack.c.b16 %v4024, %v4012
    %v4865 = vpack.c.b16 %v4025, %v4013
    %v4866 = vpack.c.b16 %v4026, %v4014
    %v4867 = vpack.c.b16 %v4027, %v4015
    %v4868 = vpack.c.b16 %v4028, %v4016
    %v4869 = vpack.c.b16 %v4029, %v4017
    %v4870 = vpack.c.b16 %v4030, %v4018
    %v4871 = vpack.c.b16 %v4031, %v4019
    %v4872 = vpack.c.b16 %v4032, %v4020
    %v4873 = vpack.c.b16 %v4033, %v4021
    %v4874 = vpack.c.b16 %v4034, %v4022
    %v4875 = vpack.c.b16 %v4047, %v4035
    %v4876 = vpack.c.b16 %v4048, %v4036
    %v4877 = vpack.c.b16 %v4049, %v4037
    %v4878 = vpack.c.b16 %v4050, %v4038
    %v4879 = vpack.c.b16 %v4051, %v4039
    %v4880 = vpack.c.b16 %v4052, %v4040
    %v4881 = vpack.c.b16 %v4053, %v4041
    %v4882 = vpack.c.b16 %v4054, %v4042
    %v4883 = vpack.c.b16 %v4055, %v4043
    %v4884 = vpack.c.b16 %v4056, %v4044
    %v4885 = vpack.c.b16 %v4057, %v4045
    %v4886 = vpack.c.b16 %v4058, %v4046
    %v4887 = vpack.c.b16 %v4071, %v4059
    %v4888 = vpack.c.b16 %v4072, %v4060
    %v4889 = vpack.c.b16 %v4073, %v4061
    %v4890 = vpack.c.b16 %v4074, %v4062
    %v4891 = vpack.c.b16 %v4075, %v4063
    %v4892 = vpack.c.b16 %v4076, %v4064
    %v4893 = vpack.c.b16 %v4077, %v4065
    %v4894 = vpack.c.b16 %v4078, %v4066
    %v4895 = vpack.c.b16 %v4079, %v4067
    %v4896 = vpack.c.b16 %v4080, %v4068
    %v4897 = vpack.c.b16 %v4081, %v4069
    %v4898 = vpack.c.b16 %v4082, %v4070
    %v4899 = vpack.c.b16 %v4095, %v4083
    %v4900 = vpack.c.b16 %v4096, %v4084
    %v4901 = vpack.c.b16 %v4097, %v4085
    %v4902 = vpack.c.b16 %v4098, %v4086
    %v4903 = vpack.c.b16 %v4099, %v4087
    %v4904 = vpack.c.b16 %v4100, %v4088
    %v4905 = vpack.c.b16 %v4101, %v4089
    %v4906 = vpack.c.b16 %v4102, %v4090
    %v4907 = vpack.c.b16 %v4103, %v4091
    %v4908 = vpack.c.b16 %v4104, %v4092
    %v4909 = vpack.c.b16 %v4105, %v4093
    %v4910 = vpack.c.b16 %v4106, %v4094
    %v4911 = vpack.c.b16 %v4119, %v4107
    %v4912 = vpack.c.b16 %v4120, %v4108
    %v4913 = vpack.c.b16 %v4121, %v4109
    %v4914 = vpack.c.b16 %v4122, %v4110
    %v4915 = vpack.c.b16 %v4123, %v4111
    %v4916 = vpack.c.b16 %v4124, %v4112
    %v4917 = vpack.c.b16 %v4125, %v4113
    %v4918 = vpack.c.b16 %v4126, %v4114
    %v4919 = vpack.c.b16 %v4127, %v4115
    %v4920 = vpack.c.b16 %v4128, %v4116
    %v4921 = vpack.c.b16 %v4129, %v4117
    %v4922 = vpack.c.b16 %v4130, %v4118
    %v4923 = vpack.c.b16 %v4143, %v4131
    %v4924 = vpack.c.b16 %v4144, %v4132
    %v4925 = vpack.c.b16 %v4145, %v4133
    %v4926 = vpack.c.b16 %v4146, %v4134
    %v4927 = vpack.c.b16 %v4147, %v4135
    %v4928 = vpack.c.b16 %v4148, %v4136
    %v4929 = vpack.c.b16 %v4149, %v4137
    %v4930 = vpack.c.b16 %v4150, %v4138
    %v4931 = vpack.c.b16 %v4151, %v4139
    %v4932 = vpack.c.b16 %v4152, %v4140
    %v4933 = vpack.c.b16 %v4153, %v4141
    %v4934 = vpack.c.b16 %v4154, %v4142
    %v4935 = vpack.c.b16 %v4167, %v4155
    %v4936 = vpack.c.b16 %v4168, %v4156
    %v4937 = vpack.c.b16 %v4169, %v4157
    %v4938 = vpack.c.b16 %v4170, %v4158
    %v4939 = vpack.c.b16 %v4171, %v4159
    %v4940 = vpack.c.b16 %v4172, %v4160
    %v4941 = vpack.c.b16 %v4173, %v4161
    %v4942 = vpack.c.b16 %v4174, %v4162
    %v4943 = vpack.c.b16 %v4175, %v4163
    %v4944 = vpack.c.b16 %v4176, %v4164
    %v4945 = vpack.c.b16 %v4177, %v4165
    %v4946 = vpack.c.b16 %v4178, %v4166
    %v4947 = vpack.c.b16 %v4191, %v4179
    %v4948 = vpack.c.b16 %v4192, %v4180
    %v4949 = vpack.c.b16 %v4193, %v4181
    %v4950 = vpack.c.b16 %v4194, %v4182
    %v4951 = vpack.c.b16 %v4195, %v4183
    %v4952 = vpack.c.b16 %v4196, %v4184
    %v4953 = vpack.c.b16 %v4197, %v4185
    %v4954 = vpack.c.b16 %v4198, %v4186
    %v4955 = vpack.c.b16 %v4199, %v4187
    %v4956 = vpack.c.b16 %v4200, %v4188
    %v4957 = vpack.c.b16 %v4201, %v4189
    %v4958 = vpack.c.b16 %v4202, %v4190
    %v4959 = vpack.c.b16 %v4215, %v4203
    %v4960 = vpack.c.b16 %v4216, %v4204
    %v4961 = vpack.c.b16 %v4217, %v4205
    %v4962 = vpack.c.b16 %v4218, %v4206
    %v4963 = vpack.c.b16 %v4219, %v4207
    %v4964 = vpack.c.b16 %v4220, %v4208
    %v4965 = vpack.c.b16 %v4221, %v4209
    %v4966 = vpack.c.b16 %v4222, %v4210
    %v4967 = vpack.c.b16 %v4223, %v4211
    %v4968 = vpack.c.b16 %v4224, %v4212
    %v4969 = vpack.c.b16 %v4225, %v4213
    %v4970 = vpack.c.b16 %v4226, %v4214
    %v4971 = vpack.c.b16 %v4239, %v4227
    %v4972 = vpack.c.b16 %v4240, %v4228
    %v4973 = vpack.c.b16 %v4241, %v4229
    %v4974 = vpack.c.b16 %v4242, %v4230
    %v4975 = vpack.c.b16 %v4243, %v4231
    %v4976 = vpack.c.b16 %v4244, %v4232
    %v4977 = vpack.c.b16 %v4245, %v4233
    %v4978 = vpack.c.b16 %v4246, %v4234
    %v4979 = vpack.c.b16 %v4247, %v4235
    %v4980 = vpack.c.b16 %v4248, %v4236
    %v4981 = vpack.c.b16 %v4249, %v4237
    %v4982 = vpack.c.b16 %v4250, %v4238
    %v4983 = vpack.c.b16 %v4263, %v4251
    %v4984 = vpack.c.b16 %v4264, %v4252
    %v4985 = vpack.c.b16 %v4265, %v4253
    %v4986 = vpack.c.b16 %v4266, %v4254
    %v4987 = vpack.c.b16 %v4267, %v4255
    %v4988 = vpack.c.b16 %v4268, %v4256
    %v4989 = vpack.c.b16 %v4269, %v4257
    %v4990 = vpack.c.b16 %v4270, %v4258
    %v4991 = vpack.c.b16 %v4271, %v4259
    %v4992 = vpack.c.b16 %v4272, %v4260
    %v4993 = vpack.c.b16 %v4273, %v4261
    %v4994 = vpack.c.b16 %v4274, %v4262
    %v4995 = vpack.c.b16 %v4287, %v4275
    %v4996 = vpack.c.b16 %v4288, %v4276
    %v4997 = vpack.c.b16 %v4289, %v4277
    %v4998 = vpack.c.b16 %v4290, %v4278
    %v4999 = vpack.c.b16 %v4291, %v4279
    %v5000 = vpack.c.b16 %v4292, %v4280
    %v5001 = vpack.c.b16 %v4293, %v4281
    %v5002 = vpack.c.b16 %v4294, %v4282
    %v5003 = vpack.c.b16 %v4295, %v4283
    %v5004 = vpack.c.b16 %v4296, %v4284
    %v5005 = vpack.c.b16 %v4297, %v4285
    %v5006 = vpack.c.b16 %v4298, %v4286
    %v5007 = vpack.c.b16 %v4311, %v4299
    %v5008 = vpack.c.b16 %v4312, %v4300
    %v5009 = vpack.c.b16 %v4313, %v4301
    %v5010 = vpack.c.b16 %v4314, %v4302
    %v5011 = vpack.c.b16 %v4315, %v4303
    %v5012 = vpack.c.b16 %v4316, %v4304
    %v5013 = vpack.c.b16 %v4317, %v4305
    %v5014 = vpack.c.b16 %v4318, %v4306
    %v5015 = vpack.c.b16 %v4319, %v4307
    %v5016 = vpack.c.b16 %v4320, %v4308
    %v5017 = vpack.c.b16 %v4321, %v4309
    %v5018 = vpack.c.b16 %v4322, %v4310
    %v5019 = vpack.c.b16 %v4335, %v4323
    %v5020 = vpack.c.b16 %v4336, %v4324
    %v5021 = vpack.c.b16 %v4337, %v4325
    %v5022 = vpack.c.b16 %v4338, %v4326
    %v5023 = vpack.c.b16 %v4339, %v4327
    %v5024 = vpack.c.b16 %v4340, %v4328
    %v5025 = vpack.c.b16 %v4341, %v4329
    %v5026 = vpack.c.b16 %v4342, %v4330
    %v5027 = vpack.c.b16 %v4343, %v4331
    %v5028 = vpack.c.b16 %v4344, %v4332
    %v5029 = vpack.c.b16 %v4345, %v4333
    %v5030 = vpack.c.b16 %v4346, %v4334
    %v5031 = vpack.c.b16 %v4359, %v4347
    %v5032 = vpack.c.b16 %v4360, %v4348
    %v5033 = vpack.c.b16 %v4361, %v4349
    %v5034 = vpack.c.b16 %v4362, %v4350
    %v5035 = vpack.c.b16 %v4363, %v4351
    %v5036 = vpack.c.b16 %v4364, %v4352
    %v5037 = vpack.c.b16 %v4365, %v4353
    %v5038 = vpack.c.b16 %v4366, %v4354
    %v5039 = vpack.c.b16 %v4367, %v4355
    %v5040 = vpack.c.b16 %v4368, %v4356
    %v5041 = vpack.c.b16 %v4369, %v4357
    %v5042 = vpack.c.b16 %v4370, %v4358
    %v5043 = vpack.c.b16 %v4383, %v4371
    %v5044 = vpack.c.b16 %v4384, %v4372
    %v5045 = vpack.c.b16 %v4385, %v4373
    %v5046 = vpack.c.b16 %v4386, %v4374
    %v5047 = vpack.c.b16 %v4387, %v4375
    %v5048 = vpack.c.b16 %v4388, %v4376
    %v5049 = vpack.c.b16 %v4389, %v4377
    %v5050 = vpack.c.b16 %v4390, %v4378
    %v5051 = vpack.c.b16 %v4391, %v4379
    %v5052 = vpack.c.b16 %v4392, %v4380
    %v5053 = vpack.c.b16 %v4393, %v4381
    %v5054 = vpack.c.b16 %v4394, %v4382
    %v5055 = vpack.c.b16 %v4407, %v4395
    %v5056 = vpack.c.b16 %v4408, %v4396
    %v5057 = vpack.c.b16 %v4409, %v4397
    %v5058 = vpack.c.b16 %v4410, %v4398
    %v5059 = vpack.c.b16 %v4411, %v4399
    %v5060 = vpack.c.b16 %v4412, %v4400
    %v5061 = vpack.c.b16 %v4413, %v4401
    %v5062 = vpack.c.b16 %v4414, %v4402
    %v5063 = vpack.c.b16 %v4415, %v4403
    %v5064 = vpack.c.b16 %v4416, %v4404
    %v5065 = vpack.c.b16 %v4417, %v4405
    %v5066 = vpack.c.b16 %v4418, %v4406
    %v5067 = vpack.c.b16 %v4431, %v4419
    %v5068 = vpack.c.b16 %v4432, %v4420
    %v5069 = vpack.c.b16 %v4433, %v4421
    %v5070 = vpack.c.b16 %v4434, %v4422
    %v5071 = vpack.c.b16 %v4435, %v4423
    %v5072 = vpack.c.b16 %v4436, %v4424
    %v5073 = vpack.c.b16 %v4437, %v4425
    %v5074 = vpack.c.b16 %v4438, %v4426
    %v5075 = vpack.c.b16 %v4439, %v4427
    %v5076 = vpack.c.b16 %v4440, %v4428
    %v5077 = vpack.c.b16 %v4441, %v4429
    %v5078 = vpack.c.b16 %v4442, %v4430
    %v5079 = vpack.c.b16 %v4455, %v4443
    %v5080 = vpack.c.b16 %v4456, %v4444
    %v5081 = vpack.c.b16 %v4457, %v4445
    %v5082 = vpack.c.b16 %v4458, %v4446
    %v5083 = vpack.c.b16 %v4459, %v4447
    %v5084 = vpack.c.b16 %v4460, %v4448
    %v5085 = vpack.c.b16 %v4461, %v4449
    %v5086 = vpack.c.b16 %v4462, %v4450
    %v5087 = vpack.c.b16 %v4463, %v4451
    %v5088 = vpack.c.b16 %v4464, %v4452
    %v5089 = vpack.c.b16 %v4465, %v4453
    %v5090 = vpack.c.b16 %v4466, %v4454
    %v5091 = vpack.c.b16 %v4479, %v4467
    %v5092 = vpack.c.b16 %v4480, %v4468
    %v5093 = vpack.c.b16 %v4481, %v4469
    %v5094 = vpack.c.b16 %v4482, %v4470
    %v5095 = vpack.c.b16 %v4483, %v4471
    %v5096 = vpack.c.b16 %v4484, %v4472
    %v5097 = vpack.c.b16 %v4485, %v4473
    %v5098 = vpack.c.b16 %v4486, %v4474
    %v5099 = vpack.c.b16 %v4487, %v4475
    %v5100 = vpack.c.b16 %v4488, %v4476
    %v5101 = vpack.c.b16 %v4489, %v4477
    %v5102 = vpack.c.b16 %v4490, %v4478
    %v5103 = vpack.c.b16 %v4503, %v4491
    %v5104 = vpack.c.b16 %v4504, %v4492
    %v5105 = vpack.c.b16 %v4505, %v4493
    %v5106 = vpack.c.b16 %v4506, %v4494
    %v5107 = vpack.c.b16 %v4507, %v4495
    %v5108 = vpack.c.b16 %v4508, %v4496
    %v5109 = vpack.c.b16 %v4509, %v4497
    %v5110 = vpack.c.b16 %v4510, %v4498
    %v5111 = vpack.c.b16 %v4511, %v4499
    %v5112 = vpack.c.b16 %v4512, %v4500
    %v5113 = vpack.c.b16 %v4513, %v4501
    %v5114 = vpack.c.b16 %v4514, %v4502
    %v5115 = vpack.c.b16 %v4527, %v4515
    %v5116 = vpack.c.b16 %v4528, %v4516
    %v5117 = vpack.c.b16 %v4529, %v4517
    %v5118 = vpack.c.b16 %v4530, %v4518
    %v5119 = vpack.c.b16 %v4531, %v4519
    %v5120 = vpack.c.b16 %v4532, %v4520
    %v5121 = vpack.c.b16 %v4533, %v4521
    %v5122 = vpack.c.b16 %v4534, %v4522
    %v5123 = vpack.c.b16 %v4535, %v4523
    %v5124 = vpack.c.b16 %v4536, %v4524
    %v5125 = vpack.c.b16 %v4537, %v4525
    %v5126 = vpack.c.b16 %v4538, %v4526
    %v5127 = vpack.c.b16 %v4551, %v4539
    %v5128 = vpack.c.b16 %v4552, %v4540
    %v5129 = vpack.c.b16 %v4553, %v4541
    %v5130 = vpack.c.b16 %v4554, %v4542
    %v5131 = vpack.c.b16 %v4555, %v4543
    %v5132 = vpack.c.b16 %v4556, %v4544
    %v5133 = vpack.c.b16 %v4557, %v4545
    %v5134 = vpack.c.b16 %v4558, %v4546
    %v5135 = vpack.c.b16 %v4559, %v4547
    %v5136 = vpack.c.b16 %v4560, %v4548
    %v5137 = vpack.c.b16 %v4561, %v4549
    %v5138 = vpack.c.b16 %v4562, %v4550
    %5715 = vmatprep.subr.bf16.mxu0 %v4564
    %5716 = vmatpush1.bf16.msra.mxu0 %v4563
    %5717 = vmatprep.subr.bf16.mxu0 %v4576
    %5718 = vmatpush1.bf16.msra.mxu0 %v4575
    %5719 = vmatprep.subr.bf16.mxu0 %v4588
    %5720 = vmatpush1.bf16.msra.mxu0 %v4587
    %5721 = vmatprep.subr.bf16.mxu0 %v4600
    %5722 = vmatpush1.bf16.msra.mxu0 %v4599
    %5723 = vmatprep.subr.bf16.mxu0 %v4612
    %5724 = vmatpush1.bf16.msra.mxu0 %v4611
    %5725 = vmatprep.subr.bf16.mxu0 %v4624
    %5726 = vmatpush1.bf16.msra.mxu0 %v4623
    %5727 = vmatprep.subr.bf16.mxu0 %v4636
    %5728 = vmatpush1.bf16.msra.mxu0 %v4635
    %5729 = vmatprep.subr.bf16.mxu0 %v4648
    %5730 = vmatpush1.bf16.msra.mxu0 %v4647
    %5731 = vmatprep.subr.bf16.mxu0 %v4660
    %5732 = vmatpush1.bf16.msra.mxu0 %v4659
    %5733 = vmatprep.subr.bf16.mxu0 %v4672
    %5734 = vmatpush1.bf16.msra.mxu0 %v4671
    %5735 = vmatprep.subr.bf16.mxu0 %v4684
    %5736 = vmatpush1.bf16.msra.mxu0 %v4683
    %5737 = vmatprep.subr.bf16.mxu0 %v4696
    %5738 = vmatpush1.bf16.msra.mxu0 %v4695
    %5739 = vmatprep.subr.bf16.mxu0 %v4708
    %5740 = vmatpush1.bf16.msra.mxu0 %v4707
    %5741 = vmatprep.subr.bf16.mxu0 %v4720
    %5742 = vmatpush1.bf16.msra.mxu0 %v4719
    %5743 = vmatprep.subr.bf16.mxu0 %v4732
    %5744 = vmatpush1.bf16.msra.mxu0 %v4731
    %5745 = vmatprep.subr.bf16.mxu0 %v4744
    %5746 = vmatpush1.bf16.msra.mxu0 %v4743
    %5747 = vmatprep.mubr.bf16.mxu0 %v2824
    %5748 = vmatmul.mubr.bf16.gmra.mrb[0].mxu0 %v2823
    %v5749 = vpop.f32.mrb[0].mxu0
    %v5750 = vadd.f32 0.0, %v5749
    %v5751 = vpop.f32.mrb[0].mxu0
    %v5752 = vadd.f32 0.0, %v5751
    %v5753 = vpop.f32.mrb[0].mxu0
    %v5754 = vadd.f32 0.0, %v5753
    %v5755 = vpop.f32.mrb[0].mxu0
    %v5756 = vadd.f32 0.0, %v5755
    %5757 = vdwg.mxu0
    %5758 = vmatprep.subr.bf16.mxu0 %v4756
    %5759 = vmatpush1.bf16.msra.mxu0 %v4755
    %5760 = vmatprep.subr.bf16.mxu0 %v4768
    %5761 = vmatpush1.bf16.msra.mxu0 %v4767
    %5762 = vmatprep.subr.bf16.mxu0 %v4780
    %5763 = vmatpush1.bf16.msra.mxu0 %v4779
    %5764 = vmatprep.subr.bf16.mxu0 %v4792
    %5765 = vmatpush1.bf16.msra.mxu0 %v4791
    %5766 = vmatprep.subr.bf16.mxu0 %v4804
    %5767 = vmatpush1.bf16.msra.mxu0 %v4803
    %5768 = vmatprep.subr.bf16.mxu0 %v4816
    %5769 = vmatpush1.bf16.msra.mxu0 %v4815
    %5770 = vmatprep.subr.bf16.mxu0 %v4828
    %5771 = vmatpush1.bf16.msra.mxu0 %v4827
    %5772 = vmatprep.subr.bf16.mxu0 %v4840
    %5773 = vmatpush1.bf16.msra.mxu0 %v4839
    %5774 = vmatprep.subr.bf16.mxu0 %v4852
    %5775 = vmatpush1.bf16.msra.mxu0 %v4851
    %5776 = vmatprep.subr.bf16.mxu0 %v4864
    %5777 = vmatpush1.bf16.msra.mxu0 %v4863
    %5778 = vmatprep.subr.bf16.mxu0 %v4876
    %5779 = vmatpush1.bf16.msra.mxu0 %v4875
    %5780 = vmatprep.subr.bf16.mxu0 %v4888
    %5781 = vmatpush1.bf16.msra.mxu0 %v4887
    %5782 = vmatprep.subr.bf16.mxu0 %v4900
    %5783 = vmatpush1.bf16.msra.mxu0 %v4899
    %5784 = vmatprep.subr.bf16.mxu0 %v4912
    %5785 = vmatpush1.bf16.msra.mxu0 %v4911
    %5786 = vmatprep.subr.bf16.mxu0 %v4924
    %5787 = vmatpush1.bf16.msra.mxu0 %v4923
    %5788 = vmatprep.subr.bf16.mxu0 %v4936
    %5789 = vmatpush1.bf16.msra.mxu0 %v4935
    %5790 = vmatprep.mubr.bf16.mxu0 %v2826
    %5791 = vmatmul.mubr.bf16.gmra.mrb[0].mxu0 %v2825
    %v5792 = vpop.f32.mrb[0].mxu0
    %v5793 = vadd.f32 %v5750, %v5792
    %v5794 = vpop.f32.mrb[0].mxu0
    %v5795 = vadd.f32 %v5752, %v5794
    %v5796 = vpop.f32.mrb[0].mxu0
    %v5797 = vadd.f32 %v5754, %v5796
    %v5798 = vpop.f32.mrb[0].mxu0
    %v5799 = vadd.f32 %v5756, %v5798
    %5800 = vdwg.mxu0
    %5801 = vmatprep.subr.bf16.mxu0 %v4948
    %5802 = vmatpush1.bf16.msra.mxu0 %v4947
    %5803 = vmatprep.subr.bf16.mxu0 %v4960
    %5804 = vmatpush1.bf16.msra.mxu0 %v4959
    %5805 = vmatprep.subr.bf16.mxu0 %v4972
    %5806 = vmatpush1.bf16.msra.mxu0 %v4971
    %5807 = vmatprep.subr.bf16.mxu0 %v4984
    %5808 = vmatpush1.bf16.msra.mxu0 %v4983
    %5809 = vmatprep.subr.bf16.mxu0 %v4996
    %5810 = vmatpush1.bf16.msra.mxu0 %v4995
    %5811 = vmatprep.subr.bf16.mxu0 %v5008
    %5812 = vmatpush1.bf16.msra.mxu0 %v5007
    %5813 = vmatprep.subr.bf16.mxu0 %v5020
    %5814 = vmatpush1.bf16.msra.mxu0 %v5019
    %5815 = vmatprep.subr.bf16.mxu0 %v5032
    %5816 = vmatpush1.bf16.msra.mxu0 %v5031
    %5817 = vmatprep.subr.bf16.mxu0 %v5044
    %5818 = vmatpush1.bf16.msra.mxu0 %v5043
    %5819 = vmatprep.subr.bf16.mxu0 %v5056
    %5820 = vmatpush1.bf16.msra.mxu0 %v5055
    %5821 = vmatprep.subr.bf16.mxu0 %v5068
    %5822 = vmatpush1.bf16.msra.mxu0 %v5067
    %5823 = vmatprep.subr.bf16.mxu0 %v5080
    %5824 = vmatpush1.bf16.msra.mxu0 %v5079
    %5825 = vmatprep.subr.bf16.mxu0 %v5092
    %5826 = vmatpush1.bf16.msra.mxu0 %v5091
    %5827 = vmatprep.subr.bf16.mxu0 %v5104
    %5828 = vmatpush1.bf16.msra.mxu0 %v5103
    %5829 = vmatprep.subr.bf16.mxu0 %v5116
    %5830 = vmatpush1.bf16.msra.mxu0 %v5115
    %5831 = vmatprep.subr.bf16.mxu0 %v5128
    %5832 = vmatpush1.bf16.msra.mxu0 %v5127
    %5833 = vmatprep.mubr.bf16.mxu0 %v2828
    %5834 = vmatmul.mubr.bf16.gmra.mrb[0].mxu0 %v2827
    %v5835 = vpop.f32.mrb[0].mxu0
    %v5836 = vadd.f32 %v5793, %v5835
    %v5837 = vpop.f32.mrb[0].mxu0
    %v5838 = vadd.f32 %v5795, %v5837
    %v5839 = vpop.f32.mrb[0].mxu0
    %v5840 = vadd.f32 %v5797, %v5839
    %v5841 = vpop.f32.mrb[0].mxu0
    %v5842 = vadd.f32 %v5799, %v5841
    %5843 = vdwg.mxu0
    %5844 = vmatprep.subr.bf16.mxu0 %v4566
    %5845 = vmatpush1.bf16.msra.mxu0 %v4565
    %5846 = vmatprep.subr.bf16.mxu0 %v4578
    %5847 = vmatpush1.bf16.msra.mxu0 %v4577
    %5848 = vmatprep.subr.bf16.mxu0 %v4590
    %5849 = vmatpush1.bf16.msra.mxu0 %v4589
    %5850 = vmatprep.subr.bf16.mxu0 %v4602
    %5851 = vmatpush1.bf16.msra.mxu0 %v4601
    %5852 = vmatprep.subr.bf16.mxu0 %v4614
    %5853 = vmatpush1.bf16.msra.mxu0 %v4613
    %5854 = vmatprep.subr.bf16.mxu0 %v4626
    %5855 = vmatpush1.bf16.msra.mxu0 %v4625
    %5856 = vmatprep.subr.bf16.mxu0 %v4638
    %5857 = vmatpush1.bf16.msra.mxu0 %v4637
    %5858 = vmatprep.subr.bf16.mxu0 %v4650
    %5859 = vmatpush1.bf16.msra.mxu0 %v4649
    %5860 = vmatprep.subr.bf16.mxu0 %v4662
    %5861 = vmatpush1.bf16.msra.mxu0 %v4661
    %5862 = vmatprep.subr.bf16.mxu0 %v4674
    %5863 = vmatpush1.bf16.msra.mxu0 %v4673
    %5864 = vmatprep.subr.bf16.mxu0 %v4686
    %5865 = vmatpush1.bf16.msra.mxu0 %v4685
    %5866 = vmatprep.subr.bf16.mxu0 %v4698
    %5867 = vmatpush1.bf16.msra.mxu0 %v4697
    %5868 = vmatprep.subr.bf16.mxu0 %v4710
    %5869 = vmatpush1.bf16.msra.mxu0 %v4709
    %5870 = vmatprep.subr.bf16.mxu0 %v4722
    %5871 = vmatpush1.bf16.msra.mxu0 %v4721
    %5872 = vmatprep.subr.bf16.mxu0 %v4734
    %5873 = vmatpush1.bf16.msra.mxu0 %v4733
    %5874 = vmatprep.subr.bf16.mxu0 %v4746
    %5875 = vmatpush1.bf16.msra.mxu0 %v4745
    %5876 = vmatprep.mubr.bf16.mxu0 %v2824
    %5877 = vmatmul.mubr.bf16.gmra.mrb[0].mxu0 %v2823
    %v5878 = vpop.f32.mrb[0].mxu0
    %v5879 = vadd.f32 0.0, %v5878
    %v5880 = vpop.f32.mrb[0].mxu0
    %v5881 = vadd.f32 0.0, %v5880
    %v5882 = vpop.f32.mrb[0].mxu0
    %v5883 = vadd.f32 0.0, %v5882
    %v5884 = vpop.f32.mrb[0].mxu0
    %v5885 = vadd.f32 0.0, %v5884
    %5886 = vdwg.mxu0
    %5887 = vmatprep.subr.bf16.mxu0 %v4758
    %5888 = vmatpush1.bf16.msra.mxu0 %v4757
    %5889 = vmatprep.subr.bf16.mxu0 %v4770
    %5890 = vmatpush1.bf16.msra.mxu0 %v4769
    %5891 = vmatprep.subr.bf16.mxu0 %v4782
    %5892 = vmatpush1.bf16.msra.mxu0 %v4781
    %5893 = vmatprep.subr.bf16.mxu0 %v4794
    %5894 = vmatpush1.bf16.msra.mxu0 %v4793
    %5895 = vmatprep.subr.bf16.mxu0 %v4806
    %5896 = vmatpush1.bf16.msra.mxu0 %v4805
    %5897 = vmatprep.subr.bf16.mxu0 %v4818
    %5898 = vmatpush1.bf16.msra.mxu0 %v4817
    %5899 = vmatprep.subr.bf16.mxu0 %v4830
    %5900 = vmatpush1.bf16.msra.mxu0 %v4829
    %5901 = vmatprep.subr.bf16.mxu0 %v4842
    %5902 = vmatpush1.bf16.msra.mxu0 %v4841
    %5903 = vmatprep.subr.bf16.mxu0 %v4854
    %5904 = vmatpush1.bf16.msra.mxu0 %v4853
    %5905 = vmatprep.subr.bf16.mxu0 %v4866
    %5906 = vmatpush1.bf16.msra.mxu0 %v4865
    %5907 = vmatprep.subr.bf16.mxu0 %v4878
    %5908 = vmatpush1.bf16.msra.mxu0 %v4877
    %5909 = vmatprep.subr.bf16.mxu0 %v4890
    %5910 = vmatpush1.bf16.msra.mxu0 %v4889
    %5911 = vmatprep.subr.bf16.mxu0 %v4902
    %5912 = vmatpush1.bf16.msra.mxu0 %v4901
    %5913 = vmatprep.subr.bf16.mxu0 %v4914
    %5914 = vmatpush1.bf16.msra.mxu0 %v4913
    %5915 = vmatprep.subr.bf16.mxu0 %v4926
    %5916 = vmatpush1.bf16.msra.mxu0 %v4925
    %5917 = vmatprep.subr.bf16.mxu0 %v4938
    %5918 = vmatpush1.bf16.msra.mxu0 %v4937
    %5919 = vmatprep.mubr.bf16.mxu0 %v2826
    %5920 = vmatmul.mubr.bf16.gmra.mrb[0].mxu0 %v2825
    %v5921 = vpop.f32.mrb[0].mxu0
    %v5922 = vadd.f32 %v5879, %v5921
    %v5923 = vpop.f32.mrb[0].mxu0
    %v5924 = vadd.f32 %v5881, %v5923
    %v5925 = vpop.f32.mrb[0].mxu0
    %v5926 = vadd.f32 %v5883, %v5925
    %v5927 = vpop.f32.mrb[0].mxu0
    %v5928 = vadd.f32 %v5885, %v5927
    %5929 = vdwg.mxu0
    %5930 = vmatprep.subr.bf16.mxu0 %v4950
    %5931 = vmatpush1.bf16.msra.mxu0 %v4949
    %5932 = vmatprep.subr.bf16.mxu0 %v4962
    %5933 = vmatpush1.bf16.msra.mxu0 %v4961
    %5934 = vmatprep.subr.bf16.mxu0 %v4974
    %5935 = vmatpush1.bf16.msra.mxu0 %v4973
    %5936 = vmatprep.subr.bf16.mxu0 %v4986
    %5937 = vmatpush1.bf16.msra.mxu0 %v4985
    %5938 = vmatprep.subr.bf16.mxu0 %v4998
    %5939 = vmatpush1.bf16.msra.mxu0 %v4997
    %5940 = vmatprep.subr.bf16.mxu0 %v5010
    %5941 = vmatpush1.bf16.msra.mxu0 %v5009
    %5942 = vmatprep.subr.bf16.mxu0 %v5022
    %5943 = vmatpush1.bf16.msra.mxu0 %v5021
    %5944 = vmatprep.subr.bf16.mxu0 %v5034
    %5945 = vmatpush1.bf16.msra.mxu0 %v5033
    %5946 = vmatprep.subr.bf16.mxu0 %v5046
    %5947 = vmatpush1.bf16.msra.mxu0 %v5045
    %5948 = vmatprep.subr.bf16.mxu0 %v5058
    %5949 = vmatpush1.bf16.msra.mxu0 %v5057
    %5950 = vmatprep.subr.bf16.mxu0 %v5070
    %5951 = vmatpush1.bf16.msra.mxu0 %v5069
    %5952 = vmatprep.subr.bf16.mxu0 %v5082
    %5953 = vmatpush1.bf16.msra.mxu0 %v5081
    %5954 = vmatprep.subr.bf16.mxu0 %v5094
    %5955 = vmatpush1.bf16.msra.mxu0 %v5093
    %5956 = vmatprep.subr.bf16.mxu0 %v5106
    %5957 = vmatpush1.bf16.msra.mxu0 %v5105
    %5958 = vmatprep.subr.bf16.mxu0 %v5118
    %5959 = vmatpush1.bf16.msra.mxu0 %v5117
    %5960 = vmatprep.subr.bf16.mxu0 %v5130
    %5961 = vmatpush1.bf16.msra.mxu0 %v5129
    %5962 = vmatprep.mubr.bf16.mxu0 %v2828
    %5963 = vmatmul.mubr.bf16.gmra.mrb[0].mxu0 %v2827
    %v5964 = vpop.f32.mrb[0].mxu0
    %v5965 = vadd.f32 %v5922, %v5964
    %v5966 = vpop.f32.mrb[0].mxu0
    %v5967 = vadd.f32 %v5924, %v5966
    %v5968 = vpop.f32.mrb[0].mxu0
    %v5969 = vadd.f32 %v5926, %v5968
    %v5970 = vpop.f32.mrb[0].mxu0
    %v5971 = vadd.f32 %v5928, %v5970
    %5972 = vdwg.mxu0
    %5973 = vmatprep.subr.bf16.mxu0 %v4568
    %5974 = vmatpush1.bf16.msra.mxu0 %v4567
    %5975 = vmatprep.subr.bf16.mxu0 %v4580
    %5976 = vmatpush1.bf16.msra.mxu0 %v4579
    %5977 = vmatprep.subr.bf16.mxu0 %v4592
    %5978 = vmatpush1.bf16.msra.mxu0 %v4591
    %5979 = vmatprep.subr.bf16.mxu0 %v4604
    %5980 = vmatpush1.bf16.msra.mxu0 %v4603
    %5981 = vmatprep.subr.bf16.mxu0 %v4616
    %5982 = vmatpush1.bf16.msra.mxu0 %v4615
    %5983 = vmatprep.subr.bf16.mxu0 %v4628
    %5984 = vmatpush1.bf16.msra.mxu0 %v4627
    %5985 = vmatprep.subr.bf16.mxu0 %v4640
    %5986 = vmatpush1.bf16.msra.mxu0 %v4639
    %5987 = vmatprep.subr.bf16.mxu0 %v4652
    %5988 = vmatpush1.bf16.msra.mxu0 %v4651
    %5989 = vmatprep.subr.bf16.mxu0 %v4664
    %5990 = vmatpush1.bf16.msra.mxu0 %v4663
    %5991 = vmatprep.subr.bf16.mxu0 %v4676
    %5992 = vmatpush1.bf16.msra.mxu0 %v4675
    %5993 = vmatprep.subr.bf16.mxu0 %v4688
    %5994 = vmatpush1.bf16.msra.mxu0 %v4687
    %5995 = vmatprep.subr.bf16.mxu0 %v4700
    %5996 = vmatpush1.bf16.msra.mxu0 %v4699
    %5997 = vmatprep.subr.bf16.mxu0 %v4712
    %5998 = vmatpush1.bf16.msra.mxu0 %v4711
    %5999 = vmatprep.subr.bf16.mxu0 %v4724
    %6000 = vmatpush1.bf16.msra.mxu0 %v4723
    %6001 = vmatprep.subr.bf16.mxu0 %v4736
    %6002 = vmatpush1.bf16.msra.mxu0 %v4735
    %6003 = vmatprep.subr.bf16.mxu0 %v4748
    %6004 = vmatpush1.bf16.msra.mxu0 %v4747
    %6005 = vmatprep.mubr.bf16.mxu0 %v2824
    %6006 = vmatmul.mubr.bf16.gmra.mrb[0].mxu0 %v2823
    %v6007 = vpop.f32.mrb[0].mxu0
    %v6008 = vadd.f32 0.0, %v6007
    %v6009 = vpop.f32.mrb[0].mxu0
    %v6010 = vadd.f32 0.0, %v6009
    %v6011 = vpop.f32.mrb[0].mxu0
    %v6012 = vadd.f32 0.0, %v6011
    %v6013 = vpop.f32.mrb[0].mxu0
    %v6014 = vadd.f32 0.0, %v6013
    %6015 = vdwg.mxu0
    %6016 = vmatprep.subr.bf16.mxu0 %v4760
    %6017 = vmatpush1.bf16.msra.mxu0 %v4759
    %6018 = vmatprep.subr.bf16.mxu0 %v4772
    %6019 = vmatpush1.bf16.msra.mxu0 %v4771
    %6020 = vmatprep.subr.bf16.mxu0 %v4784
    %6021 = vmatpush1.bf16.msra.mxu0 %v4783
    %6022 = vmatprep.subr.bf16.mxu0 %v4796
    %6023 = vmatpush1.bf16.msra.mxu0 %v4795
    %6024 = vmatprep.subr.bf16.mxu0 %v4808
    %6025 = vmatpush1.bf16.msra.mxu0 %v4807
    %6026 = vmatprep.subr.bf16.mxu0 %v4820
    %6027 = vmatpush1.bf16.msra.mxu0 %v4819
    %6028 = vmatprep.subr.bf16.mxu0 %v4832
    %6029 = vmatpush1.bf16.msra.mxu0 %v4831
    %6030 = vmatprep.subr.bf16.mxu0 %v4844
    %6031 = vmatpush1.bf16.msra.mxu0 %v4843
    %6032 = vmatprep.subr.bf16.mxu0 %v4856
    %6033 = vmatpush1.bf16.msra.mxu0 %v4855
    %6034 = vmatprep.subr.bf16.mxu0 %v4868
    %6035 = vmatpush1.bf16.msra.mxu0 %v4867
    %6036 = vmatprep.subr.bf16.mxu0 %v4880
    %6037 = vmatpush1.bf16.msra.mxu0 %v4879
    %6038 = vmatprep.subr.bf16.mxu0 %v4892
    %6039 = vmatpush1.bf16.msra.mxu0 %v4891
    %6040 = vmatprep.subr.bf16.mxu0 %v4904
    %6041 = vmatpush1.bf16.msra.mxu0 %v4903
    %6042 = vmatprep.subr.bf16.mxu0 %v4916
    %6043 = vmatpush1.bf16.msra.mxu0 %v4915
    %6044 = vmatprep.subr.bf16.mxu0 %v4928
    %6045 = vmatpush1.bf16.msra.mxu0 %v4927
    %6046 = vmatprep.subr.bf16.mxu0 %v4940
    %6047 = vmatpush1.bf16.msra.mxu0 %v4939
    %6048 = vmatprep.mubr.bf16.mxu0 %v2826
    %6049 = vmatmul.mubr.bf16.gmra.mrb[0].mxu0 %v2825
    %v6050 = vpop.f32.mrb[0].mxu0
    %v6051 = vadd.f32 %v6008, %v6050
    %v6052 = vpop.f32.mrb[0].mxu0
    %v6053 = vadd.f32 %v6010, %v6052
    %v6054 = vpop.f32.mrb[0].mxu0
    %v6055 = vadd.f32 %v6012, %v6054
    %v6056 = vpop.f32.mrb[0].mxu0
    %v6057 = vadd.f32 %v6014, %v6056
    %6058 = vdwg.mxu0
    %6059 = vmatprep.subr.bf16.mxu0 %v4952
    %6060 = vmatpush1.bf16.msra.mxu0 %v4951
    %6061 = vmatprep.subr.bf16.mxu0 %v4964
    %6062 = vmatpush1.bf16.msra.mxu0 %v4963
    %6063 = vmatprep.subr.bf16.mxu0 %v4976
    %6064 = vmatpush1.bf16.msra.mxu0 %v4975
    %6065 = vmatprep.subr.bf16.mxu0 %v4988
    %6066 = vmatpush1.bf16.msra.mxu0 %v4987
    %6067 = vmatprep.subr.bf16.mxu0 %v5000
    %6068 = vmatpush1.bf16.msra.mxu0 %v4999
    %6069 = vmatprep.subr.bf16.mxu0 %v5012
    %6070 = vmatpush1.bf16.msra.mxu0 %v5011
    %6071 = vmatprep.subr.bf16.mxu0 %v5024
    %6072 = vmatpush1.bf16.msra.mxu0 %v5023
    %6073 = vmatprep.subr.bf16.mxu0 %v5036
    %6074 = vmatpush1.bf16.msra.mxu0 %v5035
    %6075 = vmatprep.subr.bf16.mxu0 %v5048
    %6076 = vmatpush1.bf16.msra.mxu0 %v5047
    %6077 = vmatprep.subr.bf16.mxu0 %v5060
    %6078 = vmatpush1.bf16.msra.mxu0 %v5059
    %6079 = vmatprep.subr.bf16.mxu0 %v5072
    %6080 = vmatpush1.bf16.msra.mxu0 %v5071
    %6081 = vmatprep.subr.bf16.mxu0 %v5084
    %6082 = vmatpush1.bf16.msra.mxu0 %v5083
    %6083 = vmatprep.subr.bf16.mxu0 %v5096
    %6084 = vmatpush1.bf16.msra.mxu0 %v5095
    %6085 = vmatprep.subr.bf16.mxu0 %v5108
    %6086 = vmatpush1.bf16.msra.mxu0 %v5107
    %6087 = vmatprep.subr.bf16.mxu0 %v5120
    %6088 = vmatpush1.bf16.msra.mxu0 %v5119
    %6089 = vmatprep.subr.bf16.mxu0 %v5132
    %6090 = vmatpush1.bf16.msra.mxu0 %v5131
    %6091 = vmatprep.mubr.bf16.mxu0 %v2828
    %6092 = vmatmul.mubr.bf16.gmra.mrb[0].mxu0 %v2827
    %v6093 = vpop.f32.mrb[0].mxu0
    %v6094 = vadd.f32 %v6051, %v6093
    %v6095 = vpop.f32.mrb[0].mxu0
    %v6096 = vadd.f32 %v6053, %v6095
    %v6097 = vpop.f32.mrb[0].mxu0
    %v6098 = vadd.f32 %v6055, %v6097
    %v6099 = vpop.f32.mrb[0].mxu0
    %v6100 = vadd.f32 %v6057, %v6099
    %6101 = vdwg.mxu0
    %6102 = vmatprep.subr.bf16.mxu0 %v4570
    %6103 = vmatpush1.bf16.msra.mxu0 %v4569
    %6104 = vmatprep.subr.bf16.mxu0 %v4582
    %6105 = vmatpush1.bf16.msra.mxu0 %v4581
    %6106 = vmatprep.subr.bf16.mxu0 %v4594
    %6107 = vmatpush1.bf16.msra.mxu0 %v4593
    %6108 = vmatprep.subr.bf16.mxu0 %v4606
    %6109 = vmatpush1.bf16.msra.mxu0 %v4605
    %6110 = vmatprep.subr.bf16.mxu0 %v4618
    %6111 = vmatpush1.bf16.msra.mxu0 %v4617
    %6112 = vmatprep.subr.bf16.mxu0 %v4630
    %6113 = vmatpush1.bf16.msra.mxu0 %v4629
    %6114 = vmatprep.subr.bf16.mxu0 %v4642
    %6115 = vmatpush1.bf16.msra.mxu0 %v4641
    %6116 = vmatprep.subr.bf16.mxu0 %v4654
    %6117 = vmatpush1.bf16.msra.mxu0 %v4653
    %6118 = vmatprep.subr.bf16.mxu0 %v4666
    %6119 = vmatpush1.bf16.msra.mxu0 %v4665
    %6120 = vmatprep.subr.bf16.mxu0 %v4678
    %6121 = vmatpush1.bf16.msra.mxu0 %v4677
    %6122 = vmatprep.subr.bf16.mxu0 %v4690
    %6123 = vmatpush1.bf16.msra.mxu0 %v4689
    %6124 = vmatprep.subr.bf16.mxu0 %v4702
    %6125 = vmatpush1.bf16.msra.mxu0 %v4701
    %6126 = vmatprep.subr.bf16.mxu0 %v4714
    %6127 = vmatpush1.bf16.msra.mxu0 %v4713
    %6128 = vmatprep.subr.bf16.mxu0 %v4726
    %6129 = vmatpush1.bf16.msra.mxu0 %v4725
    %6130 = vmatprep.subr.bf16.mxu0 %v4738
    %6131 = vmatpush1.bf16.msra.mxu0 %v4737
    %6132 = vmatprep.subr.bf16.mxu0 %v4750
    %6133 = vmatpush1.bf16.msra.mxu0 %v4749
    %6134 = vmatprep.mubr.bf16.mxu0 %v2824
    %6135 = vmatmul.mubr.bf16.gmra.mrb[0].mxu0 %v2823
    %v6136 = vpop.f32.mrb[0].mxu0
    %v6137 = vadd.f32 0.0, %v6136
    %v6138 = vpop.f32.mrb[0].mxu0
    %v6139 = vadd.f32 0.0, %v6138
    %v6140 = vpop.f32.mrb[0].mxu0
    %v6141 = vadd.f32 0.0, %v6140
    %v6142 = vpop.f32.mrb[0].mxu0
    %v6143 = vadd.f32 0.0, %v6142
    %6144 = vdwg.mxu0
    %6145 = vmatprep.subr.bf16.mxu0 %v4762
    %6146 = vmatpush1.bf16.msra.mxu0 %v4761
    %6147 = vmatprep.subr.bf16.mxu0 %v4774
    %6148 = vmatpush1.bf16.msra.mxu0 %v4773
    %6149 = vmatprep.subr.bf16.mxu0 %v4786
    %6150 = vmatpush1.bf16.msra.mxu0 %v4785
    %6151 = vmatprep.subr.bf16.mxu0 %v4798
    %6152 = vmatpush1.bf16.msra.mxu0 %v4797
    %6153 = vmatprep.subr.bf16.mxu0 %v4810
    %6154 = vmatpush1.bf16.msra.mxu0 %v4809
    %6155 = vmatprep.subr.bf16.mxu0 %v4822
    %6156 = vmatpush1.bf16.msra.mxu0 %v4821
    %6157 = vmatprep.subr.bf16.mxu0 %v4834
    %6158 = vmatpush1.bf16.msra.mxu0 %v4833
    %6159 = vmatprep.subr.bf16.mxu0 %v4846
    %6160 = vmatpush1.bf16.msra.mxu0 %v4845
    %6161 = vmatprep.subr.bf16.mxu0 %v4858
    %6162 = vmatpush1.bf16.msra.mxu0 %v4857
    %6163 = vmatprep.subr.bf16.mxu0 %v4870
    %6164 = vmatpush1.bf16.msra.mxu0 %v4869
    %6165 = vmatprep.subr.bf16.mxu0 %v4882
    %6166 = vmatpush1.bf16.msra.mxu0 %v4881
    %6167 = vmatprep.subr.bf16.mxu0 %v4894
    %6168 = vmatpush1.bf16.msra.mxu0 %v4893
    %6169 = vmatprep.subr.bf16.mxu0 %v4906
    %6170 = vmatpush1.bf16.msra.mxu0 %v4905
    %6171 = vmatprep.subr.bf16.mxu0 %v4918
    %6172 = vmatpush1.bf16.msra.mxu0 %v4917
    %6173 = vmatprep.subr.bf16.mxu0 %v4930
    %6174 = vmatpush1.bf16.msra.mxu0 %v4929
    %6175 = vmatprep.subr.bf16.mxu0 %v4942
    %6176 = vmatpush1.bf16.msra.mxu0 %v4941
    %6177 = vmatprep.mubr.bf16.mxu0 %v2826
    %6178 = vmatmul.mubr.bf16.gmra.mrb[0].mxu0 %v2825
    %v6179 = vpop.f32.mrb[0].mxu0
    %v6180 = vadd.f32 %v6137, %v6179
    %v6181 = vpop.f32.mrb[0].mxu0
    %v6182 = vadd.f32 %v6139, %v6181
    %v6183 = vpop.f32.mrb[0].mxu0
    %v6184 = vadd.f32 %v6141, %v6183
    %v6185 = vpop.f32.mrb[0].mxu0
    %v6186 = vadd.f32 %v6143, %v6185
    %6187 = vdwg.mxu0
    %6188 = vmatprep.subr.bf16.mxu0 %v4954
    %6189 = vmatpush1.bf16.msra.mxu0 %v4953
    %6190 = vmatprep.subr.bf16.mxu0 %v4966
    %6191 = vmatpush1.bf16.msra.mxu0 %v4965
    %6192 = vmatprep.subr.bf16.mxu0 %v4978
    %6193 = vmatpush1.bf16.msra.mxu0 %v4977
    %6194 = vmatprep.subr.bf16.mxu0 %v4990
    %6195 = vmatpush1.bf16.msra.mxu0 %v4989
    %6196 = vmatprep.subr.bf16.mxu0 %v5002
    %6197 = vmatpush1.bf16.msra.mxu0 %v5001
    %6198 = vmatprep.subr.bf16.mxu0 %v5014
    %6199 = vmatpush1.bf16.msra.mxu0 %v5013
    %6200 = vmatprep.subr.bf16.mxu0 %v5026
    %6201 = vmatpush1.bf16.msra.mxu0 %v5025
    %6202 = vmatprep.subr.bf16.mxu0 %v5038
    %6203 = vmatpush1.bf16.msra.mxu0 %v5037
    %6204 = vmatprep.subr.bf16.mxu0 %v5050
    %6205 = vmatpush1.bf16.msra.mxu0 %v5049
    %6206 = vmatprep.subr.bf16.mxu0 %v5062
    %6207 = vmatpush1.bf16.msra.mxu0 %v5061
    %6208 = vmatprep.subr.bf16.mxu0 %v5074
    %6209 = vmatpush1.bf16.msra.mxu0 %v5073
    %6210 = vmatprep.subr.bf16.mxu0 %v5086
    %6211 = vmatpush1.bf16.msra.mxu0 %v5085
    %6212 = vmatprep.subr.bf16.mxu0 %v5098
    %6213 = vmatpush1.bf16.msra.mxu0 %v5097
    %6214 = vmatprep.subr.bf16.mxu0 %v5110
    %6215 = vmatpush1.bf16.msra.mxu0 %v5109
    %6216 = vmatprep.subr.bf16.mxu0 %v5122
    %6217 = vmatpush1.bf16.msra.mxu0 %v5121
    %6218 = vmatprep.subr.bf16.mxu0 %v5134
    %6219 = vmatpush1.bf16.msra.mxu0 %v5133
    %6220 = vmatprep.mubr.bf16.mxu0 %v2828
    %6221 = vmatmul.mubr.bf16.gmra.mrb[0].mxu0 %v2827
    %v6222 = vpop.f32.mrb[0].mxu0
    %v6223 = vadd.f32 %v6180, %v6222
    %v6224 = vpop.f32.mrb[0].mxu0
    %v6225 = vadd.f32 %v6182, %v6224
    %v6226 = vpop.f32.mrb[0].mxu0
    %v6227 = vadd.f32 %v6184, %v6226
    %v6228 = vpop.f32.mrb[0].mxu0
    %v6229 = vadd.f32 %v6186, %v6228
    %6230 = vdwg.mxu0
    %6231 = vmatprep.subr.bf16.mxu0 %v4572
    %6232 = vmatpush1.bf16.msra.mxu0 %v4571
    %6233 = vmatprep.subr.bf16.mxu0 %v4584
    %6234 = vmatpush1.bf16.msra.mxu0 %v4583
    %6235 = vmatprep.subr.bf16.mxu0 %v4596
    %6236 = vmatpush1.bf16.msra.mxu0 %v4595
    %6237 = vmatprep.subr.bf16.mxu0 %v4608
    %6238 = vmatpush1.bf16.msra.mxu0 %v4607
    %6239 = vmatprep.subr.bf16.mxu0 %v4620
    %6240 = vmatpush1.bf16.msra.mxu0 %v4619
    %6241 = vmatprep.subr.bf16.mxu0 %v4632
    %6242 = vmatpush1.bf16.msra.mxu0 %v4631
    %6243 = vmatprep.subr.bf16.mxu0 %v4644
    %6244 = vmatpush1.bf16.msra.mxu0 %v4643
    %6245 = vmatprep.subr.bf16.mxu0 %v4656
    %6246 = vmatpush1.bf16.msra.mxu0 %v4655
    %6247 = vmatprep.subr.bf16.mxu0 %v4668
    %6248 = vmatpush1.bf16.msra.mxu0 %v4667
    %6249 = vmatprep.subr.bf16.mxu0 %v4680
    %6250 = vmatpush1.bf16.msra.mxu0 %v4679
    %6251 = vmatprep.subr.bf16.mxu0 %v4692
    %6252 = vmatpush1.bf16.msra.mxu0 %v4691
    %6253 = vmatprep.subr.bf16.mxu0 %v4704
    %6254 = vmatpush1.bf16.msra.mxu0 %v4703
    %6255 = vmatprep.subr.bf16.mxu0 %v4716
    %6256 = vmatpush1.bf16.msra.mxu0 %v4715
    %6257 = vmatprep.subr.bf16.mxu0 %v4728
    %6258 = vmatpush1.bf16.msra.mxu0 %v4727
    %6259 = vmatprep.subr.bf16.mxu0 %v4740
    %6260 = vmatpush1.bf16.msra.mxu0 %v4739
    %6261 = vmatprep.subr.bf16.mxu0 %v4752
    %6262 = vmatpush1.bf16.msra.mxu0 %v4751
    %6263 = vmatprep.mubr.bf16.mxu0 %v2824
    %6264 = vmatmul.mubr.bf16.gmra.mrb[0].mxu0 %v2823
    %v6265 = vpop.f32.mrb[0].mxu0
    %v6266 = vadd.f32 0.0, %v6265
    %v6267 = vpop.f32.mrb[0].mxu0
    %v6268 = vadd.f32 0.0, %v6267
    %v6269 = vpop.f32.mrb[0].mxu0
    %v6270 = vadd.f32 0.0, %v6269
    %v6271 = vpop.f32.mrb[0].mxu0
    %v6272 = vadd.f32 0.0, %v6271
    %6273 = vdwg.mxu0
    %6274 = vmatprep.subr.bf16.mxu0 %v4764
    %6275 = vmatpush1.bf16.msra.mxu0 %v4763
    %6276 = vmatprep.subr.bf16.mxu0 %v4776
    %6277 = vmatpush1.bf16.msra.mxu0 %v4775
    %6278 = vmatprep.subr.bf16.mxu0 %v4788
    %6279 = vmatpush1.bf16.msra.mxu0 %v4787
    %6280 = vmatprep.subr.bf16.mxu0 %v4800
    %6281 = vmatpush1.bf16.msra.mxu0 %v4799
    %6282 = vmatprep.subr.bf16.mxu0 %v4812
    %6283 = vmatpush1.bf16.msra.mxu0 %v4811
    %6284 = vmatprep.subr.bf16.mxu0 %v4824
    %6285 = vmatpush1.bf16.msra.mxu0 %v4823
    %6286 = vmatprep.subr.bf16.mxu0 %v4836
    %6287 = vmatpush1.bf16.msra.mxu0 %v4835
    %6288 = vmatprep.subr.bf16.mxu0 %v4848
    %6289 = vmatpush1.bf16.msra.mxu0 %v4847
    %6290 = vmatprep.subr.bf16.mxu0 %v4860
    %6291 = vmatpush1.bf16.msra.mxu0 %v4859
    %6292 = vmatprep.subr.bf16.mxu0 %v4872
    %6293 = vmatpush1.bf16.msra.mxu0 %v4871
    %6294 = vmatprep.subr.bf16.mxu0 %v4884
    %6295 = vmatpush1.bf16.msra.mxu0 %v4883
    %6296 = vmatprep.subr.bf16.mxu0 %v4896
    %6297 = vmatpush1.bf16.msra.mxu0 %v4895
    %6298 = vmatprep.subr.bf16.mxu0 %v4908
    %6299 = vmatpush1.bf16.msra.mxu0 %v4907
    %6300 = vmatprep.subr.bf16.mxu0 %v4920
    %6301 = vmatpush1.bf16.msra.mxu0 %v4919
    %6302 = vmatprep.subr.bf16.mxu0 %v4932
    %6303 = vmatpush1.bf16.msra.mxu0 %v4931
    %6304 = vmatprep.subr.bf16.mxu0 %v4944
    %6305 = vmatpush1.bf16.msra.mxu0 %v4943
    %6306 = vmatprep.mubr.bf16.mxu0 %v2826
    %6307 = vmatmul.mubr.bf16.gmra.mrb[0].mxu0 %v2825
    %v6308 = vpop.f32.mrb[0].mxu0
    %v6309 = vadd.f32 %v6266, %v6308
    %v6310 = vpop.f32.mrb[0].mxu0
    %v6311 = vadd.f32 %v6268, %v6310
    %v6312 = vpop.f32.mrb[0].mxu0
    %v6313 = vadd.f32 %v6270, %v6312
    %v6314 = vpop.f32.mrb[0].mxu0
    %v6315 = vadd.f32 %v6272, %v6314
    %6316 = vdwg.mxu0
    %6317 = vmatprep.subr.bf16.mxu0 %v4956
    %6318 = vmatpush1.bf16.msra.mxu0 %v4955
    %6319 = vmatprep.subr.bf16.mxu0 %v4968
    %6320 = vmatpush1.bf16.msra.mxu0 %v4967
    %6321 = vmatprep.subr.bf16.mxu0 %v4980
    %6322 = vmatpush1.bf16.msra.mxu0 %v4979
    %6323 = vmatprep.subr.bf16.mxu0 %v4992
    %6324 = vmatpush1.bf16.msra.mxu0 %v4991
    %6325 = vmatprep.subr.bf16.mxu0 %v5004
    %6326 = vmatpush1.bf16.msra.mxu0 %v5003
    %6327 = vmatprep.subr.bf16.mxu0 %v5016
    %6328 = vmatpush1.bf16.msra.mxu0 %v5015
    %6329 = vmatprep.subr.bf16.mxu0 %v5028
    %6330 = vmatpush1.bf16.msra.mxu0 %v5027
    %6331 = vmatprep.subr.bf16.mxu0 %v5040
    %6332 = vmatpush1.bf16.msra.mxu0 %v5039
    %6333 = vmatprep.subr.bf16.mxu0 %v5052
    %6334 = vmatpush1.bf16.msra.mxu0 %v5051
    %6335 = vmatprep.subr.bf16.mxu0 %v5064
    %6336 = vmatpush1.bf16.msra.mxu0 %v5063
    %6337 = vmatprep.subr.bf16.mxu0 %v5076
    %6338 = vmatpush1.bf16.msra.mxu0 %v5075
    %6339 = vmatprep.subr.bf16.mxu0 %v5088
    %6340 = vmatpush1.bf16.msra.mxu0 %v5087
    %6341 = vmatprep.subr.bf16.mxu0 %v5100
    %6342 = vmatpush1.bf16.msra.mxu0 %v5099
    %6343 = vmatprep.subr.bf16.mxu0 %v5112
    %6344 = vmatpush1.bf16.msra.mxu0 %v5111
    %6345 = vmatprep.subr.bf16.mxu0 %v5124
    %6346 = vmatpush1.bf16.msra.mxu0 %v5123
    %6347 = vmatprep.subr.bf16.mxu0 %v5136
    %6348 = vmatpush1.bf16.msra.mxu0 %v5135
    %6349 = vmatprep.mubr.bf16.mxu0 %v2828
    %6350 = vmatmul.mubr.bf16.gmra.mrb[0].mxu0 %v2827
    %v6351 = vpop.f32.mrb[0].mxu0
    %v6352 = vadd.f32 %v6309, %v6351
    %v6353 = vpop.f32.mrb[0].mxu0
    %v6354 = vadd.f32 %v6311, %v6353
    %v6355 = vpop.f32.mrb[0].mxu0
    %v6356 = vadd.f32 %v6313, %v6355
    %v6357 = vpop.f32.mrb[0].mxu0
    %v6358 = vadd.f32 %v6315, %v6357
    %6359 = vdwg.mxu0
    %6360 = vmatprep.subr.bf16.mxu0 %v4574
    %6361 = vmatpush1.bf16.msra.mxu0 %v4573
    %6362 = vmatprep.subr.bf16.mxu0 %v4586
    %6363 = vmatpush1.bf16.msra.mxu0 %v4585
    %6364 = vmatprep.subr.bf16.mxu0 %v4598
    %6365 = vmatpush1.bf16.msra.mxu0 %v4597
    %6366 = vmatprep.subr.bf16.mxu0 %v4610
    %6367 = vmatpush1.bf16.msra.mxu0 %v4609
    %6368 = vmatprep.subr.bf16.mxu0 %v4622
    %6369 = vmatpush1.bf16.msra.mxu0 %v4621
    %6370 = vmatprep.subr.bf16.mxu0 %v4634
    %6371 = vmatpush1.bf16.msra.mxu0 %v4633
    %6372 = vmatprep.subr.bf16.mxu0 %v4646
    %6373 = vmatpush1.bf16.msra.mxu0 %v4645
    %6374 = vmatprep.subr.bf16.mxu0 %v4658
    %6375 = vmatpush1.bf16.msra.mxu0 %v4657
    %6376 = vmatprep.subr.bf16.mxu0 %v4670
    %6377 = vmatpush1.bf16.msra.mxu0 %v4669
    %6378 = vmatprep.subr.bf16.mxu0 %v4682
    %6379 = vmatpush1.bf16.msra.mxu0 %v4681
    %6380 = vmatprep.subr.bf16.mxu0 %v4694
    %6381 = vmatpush1.bf16.msra.mxu0 %v4693
    %6382 = vmatprep.subr.bf16.mxu0 %v4706
    %6383 = vmatpush1.bf16.msra.mxu0 %v4705
    %6384 = vmatprep.subr.bf16.mxu0 %v4718
    %6385 = vmatpush1.bf16.msra.mxu0 %v4717
    %6386 = vmatprep.subr.bf16.mxu0 %v4730
    %6387 = vmatpush1.bf16.msra.mxu0 %v4729
    %6388 = vmatprep.subr.bf16.mxu0 %v4742
    %6389 = vmatpush1.bf16.msra.mxu0 %v4741
    %6390 = vmatprep.subr.bf16.mxu0 %v4754
    %6391 = vmatpush1.bf16.msra.mxu0 %v4753
    %6392 = vmatprep.mubr.bf16.mxu0 %v2824
    %6393 = vmatmul.mubr.bf16.gmra.mrb[0].mxu0 %v2823
    %v6394 = vpop.f32.mrb[0].mxu0
    %v6395 = vadd.f32 0.0, %v6394
    %v6396 = vpop.f32.mrb[0].mxu0
    %v6397 = vadd.f32 0.0, %v6396
    %v6398 = vpop.f32.mrb[0].mxu0
    %v6399 = vadd.f32 0.0, %v6398
    %v6400 = vpop.f32.mrb[0].mxu0
    %v6401 = vadd.f32 0.0, %v6400
    %6402 = vdwg.mxu0
    %6403 = vmatprep.subr.bf16.mxu0 %v4766
    %6404 = vmatpush1.bf16.msra.mxu0 %v4765
    %6405 = vmatprep.subr.bf16.mxu0 %v4778
    %6406 = vmatpush1.bf16.msra.mxu0 %v4777
    %6407 = vmatprep.subr.bf16.mxu0 %v4790
    %6408 = vmatpush1.bf16.msra.mxu0 %v4789
    %6409 = vmatprep.subr.bf16.mxu0 %v4802
    %6410 = vmatpush1.bf16.msra.mxu0 %v4801
    %6411 = vmatprep.subr.bf16.mxu0 %v4814
    %6412 = vmatpush1.bf16.msra.mxu0 %v4813
    %6413 = vmatprep.subr.bf16.mxu0 %v4826
    %6414 = vmatpush1.bf16.msra.mxu0 %v4825
    %6415 = vmatprep.subr.bf16.mxu0 %v4838
    %6416 = vmatpush1.bf16.msra.mxu0 %v4837
    %6417 = vmatprep.subr.bf16.mxu0 %v4850
    %6418 = vmatpush1.bf16.msra.mxu0 %v4849
    %6419 = vmatprep.subr.bf16.mxu0 %v4862
    %6420 = vmatpush1.bf16.msra.mxu0 %v4861
    %6421 = vmatprep.subr.bf16.mxu0 %v4874
    %6422 = vmatpush1.bf16.msra.mxu0 %v4873
    %6423 = vmatprep.subr.bf16.mxu0 %v4886
    %6424 = vmatpush1.bf16.msra.mxu0 %v4885
    %6425 = vmatprep.subr.bf16.mxu0 %v4898
    %6426 = vmatpush1.bf16.msra.mxu0 %v4897
    %6427 = vmatprep.subr.bf16.mxu0 %v4910
    %6428 = vmatpush1.bf16.msra.mxu0 %v4909
    %6429 = vmatprep.subr.bf16.mxu0 %v4922
    %6430 = vmatpush1.bf16.msra.mxu0 %v4921
    %6431 = vmatprep.subr.bf16.mxu0 %v4934
    %6432 = vmatpush1.bf16.msra.mxu0 %v4933
    %6433 = vmatprep.subr.bf16.mxu0 %v4946
    %6434 = vmatpush1.bf16.msra.mxu0 %v4945
    %6435 = vmatprep.mubr.bf16.mxu0 %v2826
    %6436 = vmatmul.mubr.bf16.gmra.mrb[0].mxu0 %v2825
    %v6437 = vpop.f32.mrb[0].mxu0
    %v6438 = vadd.f32 %v6395, %v6437
    %v6439 = vpop.f32.mrb[0].mxu0
    %v6440 = vadd.f32 %v6397, %v6439
    %v6441 = vpop.f32.mrb[0].mxu0
    %v6442 = vadd.f32 %v6399, %v6441
    %v6443 = vpop.f32.mrb[0].mxu0
    %v6444 = vadd.f32 %v6401, %v6443
    %6445 = vdwg.mxu0
    %6446 = vmatprep.subr.bf16.mxu0 %v4958
    %6447 = vmatpush1.bf16.msra.mxu0 %v4957
    %6448 = vmatprep.subr.bf16.mxu0 %v4970
    %6449 = vmatpush1.bf16.msra.mxu0 %v4969
    %6450 = vmatprep.subr.bf16.mxu0 %v4982
    %6451 = vmatpush1.bf16.msra.mxu0 %v4981
    %6452 = vmatprep.subr.bf16.mxu0 %v4994
    %6453 = vmatpush1.bf16.msra.mxu0 %v4993
    %6454 = vmatprep.subr.bf16.mxu0 %v5006
    %6455 = vmatpush1.bf16.msra.mxu0 %v5005
    %6456 = vmatprep.subr.bf16.mxu0 %v5018
    %6457 = vmatpush1.bf16.msra.mxu0 %v5017
    %6458 = vmatprep.subr.bf16.mxu0 %v5030
    %6459 = vmatpush1.bf16.msra.mxu0 %v5029
    %6460 = vmatprep.subr.bf16.mxu0 %v5042
    %6461 = vmatpush1.bf16.msra.mxu0 %v5041
    %6462 = vmatprep.subr.bf16.mxu0 %v5054
    %6463 = vmatpush1.bf16.msra.mxu0 %v5053
    %6464 = vmatprep.subr.bf16.mxu0 %v5066
    %6465 = vmatpush1.bf16.msra.mxu0 %v5065
    %6466 = vmatprep.subr.bf16.mxu0 %v5078
    %6467 = vmatpush1.bf16.msra.mxu0 %v5077
    %6468 = vmatprep.subr.bf16.mxu0 %v5090
    %6469 = vmatpush1.bf16.msra.mxu0 %v5089
    %6470 = vmatprep.subr.bf16.mxu0 %v5102
    %6471 = vmatpush1.bf16.msra.mxu0 %v5101
    %6472 = vmatprep.subr.bf16.mxu0 %v5114
    %6473 = vmatpush1.bf16.msra.mxu0 %v5113
    %6474 = vmatprep.subr.bf16.mxu0 %v5126
    %6475 = vmatpush1.bf16.msra.mxu0 %v5125
    %6476 = vmatprep.subr.bf16.mxu0 %v5138
    %6477 = vmatpush1.bf16.msra.mxu0 %v5137
    %6478 = vmatprep.mubr.bf16.mxu0 %v2828
    %6479 = vmatmul.mubr.bf16.gmra.mrb[0].mxu0 %v2827
    %v6480 = vpop.f32.mrb[0].mxu0
    %v6481 = vadd.f32 %v6438, %v6480
    %v6482 = vpop.f32.mrb[0].mxu0
    %v6483 = vadd.f32 %v6440, %v6482
    %v6484 = vpop.f32.mrb[0].mxu0
    %v6485 = vadd.f32 %v6442, %v6484
    %v6486 = vpop.f32.mrb[0].mxu0
    %v6487 = vadd.f32 %v6444, %v6486
    %6488 = vdwg.mxu0
    %6489 = vst [vmem:[#allocation9] sm:$0xff] %v5836
    %6490 = vst [vmem:[#allocation9 + $0x8] sm:$0xff] %v5838
    %6491 = vst [vmem:[#allocation9 + $0x10] sm:$0xff] %v5965
    %6492 = vst [vmem:[#allocation9 + $0x18] sm:$0xff] %v5967
    %6493 = vst [vmem:[#allocation9 + $0x20] sm:$0xff] %v6094
    %6494 = vst [vmem:[#allocation9 + $0x28] sm:$0xff] %v6096
    %6495 = vst [vmem:[#allocation9 + $0x30] sm:$0xff] %v5840
    %6496 = vst [vmem:[#allocation9 + $0x38] sm:$0xff] %v5842
    %6497 = vst [vmem:[#allocation9 + $0x40] sm:$0xff] %v5969
    %6498 = vst [vmem:[#allocation9 + $0x48] sm:$0xff] %v5971
    %6499 = vst [vmem:[#allocation9 + $0x50] sm:$0xff] %v6098
    %6500 = vst [vmem:[#allocation9 + $0x58] sm:$0xff] %v6100
    %6501 = vst [vmem:[#allocation11] sm:$0xff] %v6223
    %6502 = vst [vmem:[#allocation11 + $0x8] sm:$0xff] %v6225
    %6503 = vst [vmem:[#allocation11 + $0x10] sm:$0xff] %v6352
    %6504 = vst [vmem:[#allocation11 + $0x18] sm:$0xff] %v6354
    %6505 = vst [vmem:[#allocation11 + $0x20] sm:$0xff] %v6481
    %6506 = vst [vmem:[#allocation11 + $0x28] sm:$0xff] %v6483
    %6507 = vst [vmem:[#allocation11 + $0x30] sm:$0xff] %v6227
    %6508 = vst [vmem:[#allocation11 + $0x38] sm:$0xff] %v6229
    %6509 = vst [vmem:[#allocation11 + $0x40] sm:$0xff] %v6356
    %6510 = vst [vmem:[#allocation11 + $0x48] sm:$0xff] %v6358
    %6511 = vst [vmem:[#allocation11 + $0x50] sm:$0xff] %v6485
    %6512 = vst [vmem:[#allocation11 + $0x58] sm:$0xff] %v6487
    // Predicated region
    $region26: #{tpu_custom_call.1} parent=1 // pred_check
      _
    $region27: #{tpu_custom_call.1} parent=1 // pred_check_branch
      %6514 = sbr.rel (0) target = $region29
    $region28: #{tpu_custom_call.1} parent=1 // pred_region
      %s6516 = ssub.s32 1536, 1536
      %6517 = vsyncadd [#allocation4], %s6516
      %s6518 = sshll.u32 [#allocation8], 4
      %s6519 = int_to_ptr.vmem [resolvable:$true] %s6518
      %6524 = dma.vmem_to_hbm [thread:$0]  %s6519, 1536, %s3, [#allocation4], 768, 768, 48
    $region29: #{tpu_custom_call.1} parent=1 // pred_fallthru
      _
    // Predicated region
    $region30: #{tpu_custom_call.1} parent=1 // pred_check
      _
    $region31: #{tpu_custom_call.1} parent=1 // pred_check_branch
      %6526 = sbr.rel (0) target = $region33
    $region32: #{tpu_custom_call.1} parent=1 // pred_region
      %s6528 = ssub.s32 1536, 1536
      %6529 = vsyncadd [#allocation10], %s6528
      %s6530 = sshll.u32 [#allocation9], 4
      %s6531 = int_to_ptr.vmem [resolvable:$true] %s6530
      %6536 = dma.vmem_to_hbm [thread:$0]  %s6531, 1536, %s4, [#allocation10], 768, 768, 48
    $region33: #{tpu_custom_call.1} parent=1 // pred_fallthru
      _
    // Predicated region
    $region34: #{tpu_custom_call.1} parent=1 // pred_check
      _
    $region35: #{tpu_custom_call.1} parent=1 // pred_check_branch
      %6538 = sbr.rel (0) target = $region37
    $region36: #{tpu_custom_call.1} parent=1 // pred_region
      %s6540 = ssub.s32 1536, 1536
      %6541 = vsyncadd [#allocation10], %s6540
      %s6542 = sshll.u32 [#allocation11], 4
      %s6543 = int_to_ptr.vmem [resolvable:$true] %s6542
      %6548 = dma.vmem_to_hbm [thread:$0]  %s6543, 1536, %s5, [#allocation10], 768, 768, 48
    $region37: #{tpu_custom_call.1} parent=1 // pred_fallthru
      _
    // Predicated region
    $region38: #{tpu_custom_call.1} parent=1 // pred_check
      _
    $region39: #{tpu_custom_call.1} parent=1 // pred_check_branch
      %6550 = sbr.rel (0) target = $region41
    $region40: #{tpu_custom_call.1} parent=1 // pred_region
      %6551 = dma.done [#allocation4], 1536
    $region41: #{tpu_custom_call.1} parent=1 // pred_fallthru
      _
    // Predicated region
    $region42: #{tpu_custom_call.1} parent=1 // pred_check
      _
    $region43: #{tpu_custom_call.1} parent=1 // pred_check_branch
      %6553 = sbr.rel (0) target = $region45
    $region44: #{tpu_custom_call.1} parent=1 // pred_region
      %6554 = dma.done [#allocation10], 1536
    $region45: #{tpu_custom_call.1} parent=1 // pred_fallthru
      _
    // Predicated region
    $region46: #{tpu_custom_call.1} parent=1 // pred_check
      _
    $region47: #{tpu_custom_call.1} parent=1 // pred_check_branch
      %6556 = sbr.rel (0) target = $region49
    $region48: #{tpu_custom_call.1} parent=1 // pred_region
      %6557 = dma.done [#allocation10], 1536
    $region49: #{tpu_custom_call.1} parent=1 // pred_fallthru
      _
    %6558 = vsyncpa [#allocation3], 1
    %6559 = vsyncpa [#allocation6], 1
    %6560 = vsyncpa [#allocation4], 1
    %6561 = vsyncpa [#allocation10], 1

</llo_original>
